<compile_context>
chip_gen: v6e
topology: v6e:2x2x1
jax: 0.10.0
libtpu: 0.0.40
codegen_flags: <defaults>
</compile_context>

<pallas_src>
import functools

import jax
import jax.numpy as jnp
from jax.experimental import pallas as pl
from jax.experimental.pallas import tpu as pltpu


# -----------------------------------------------------------------------------
# Parameter construction (deterministic, synthetic; matches nn.Linear init)
# -----------------------------------------------------------------------------
def init_linear(key, in_dim, out_dim):
    kw, kb = jax.random.split(key)
    bound = float(in_dim) ** -0.5
    w = jax.random.uniform(kw, (in_dim, out_dim), jnp.float32, -bound, bound)
    b = jax.random.uniform(kb, (1, out_dim), jnp.float32, -bound, bound)
    return w, b


def init_mlp(key, dims):
    keys = jax.random.split(key, len(dims) - 1)
    return [init_linear(keys[i], dims[i], dims[i + 1]) for i in range(len(dims) - 1)]


def init_encoder(key, input_dim, latent_dim, hidden_dims):
    k_mlp, k_mu, k_lv = jax.random.split(key, 3)
    return {
        "mlp": init_mlp(k_mlp, [input_dim] + hidden_dims + [latent_dim]),
        "fc_mu": init_linear(k_mu, latent_dim, latent_dim),
        "fc_logvar": init_linear(k_lv, latent_dim, latent_dim),
    }


def init_dual_vae(key, state_dim, action_dim, reward_dim, z_dim, s_dim, hidden_dims):
    input_dim_x = state_dim + action_dim
    input_dim_y = reward_dim + state_dim
    ks = jax.random.split(key, 8)
    return {
        "encoder_s": init_encoder(ks[0], input_dim_x + input_dim_y, s_dim, hidden_dims),
        "structural_eq_zx": init_mlp(ks[1], [s_dim] + hidden_dims + [z_dim]),
        "structural_eq_zy": init_mlp(ks[2], [s_dim] + hidden_dims + [z_dim]),
        "encoder_residual_x": init_encoder(ks[3], input_dim_x, z_dim, hidden_dims),
        "encoder_residual_y": init_encoder(ks[4], input_dim_y, z_dim, hidden_dims),
        "inference_encoder_zx": init_encoder(ks[5], state_dim, z_dim, hidden_dims),
        "decoder_X": init_mlp(ks[6], [z_dim + s_dim] + hidden_dims + [input_dim_x]),
        "decoder_Y": init_mlp(ks[7], [z_dim + s_dim] + hidden_dims + [input_dim_y]),
    }


# -----------------------------------------------------------------------------
# Parameter packing: every linear layer -> zero-padded (PAD, PAD) weight slot
# plus a (1, PAD) bias slot, stacked into two contiguous VMEM inputs.
# Zero padding makes padded lanes inert, so no concatenation / slicing of the
# activations is ever needed inside the kernel.
# -----------------------------------------------------------------------------
def _round_up(n, m):
    return ((n + m - 1) // m) * m


def pack_dual_vae_params(params, state_dim, action_dim, reward_dim, z_dim, s_dim,
                         hidden_dims):
    dx = state_dim + action_dim
    dy = reward_dim + state_dim
    pad = _round_up(max([dx, dy, z_dim, s_dim] + list(hidden_dims)), 8)

    ws, bs = [], []

    def _pad_w(w):
        return jnp.zeros((pad, pad), jnp.float32).at[: w.shape[0], : w.shape[1]].set(w)

    def _pad_b(b):
        return jnp.zeros((1, pad), jnp.float32).at[:, : b.shape[1]].set(b)

    def add(w, b):
        ws.append(_pad_w(w))
        bs.append(_pad_b(b))
        return len(ws) - 1

    def add_mlp(layers):
        start = len(ws)
        for w, b in layers:
            add(w, b)
        return start

    def add_mlp_split_first(layers, split_rows):
        # First-layer weight split by rows so the kernel consumes two separate
        # (un-concatenated) inputs: h = a @ W[:split] + b @ W[split:] + bias.
        # The second half gets a zero bias slot (kept only for index alignment;
        # the kernel never adds it).
        w0, b0 = layers[0]
        start = len(ws)
        add(w0[:split_rows, :], b0)
        add(w0[split_rows:, :], jnp.zeros_like(b0))
        for w, b in layers[1:]:
            add(w, b)
        return start

    def add_encoder(enc, split_rows=None):
        n_layers = len(enc["mlp"])
        if split_rows is None:
            trunk = add_mlp(enc["mlp"])
            split = False
        else:
            trunk = add_mlp_split_first(enc["mlp"], split_rows)
            split = True
        mu = add(*enc["fc_mu"])
        lv = add(*enc["fc_logvar"])
        return {"trunk": trunk, "n_layers": n_layers, "split": split, "mu": mu, "lv": lv}

    plan = {}
    # encoder_s consumes cat(x, y): split its first layer by dx rows.
    plan["enc_s"] = add_encoder(params["encoder_s"], split_rows=dx)
    plan["res_x"] = add_encoder(params["encoder_residual_x"])
    plan["res_y"] = add_encoder(params["encoder_residual_y"])
    # inference encoder consumes x[:, :state_dim]; its first-layer weight is
    # zero beyond state_dim rows, so feeding the full padded x is exact.
    plan["inf_zx"] = add_encoder(params["inference_encoder_zx"])
    plan["str_zx"] = {"trunk": add_mlp(params["structural_eq_zx"]),
                      "n_layers": len(params["structural_eq_zx"]), "split": False}
    plan["str_zy"] = {"trunk": add_mlp(params["structural_eq_zy"]),
                      "n_layers": len(params["structural_eq_zy"]), "split": False}
    plan["dec_x"] = {"trunk": add_mlp_split_first(params["decoder_X"], z_dim),
                     "n_layers": len(params["decoder_X"]), "split": True}
    plan["dec_y"] = {"trunk": add_mlp_split_first(params["decoder_Y"], z_dim),
                     "n_layers": len(params["decoder_Y"]), "split": True}

    return {
        "w": jnp.stack(ws, axis=0),        # (L, PAD, PAD)
        "b": jnp.stack(bs, axis=0),        # (L, 1, PAD)
        "plan": plan,
        "pad": pad,
        "dims": {"state_dim": state_dim, "action_dim": action_dim,
                 "reward_dim": reward_dim, "z_dim": z_dim, "s_dim": s_dim},
    }


# -----------------------------------------------------------------------------
# The single fused Pallas kernel
# -----------------------------------------------------------------------------
# Input slab rows: 0 x_pad, 1 y_pad, 2..5 eps[0..3]
# Output slab rows:
#  0 s_mu  1 s_logvar  2 s  3 zx_mu  4 zx_logvar  5 z_x  6 zy_mu  7 zy_logvar
#  8 z_y   9 zxi_mu   10 zxi_logvar 11 z_x_infer  12 recon_X  13 recon_Y
_N_OUT = 14


def _dual_vae_kernel(inp_ref, w_ref, b_ref, out_ref, *, plan):
    f32 = jnp.float32

    def lin(h, slot, relu):
        r = jnp.dot(h, w_ref[slot], preferred_element_type=f32) + b_ref[slot]
        return jnp.maximum(r, 0.0) if relu else r

    def run_trunk(net, h0, h1=None):
        start, n = net["trunk"], net["n_layers"]
        if net["split"]:
            # Split first layer; second slot's bias is identically zero -> skip.
            h = (jnp.dot(h0, w_ref[start], preferred_element_type=f32)
                 + jnp.dot(h1, w_ref[start + 1], preferred_element_type=f32)
                 + b_ref[start])
            if n > 1:
                h = jnp.maximum(h, 0.0)
            off = start + 2
        else:
            h = lin(h0, start, relu=(n > 1))
            off = start + 1
        for j in range(1, n):
            h = lin(h, off + j - 1, relu=(j < n - 1))
        return h

    def run_encoder(net, h0, h1=None):
        h = run_trunk(net, h0, h1)           # trunk output stays in vregs/VMEM
        return lin(h, net["mu"], False), lin(h, net["lv"], False)

    def reparam(mu, lv, k):
        std = jnp.exp(0.5 * lv) + 1e-7       # EUP slot; effectively free here
        return mu + inp_ref[2 + k] * std

    xp = inp_ref[0]
    yp = inp_ref[1]

    # Confounder s (encoder over cat(x, y) via split first-layer weights).
    s_mu, s_lv = run_encoder(plan["enc_s"], xp, yp)
    s = reparam(s_mu, s_lv, 0)

    # Structural equations z <- s.
    zx_mu_str = run_trunk(plan["str_zx"], s)
    zy_mu_str = run_trunk(plan["str_zy"], s)

    # Residual encoders.
    zx_res_mu, zx_lv = run_encoder(plan["res_x"], xp)
    zy_res_mu, zy_lv = run_encoder(plan["res_y"], yp)

    zx_mu = zx_mu_str + zx_res_mu
    zy_mu = zy_mu_str + zy_res_mu
    z_x = reparam(zx_mu, zx_lv, 1)
    z_y = reparam(zy_mu, zy_lv, 2)

    # Decoders over cat(z, s) via split first-layer weights.
    recon_x = run_trunk(plan["dec_x"], z_x, s)
    recon_y = run_trunk(plan["dec_y"], z_y, s)

    # Inference encoder for z_x from x[:, :state_dim] (zero-padded weight rows).
    zi_mu, zi_lv = run_encoder(plan["inf_zx"], xp)
    z_i = reparam(zi_mu, zi_lv, 3)

    # Packed output slab (single output buffer; sliced in the wrapper).
    out_ref[0] = s_mu
    out_ref[1] = s_lv
    out_ref[2] = s
    out_ref[3] = zx_mu
    out_ref[4] = zx_lv
    out_ref[5] = z_x
    out_ref[6] = zy_mu
    out_ref[7] = zy_lv
    out_ref[8] = z_y
    out_ref[9] = zi_mu
    out_ref[10] = zi_lv
    out_ref[11] = z_i
    out_ref[12] = recon_x
    out_ref[13] = recon_y


def dual_vae_forward(packed, x, y, eps):
    """x: (B, dx), y: (B, dy), eps: (4, B, PAD) standard-normal draws."""
    plan, pad, dims = packed["plan"], packed["pad"], packed["dims"]
    dx = dims["state_dim"] + dims["action_dim"]
    dy = dims["reward_dim"] + dims["state_dim"]
    z_dim, s_dim = dims["z_dim"], dims["s_dim"]
    batch = x.shape[0]

    # Lane-pad the two raw inputs once (replaces all torch.cat's) and pack them
    # together with the eps draws into one activation slab -> 3 kernel inputs.
    xp = jnp.zeros((batch, pad), jnp.float32).at[:, :dx].set(x)
    yp = jnp.zeros((batch, pad), jnp.float32).at[:, :dy].set(y)
    inp = jnp.concatenate([xp[None], yp[None], eps.astype(jnp.float32)], axis=0)

    vmem = pl.BlockSpec(memory_space=pltpu.MemorySpace.VMEM)
    out = pl.pallas_call(
        functools.partial(_dual_vae_kernel, plan=plan),
        out_shape=jax.ShapeDtypeStruct((_N_OUT, batch, pad), jnp.float32),
        in_specs=[vmem, vmem, vmem],
        out_specs=vmem,
    )(inp, packed["w"], packed["b"])

    def sl(i, d):
        return out[i, :, :d]

    mean = {"s": sl(0, s_dim), "z_x": sl(3, z_dim), "z_y": sl(6, z_dim),
            "z_x_infer": sl(9, z_dim)}
    logvar = {"s": sl(1, s_dim), "z_x": sl(4, z_dim), "z_y": sl(7, z_dim),
              "z_x_infer": sl(10, z_dim)}
    sample = {"s": sl(2, s_dim), "z_x": sl(5, z_dim), "z_y": sl(8, z_dim),
              "z_x_infer": sl(11, z_dim)}
    recon = {"x": sl(12, dx), "y": sl(13, dy)}
    return {"mean": mean, "logvar": logvar, "sample": sample, "recon": recon}


# -----------------------------------------------------------------------------
# Pure-JAX reference (same math, same eps) for correctness checking
# -----------------------------------------------------------------------------
def _ref_forward(params, x, y, eps, state_dim, s_dim, z_dim):
    def mlp(h, layers):
        for i, (w, b) in enumerate(layers):
            h = h @ w + b
            if i < len(layers) - 1:
                h = jnp.maximum(h, 0.0)
        return h

    def enc(h, e):
        t = mlp(h, e["mlp"])
        return t @ e["fc_mu"][0] + e["fc_mu"][1], t @ e["fc_logvar"][0] + e["fc_logvar"][1]

    def rep(mu, lv, e):
        return mu + e * (jnp.exp(0.5 * lv) + 1e-7)

    xy = jnp.concatenate([x, y], axis=1)
    s_mu, s_lv = enc(xy, params["encoder_s"])
    s = rep(s_mu, s_lv, eps[0][:, :s_dim])
    zx_str = mlp(s, params["structural_eq_zx"])
    zy_str = mlp(s, params["structural_eq_zy"])
    zx_rmu, zx_lv = enc(x, params["encoder_residual_x"])
    zy_rmu, zy_lv = enc(y, params["encoder_residual_y"])
    zx_mu = zx_str + zx_rmu
    zy_mu = zy_str + zy_rmu
    z_x = rep(zx_mu, zx_lv, eps[1][:, :z_dim])
    z_y = rep(zy_mu, zy_lv, eps[2][:, :z_dim])
    rx = mlp(jnp.concatenate([z_x, s], axis=1), params["decoder_X"])
    ry = mlp(jnp.concatenate([z_y, s], axis=1), params["decoder_Y"])
    zi_mu, zi_lv = enc(x[:, :state_dim], params["inference_encoder_zx"])
    z_i = rep(zi_mu, zi_lv, eps[3][:, :z_dim])
    return {"mean": {"s": s_mu, "z_x": zx_mu, "z_y": zy_mu, "z_x_infer": zi_mu},
            "logvar": {"s": s_lv, "z_x": zx_lv, "z_y": zy_lv, "z_x_infer": zi_lv},
            "sample": {"s": s, "z_x": z_x, "z_y": z_y, "z_x_infer": z_i},
            "recon": {"x": rx, "y": ry}}


# -----------------------------------------------------------------------------
# Demo
# -----------------------------------------------------------------------------
if __name__ == "__main__":
    BATCH = 8
    STATE_DIM = 6
    ACTION_DIM = 3
    REWARD_DIM = 1
    Z_DIM = 4
    S_DIM = 4
    HIDDEN_DIMS = [32, 32]

    dx = STATE_DIM + ACTION_DIM   # 9
    dy = REWARD_DIM + STATE_DIM   # 7

    root = jax.random.PRNGKey(0)
    k_params, k_x, k_y, k_eps = jax.random.split(root, 4)

    params = init_dual_vae(k_params, STATE_DIM, ACTION_DIM, REWARD_DIM,
                           Z_DIM, S_DIM, HIDDEN_DIMS)
    packed = pack_dual_vae_params(params, STATE_DIM, ACTION_DIM, REWARD_DIM,
                                  Z_DIM, S_DIM, HIDDEN_DIMS)

    x = jax.random.normal(k_x, (BATCH, dx), jnp.float32)
    y = jax.random.normal(k_y, (BATCH, dy), jnp.float32)
    # One N(0,1) draw shared by all four reparameterizations (== torch.randn_like).
    eps = jax.random.normal(k_eps, (4, BATCH, packed["pad"]), jnp.float32)

    fwd = jax.jit(lambda xx, yy, ee: dual_vae_forward(packed, xx, yy, ee))
    out = jax.block_until_ready(fwd(x, y, eps))

    # Shape checks.
    assert out["recon"]["x"].shape == (BATCH, dx)
    assert out["recon"]["y"].shape == (BATCH, dy)
    assert out["mean"]["s"].shape == (BATCH, S_DIM)
    assert out["sample"]["z_x"].shape == (BATCH, Z_DIM)
    assert out["sample"]["z_x_infer"].shape == (BATCH, Z_DIM)

    # Numerical check against the pure-JAX reference (same params, same eps).
    ref = _ref_forward(params, x, y, eps, STATE_DIM, S_DIM, Z_DIM)
    for grp in ("mean", "logvar", "sample", "recon"):
        for name in out[grp]:
            a, b = out[grp][name], ref[grp][name]
            assert a.shape == b.shape, (grp, name, a.shape, b.shape)
            err = float(jnp.max(jnp.abs(a - b)))
            assert err < 5e-2, (grp, name, err)

    print("KERNEL_OK")
</pallas_src>

<mosaic_0001>
module attributes {stable_mosaic.version = 11 : i64} {
  func.func @_dual_vae_kernel(%arg0: memref<6x8x32xf32, #tpu.memory_space<vmem>>, %arg1: memref<35x32x32xf32, #tpu.memory_space<vmem>>, %arg2: memref<35x1x32xf32, #tpu.memory_space<vmem>>, %arg3: memref<14x8x32xf32, #tpu.memory_space<vmem>>) attributes {dimension_semantics = [], scalar_prefetch = 0 : i64, scratch_operands = 0 : i64, tpu.core_type = #tpu.core_type<tc>} {
    %c0 = arith.constant 0 : index
    %c0_0 = arith.constant 0 : index
    %c0_1 = arith.constant 0 : index
    %0 = vector.load %arg0[%c0, %c0_0, %c0_1] : memref<6x8x32xf32, #tpu.memory_space<vmem>>, vector<1x8x32xf32>
    %1 = vector.shape_cast %0 : vector<1x8x32xf32> to vector<8x32xf32>
    %c1 = arith.constant 1 : index
    %c0_2 = arith.constant 0 : index
    %c0_3 = arith.constant 0 : index
    %2 = vector.load %arg0[%c1, %c0_2, %c0_3] : memref<6x8x32xf32, #tpu.memory_space<vmem>>, vector<1x8x32xf32>
    %3 = vector.shape_cast %2 : vector<1x8x32xf32> to vector<8x32xf32>
    %c0_4 = arith.constant 0 : index
    %c0_5 = arith.constant 0 : index
    %c0_6 = arith.constant 0 : index
    %4 = vector.load %arg1[%c0_4, %c0_5, %c0_6] : memref<35x32x32xf32, #tpu.memory_space<vmem>>, vector<1x32x32xf32>
    %5 = vector.shape_cast %4 : vector<1x32x32xf32> to vector<32x32xf32>
    %cst = arith.constant dense<0.000000e+00> : vector<8x32xf32>
    %6 = tpu.matmul %1, %5, %cst {dimension_numbers = #tpu.dot_dimension_numbers<[1], [0], [0], [1], [0, 0, 1, 1], [], []>} : vector<8x32xf32>, vector<32x32xf32>, vector<8x32xf32> -> vector<8x32xf32>
    %c1_7 = arith.constant 1 : index
    %c0_8 = arith.constant 0 : index
    %c0_9 = arith.constant 0 : index
    %7 = vector.load %arg1[%c1_7, %c0_8, %c0_9] : memref<35x32x32xf32, #tpu.memory_space<vmem>>, vector<1x32x32xf32>
    %8 = vector.shape_cast %7 : vector<1x32x32xf32> to vector<32x32xf32>
    %cst_10 = arith.constant dense<0.000000e+00> : vector<8x32xf32>
    %9 = tpu.matmul %3, %8, %cst_10 {dimension_numbers = #tpu.dot_dimension_numbers<[1], [0], [0], [1], [0, 0, 1, 1], [], []>} : vector<8x32xf32>, vector<32x32xf32>, vector<8x32xf32> -> vector<8x32xf32>
    %10 = arith.addf %6, %9 : vector<8x32xf32>
    %c0_11 = arith.constant 0 : index
    %c0_12 = arith.constant 0 : index
    %c0_13 = arith.constant 0 : index
    %11 = vector.load %arg2[%c0_11, %c0_12, %c0_13] : memref<35x1x32xf32, #tpu.memory_space<vmem>>, vector<1x1x32xf32>
    %12 = vector.shape_cast %11 : vector<1x1x32xf32> to vector<1x32xf32>
    %13 = vector.broadcast %12 : vector<1x32xf32> to vector<8x32xf32>
    %14 = arith.addf %10, %13 : vector<8x32xf32>
    %cst_14 = arith.constant 0.000000e+00 : f32
    %15 = vector.broadcast %cst_14 : f32 to vector<8x32xf32>
    %16 = arith.maximumf %14, %15 : vector<8x32xf32>
    %c2 = arith.constant 2 : index
    %c0_15 = arith.constant 0 : index
    %c0_16 = arith.constant 0 : index
    %17 = vector.load %arg1[%c2, %c0_15, %c0_16] : memref<35x32x32xf32, #tpu.memory_space<vmem>>, vector<1x32x32xf32>
    %18 = vector.shape_cast %17 : vector<1x32x32xf32> to vector<32x32xf32>
    %cst_17 = arith.constant dense<0.000000e+00> : vector<8x32xf32>
    %19 = tpu.matmul %16, %18, %cst_17 {dimension_numbers = #tpu.dot_dimension_numbers<[1], [0], [0], [1], [0, 0, 1, 1], [], []>} : vector<8x32xf32>, vector<32x32xf32>, vector<8x32xf32> -> vector<8x32xf32>
    %c2_18 = arith.constant 2 : index
    %c0_19 = arith.constant 0 : index
    %c0_20 = arith.constant 0 : index
    %20 = vector.load %arg2[%c2_18, %c0_19, %c0_20] : memref<35x1x32xf32, #tpu.memory_space<vmem>>, vector<1x1x32xf32>
    %21 = vector.shape_cast %20 : vector<1x1x32xf32> to vector<1x32xf32>
    %22 = vector.broadcast %21 : vector<1x32xf32> to vector<8x32xf32>
    %23 = arith.addf %19, %22 : vector<8x32xf32>
    %cst_21 = arith.constant 0.000000e+00 : f32
    %24 = vector.broadcast %cst_21 : f32 to vector<8x32xf32>
    %25 = arith.maximumf %23, %24 : vector<8x32xf32>
    %c3 = arith.constant 3 : index
    %c0_22 = arith.constant 0 : index
    %c0_23 = arith.constant 0 : index
    %26 = vector.load %arg1[%c3, %c0_22, %c0_23] : memref<35x32x32xf32, #tpu.memory_space<vmem>>, vector<1x32x32xf32>
    %27 = vector.shape_cast %26 : vector<1x32x32xf32> to vector<32x32xf32>
    %cst_24 = arith.constant dense<0.000000e+00> : vector<8x32xf32>
    %28 = tpu.matmul %25, %27, %cst_24 {dimension_numbers = #tpu.dot_dimension_numbers<[1], [0], [0], [1], [0, 0, 1, 1], [], []>} : vector<8x32xf32>, vector<32x32xf32>, vector<8x32xf32> -> vector<8x32xf32>
    %c3_25 = arith.constant 3 : index
    %c0_26 = arith.constant 0 : index
    %c0_27 = arith.constant 0 : index
    %29 = vector.load %arg2[%c3_25, %c0_26, %c0_27] : memref<35x1x32xf32, #tpu.memory_space<vmem>>, vector<1x1x32xf32>
    %30 = vector.shape_cast %29 : vector<1x1x32xf32> to vector<1x32xf32>
    %31 = vector.broadcast %30 : vector<1x32xf32> to vector<8x32xf32>
    %32 = arith.addf %28, %31 : vector<8x32xf32>
    %c4 = arith.constant 4 : index
    %c0_28 = arith.constant 0 : index
    %c0_29 = arith.constant 0 : index
    %33 = vector.load %arg1[%c4, %c0_28, %c0_29] : memref<35x32x32xf32, #tpu.memory_space<vmem>>, vector<1x32x32xf32>
    %34 = vector.shape_cast %33 : vector<1x32x32xf32> to vector<32x32xf32>
    %cst_30 = arith.constant dense<0.000000e+00> : vector<8x32xf32>
    %35 = tpu.matmul %32, %34, %cst_30 {dimension_numbers = #tpu.dot_dimension_numbers<[1], [0], [0], [1], [0, 0, 1, 1], [], []>} : vector<8x32xf32>, vector<32x32xf32>, vector<8x32xf32> -> vector<8x32xf32>
    %c4_31 = arith.constant 4 : index
    %c0_32 = arith.constant 0 : index
    %c0_33 = arith.constant 0 : index
    %36 = vector.load %arg2[%c4_31, %c0_32, %c0_33] : memref<35x1x32xf32, #tpu.memory_space<vmem>>, vector<1x1x32xf32>
    %37 = vector.shape_cast %36 : vector<1x1x32xf32> to vector<1x32xf32>
    %38 = vector.broadcast %37 : vector<1x32xf32> to vector<8x32xf32>
    %39 = arith.addf %35, %38 : vector<8x32xf32>
    %c5 = arith.constant 5 : index
    %c0_34 = arith.constant 0 : index
    %c0_35 = arith.constant 0 : index
    %40 = vector.load %arg1[%c5, %c0_34, %c0_35] : memref<35x32x32xf32, #tpu.memory_space<vmem>>, vector<1x32x32xf32>
    %41 = vector.shape_cast %40 : vector<1x32x32xf32> to vector<32x32xf32>
    %cst_36 = arith.constant dense<0.000000e+00> : vector<8x32xf32>
    %42 = tpu.matmul %32, %41, %cst_36 {dimension_numbers = #tpu.dot_dimension_numbers<[1], [0], [0], [1], [0, 0, 1, 1], [], []>} : vector<8x32xf32>, vector<32x32xf32>, vector<8x32xf32> -> vector<8x32xf32>
    %c5_37 = arith.constant 5 : index
    %c0_38 = arith.constant 0 : index
    %c0_39 = arith.constant 0 : index
    %43 = vector.load %arg2[%c5_37, %c0_38, %c0_39] : memref<35x1x32xf32, #tpu.memory_space<vmem>>, vector<1x1x32xf32>
    %44 = vector.shape_cast %43 : vector<1x1x32xf32> to vector<1x32xf32>
    %45 = vector.broadcast %44 : vector<1x32xf32> to vector<8x32xf32>
    %46 = arith.addf %42, %45 : vector<8x32xf32>
    %cst_40 = arith.constant 5.000000e-01 : f32
    %47 = vector.broadcast %cst_40 : f32 to vector<8x32xf32>
    %48 = arith.mulf %47, %46 : vector<8x32xf32>
    %49 = math.exp %48 : vector<8x32xf32>
    %cst_41 = arith.constant 1.000000e-07 : f32
    %50 = vector.broadcast %cst_41 : f32 to vector<8x32xf32>
    %51 = arith.addf %49, %50 : vector<8x32xf32>
    %c2_42 = arith.constant 2 : index
    %c0_43 = arith.constant 0 : index
    %c0_44 = arith.constant 0 : index
    %52 = vector.load %arg0[%c2_42, %c0_43, %c0_44] : memref<6x8x32xf32, #tpu.memory_space<vmem>>, vector<1x8x32xf32>
    %53 = vector.shape_cast %52 : vector<1x8x32xf32> to vector<8x32xf32>
    %54 = arith.mulf %53, %51 : vector<8x32xf32>
    %55 = arith.addf %39, %54 : vector<8x32xf32>
    %c21 = arith.constant 21 : index
    %c0_45 = arith.constant 0 : index
    %c0_46 = arith.constant 0 : index
    %56 = vector.load %arg1[%c21, %c0_45, %c0_46] : memref<35x32x32xf32, #tpu.memory_space<vmem>>, vector<1x32x32xf32>
    %57 = vector.shape_cast %56 : vector<1x32x32xf32> to vector<32x32xf32>
    %cst_47 = arith.constant dense<0.000000e+00> : vector<8x32xf32>
    %58 = tpu.matmul %55, %57, %cst_47 {dimension_numbers = #tpu.dot_dimension_numbers<[1], [0], [0], [1], [0, 0, 1, 1], [], []>} : vector<8x32xf32>, vector<32x32xf32>, vector<8x32xf32> -> vector<8x32xf32>
    %c21_48 = arith.constant 21 : index
    %c0_49 = arith.constant 0 : index
    %c0_50 = arith.constant 0 : index
    %59 = vector.load %arg2[%c21_48, %c0_49, %c0_50] : memref<35x1x32xf32, #tpu.memory_space<vmem>>, vector<1x1x32xf32>
    %60 = vector.shape_cast %59 : vector<1x1x32xf32> to vector<1x32xf32>
    %61 = vector.broadcast %60 : vector<1x32xf32> to vector<8x32xf32>
    %62 = arith.addf %58, %61 : vector<8x32xf32>
    %cst_51 = arith.constant 0.000000e+00 : f32
    %63 = vector.broadcast %cst_51 : f32 to vector<8x32xf32>
    %64 = arith.maximumf %62, %63 : vector<8x32xf32>
    %c22 = arith.constant 22 : index
    %c0_52 = arith.constant 0 : index
    %c0_53 = arith.constant 0 : index
    %65 = vector.load %arg1[%c22, %c0_52, %c0_53] : memref<35x32x32xf32, #tpu.memory_space<vmem>>, vector<1x32x32xf32>
    %66 = vector.shape_cast %65 : vector<1x32x32xf32> to vector<32x32xf32>
    %cst_54 = arith.constant dense<0.000000e+00> : vector<8x32xf32>
    %67 = tpu.matmul %64, %66, %cst_54 {dimension_numbers = #tpu.dot_dimension_numbers<[1], [0], [0], [1], [0, 0, 1, 1], [], []>} : vector<8x32xf32>, vector<32x32xf32>, vector<8x32xf32> -> vector<8x32xf32>
    %c22_55 = arith.constant 22 : index
    %c0_56 = arith.constant 0 : index
    %c0_57 = arith.constant 0 : index
    %68 = vector.load %arg2[%c22_55, %c0_56, %c0_57] : memref<35x1x32xf32, #tpu.memory_space<vmem>>, vector<1x1x32xf32>
    %69 = vector.shape_cast %68 : vector<1x1x32xf32> to vector<1x32xf32>
    %70 = vector.broadcast %69 : vector<1x32xf32> to vector<8x32xf32>
    %71 = arith.addf %67, %70 : vector<8x32xf32>
    %cst_58 = arith.constant 0.000000e+00 : f32
    %72 = vector.broadcast %cst_58 : f32 to vector<8x32xf32>
    %73 = arith.maximumf %71, %72 : vector<8x32xf32>
    %c23 = arith.constant 23 : index
    %c0_59 = arith.constant 0 : index
    %c0_60 = arith.constant 0 : index
    %74 = vector.load %arg1[%c23, %c0_59, %c0_60] : memref<35x32x32xf32, #tpu.memory_space<vmem>>, vector<1x32x32xf32>
    %75 = vector.shape_cast %74 : vector<1x32x32xf32> to vector<32x32xf32>
    %cst_61 = arith.constant dense<0.000000e+00> : vector<8x32xf32>
    %76 = tpu.matmul %73, %75, %cst_61 {dimension_numbers = #tpu.dot_dimension_numbers<[1], [0], [0], [1], [0, 0, 1, 1], [], []>} : vector<8x32xf32>, vector<32x32xf32>, vector<8x32xf32> -> vector<8x32xf32>
    %c23_62 = arith.constant 23 : index
    %c0_63 = arith.constant 0 : index
    %c0_64 = arith.constant 0 : index
    %77 = vector.load %arg2[%c23_62, %c0_63, %c0_64] : memref<35x1x32xf32, #tpu.memory_space<vmem>>, vector<1x1x32xf32>
    %78 = vector.shape_cast %77 : vector<1x1x32xf32> to vector<1x32xf32>
    %79 = vector.broadcast %78 : vector<1x32xf32> to vector<8x32xf32>
    %80 = arith.addf %76, %79 : vector<8x32xf32>
    %c24 = arith.constant 24 : index
    %c0_65 = arith.constant 0 : index
    %c0_66 = arith.constant 0 : index
    %81 = vector.load %arg1[%c24, %c0_65, %c0_66] : memref<35x32x32xf32, #tpu.memory_space<vmem>>, vector<1x32x32xf32>
    %82 = vector.shape_cast %81 : vector<1x32x32xf32> to vector<32x32xf32>
    %cst_67 = arith.constant dense<0.000000e+00> : vector<8x32xf32>
    %83 = tpu.matmul %55, %82, %cst_67 {dimension_numbers = #tpu.dot_dimension_numbers<[1], [0], [0], [1], [0, 0, 1, 1], [], []>} : vector<8x32xf32>, vector<32x32xf32>, vector<8x32xf32> -> vector<8x32xf32>
    %c24_68 = arith.constant 24 : index
    %c0_69 = arith.constant 0 : index
    %c0_70 = arith.constant 0 : index
    %84 = vector.load %arg2[%c24_68, %c0_69, %c0_70] : memref<35x1x32xf32, #tpu.memory_space<vmem>>, vector<1x1x32xf32>
    %85 = vector.shape_cast %84 : vector<1x1x32xf32> to vector<1x32xf32>
    %86 = vector.broadcast %85 : vector<1x32xf32> to vector<8x32xf32>
    %87 = arith.addf %83, %86 : vector<8x32xf32>
    %cst_71 = arith.constant 0.000000e+00 : f32
    %88 = vector.broadcast %cst_71 : f32 to vector<8x32xf32>
    %89 = arith.maximumf %87, %88 : vector<8x32xf32>
    %c25 = arith.constant 25 : index
    %c0_72 = arith.constant 0 : index
    %c0_73 = arith.constant 0 : index
    %90 = vector.load %arg1[%c25, %c0_72, %c0_73] : memref<35x32x32xf32, #tpu.memory_space<vmem>>, vector<1x32x32xf32>
    %91 = vector.shape_cast %90 : vector<1x32x32xf32> to vector<32x32xf32>
    %cst_74 = arith.constant dense<0.000000e+00> : vector<8x32xf32>
    %92 = tpu.matmul %89, %91, %cst_74 {dimension_numbers = #tpu.dot_dimension_numbers<[1], [0], [0], [1], [0, 0, 1, 1], [], []>} : vector<8x32xf32>, vector<32x32xf32>, vector<8x32xf32> -> vector<8x32xf32>
    %c25_75 = arith.constant 25 : index
    %c0_76 = arith.constant 0 : index
    %c0_77 = arith.constant 0 : index
    %93 = vector.load %arg2[%c25_75, %c0_76, %c0_77] : memref<35x1x32xf32, #tpu.memory_space<vmem>>, vector<1x1x32xf32>
    %94 = vector.shape_cast %93 : vector<1x1x32xf32> to vector<1x32xf32>
    %95 = vector.broadcast %94 : vector<1x32xf32> to vector<8x32xf32>
    %96 = arith.addf %92, %95 : vector<8x32xf32>
    %cst_78 = arith.constant 0.000000e+00 : f32
    %97 = vector.broadcast %cst_78 : f32 to vector<8x32xf32>
    %98 = arith.maximumf %96, %97 : vector<8x32xf32>
    %c26 = arith.constant 26 : index
    %c0_79 = arith.constant 0 : index
    %c0_80 = arith.constant 0 : index
    %99 = vector.load %arg1[%c26, %c0_79, %c0_80] : memref<35x32x32xf32, #tpu.memory_space<vmem>>, vector<1x32x32xf32>
    %100 = vector.shape_cast %99 : vector<1x32x32xf32> to vector<32x32xf32>
    %cst_81 = arith.constant dense<0.000000e+00> : vector<8x32xf32>
    %101 = tpu.matmul %98, %100, %cst_81 {dimension_numbers = #tpu.dot_dimension_numbers<[1], [0], [0], [1], [0, 0, 1, 1], [], []>} : vector<8x32xf32>, vector<32x32xf32>, vector<8x32xf32> -> vector<8x32xf32>
    %c26_82 = arith.constant 26 : index
    %c0_83 = arith.constant 0 : index
    %c0_84 = arith.constant 0 : index
    %102 = vector.load %arg2[%c26_82, %c0_83, %c0_84] : memref<35x1x32xf32, #tpu.memory_space<vmem>>, vector<1x1x32xf32>
    %103 = vector.shape_cast %102 : vector<1x1x32xf32> to vector<1x32xf32>
    %104 = vector.broadcast %103 : vector<1x32xf32> to vector<8x32xf32>
    %105 = arith.addf %101, %104 : vector<8x32xf32>
    %c6 = arith.constant 6 : index
    %c0_85 = arith.constant 0 : index
    %c0_86 = arith.constant 0 : index
    %106 = vector.load %arg1[%c6, %c0_85, %c0_86] : memref<35x32x32xf32, #tpu.memory_space<vmem>>, vector<1x32x32xf32>
    %107 = vector.shape_cast %106 : vector<1x32x32xf32> to vector<32x32xf32>
    %cst_87 = arith.constant dense<0.000000e+00> : vector<8x32xf32>
    %108 = tpu.matmul %1, %107, %cst_87 {dimension_numbers = #tpu.dot_dimension_numbers<[1], [0], [0], [1], [0, 0, 1, 1], [], []>} : vector<8x32xf32>, vector<32x32xf32>, vector<8x32xf32> -> vector<8x32xf32>
    %c6_88 = arith.constant 6 : index
    %c0_89 = arith.constant 0 : index
    %c0_90 = arith.constant 0 : index
    %109 = vector.load %arg2[%c6_88, %c0_89, %c0_90] : memref<35x1x32xf32, #tpu.memory_space<vmem>>, vector<1x1x32xf32>
    %110 = vector.shape_cast %109 : vector<1x1x32xf32> to vector<1x32xf32>
    %111 = vector.broadcast %110 : vector<1x32xf32> to vector<8x32xf32>
    %112 = arith.addf %108, %111 : vector<8x32xf32>
    %cst_91 = arith.constant 0.000000e+00 : f32
    %113 = vector.broadcast %cst_91 : f32 to vector<8x32xf32>
    %114 = arith.maximumf %112, %113 : vector<8x32xf32>
    %c7 = arith.constant 7 : index
    %c0_92 = arith.constant 0 : index
    %c0_93 = arith.constant 0 : index
    %115 = vector.load %arg1[%c7, %c0_92, %c0_93] : memref<35x32x32xf32, #tpu.memory_space<vmem>>, vector<1x32x32xf32>
    %116 = vector.shape_cast %115 : vector<1x32x32xf32> to vector<32x32xf32>
    %cst_94 = arith.constant dense<0.000000e+00> : vector<8x32xf32>
    %117 = tpu.matmul %114, %116, %cst_94 {dimension_numbers = #tpu.dot_dimension_numbers<[1], [0], [0], [1], [0, 0, 1, 1], [], []>} : vector<8x32xf32>, vector<32x32xf32>, vector<8x32xf32> -> vector<8x32xf32>
    %c7_95 = arith.constant 7 : index
    %c0_96 = arith.constant 0 : index
    %c0_97 = arith.constant 0 : index
    %118 = vector.load %arg2[%c7_95, %c0_96, %c0_97] : memref<35x1x32xf32, #tpu.memory_space<vmem>>, vector<1x1x32xf32>
    %119 = vector.shape_cast %118 : vector<1x1x32xf32> to vector<1x32xf32>
    %120 = vector.broadcast %119 : vector<1x32xf32> to vector<8x32xf32>
    %121 = arith.addf %117, %120 : vector<8x32xf32>
    %cst_98 = arith.constant 0.000000e+00 : f32
    %122 = vector.broadcast %cst_98 : f32 to vector<8x32xf32>
    %123 = arith.maximumf %121, %122 : vector<8x32xf32>
    %c8 = arith.constant 8 : index
    %c0_99 = arith.constant 0 : index
    %c0_100 = arith.constant 0 : index
    %124 = vector.load %arg1[%c8, %c0_99, %c0_100] : memref<35x32x32xf32, #tpu.memory_space<vmem>>, vector<1x32x32xf32>
    %125 = vector.shape_cast %124 : vector<1x32x32xf32> to vector<32x32xf32>
    %cst_101 = arith.constant dense<0.000000e+00> : vector<8x32xf32>
    %126 = tpu.matmul %123, %125, %cst_101 {dimension_numbers = #tpu.dot_dimension_numbers<[1], [0], [0], [1], [0, 0, 1, 1], [], []>} : vector<8x32xf32>, vector<32x32xf32>, vector<8x32xf32> -> vector<8x32xf32>
    %c8_102 = arith.constant 8 : index
    %c0_103 = arith.constant 0 : index
    %c0_104 = arith.constant 0 : index
    %127 = vector.load %arg2[%c8_102, %c0_103, %c0_104] : memref<35x1x32xf32, #tpu.memory_space<vmem>>, vector<1x1x32xf32>
    %128 = vector.shape_cast %127 : vector<1x1x32xf32> to vector<1x32xf32>
    %129 = vector.broadcast %128 : vector<1x32xf32> to vector<8x32xf32>
    %130 = arith.addf %126, %129 : vector<8x32xf32>
    %c9 = arith.constant 9 : index
    %c0_105 = arith.constant 0 : index
    %c0_106 = arith.constant 0 : index
    %131 = vector.load %arg1[%c9, %c0_105, %c0_106] : memref<35x32x32xf32, #tpu.memory_space<vmem>>, vector<1x32x32xf32>
    %132 = vector.shape_cast %131 : vector<1x32x32xf32> to vector<32x32xf32>
    %cst_107 = arith.constant dense<0.000000e+00> : vector<8x32xf32>
    %133 = tpu.matmul %130, %132, %cst_107 {dimension_numbers = #tpu.dot_dimension_numbers<[1], [0], [0], [1], [0, 0, 1, 1], [], []>} : vector<8x32xf32>, vector<32x32xf32>, vector<8x32xf32> -> vector<8x32xf32>
    %c9_108 = arith.constant 9 : index
    %c0_109 = arith.constant 0 : index
    %c0_110 = arith.constant 0 : index
    %134 = vector.load %arg2[%c9_108, %c0_109, %c0_110] : memref<35x1x32xf32, #tpu.memory_space<vmem>>, vector<1x1x32xf32>
    %135 = vector.shape_cast %134 : vector<1x1x32xf32> to vector<1x32xf32>
    %136 = vector.broadcast %135 : vector<1x32xf32> to vector<8x32xf32>
    %137 = arith.addf %133, %136 : vector<8x32xf32>
    %c10 = arith.constant 10 : index
    %c0_111 = arith.constant 0 : index
    %c0_112 = arith.constant 0 : index
    %138 = vector.load %arg1[%c10, %c0_111, %c0_112] : memref<35x32x32xf32, #tpu.memory_space<vmem>>, vector<1x32x32xf32>
    %139 = vector.shape_cast %138 : vector<1x32x32xf32> to vector<32x32xf32>
    %cst_113 = arith.constant dense<0.000000e+00> : vector<8x32xf32>
    %140 = tpu.matmul %130, %139, %cst_113 {dimension_numbers = #tpu.dot_dimension_numbers<[1], [0], [0], [1], [0, 0, 1, 1], [], []>} : vector<8x32xf32>, vector<32x32xf32>, vector<8x32xf32> -> vector<8x32xf32>
    %c10_114 = arith.constant 10 : index
    %c0_115 = arith.constant 0 : index
    %c0_116 = arith.constant 0 : index
    %141 = vector.load %arg2[%c10_114, %c0_115, %c0_116] : memref<35x1x32xf32, #tpu.memory_space<vmem>>, vector<1x1x32xf32>
    %142 = vector.shape_cast %141 : vector<1x1x32xf32> to vector<1x32xf32>
    %143 = vector.broadcast %142 : vector<1x32xf32> to vector<8x32xf32>
    %144 = arith.addf %140, %143 : vector<8x32xf32>
    %c11 = arith.constant 11 : index
    %c0_117 = arith.constant 0 : index
    %c0_118 = arith.constant 0 : index
    %145 = vector.load %arg1[%c11, %c0_117, %c0_118] : memref<35x32x32xf32, #tpu.memory_space<vmem>>, vector<1x32x32xf32>
    %146 = vector.shape_cast %145 : vector<1x32x32xf32> to vector<32x32xf32>
    %cst_119 = arith.constant dense<0.000000e+00> : vector<8x32xf32>
    %147 = tpu.matmul %3, %146, %cst_119 {dimension_numbers = #tpu.dot_dimension_numbers<[1], [0], [0], [1], [0, 0, 1, 1], [], []>} : vector<8x32xf32>, vector<32x32xf32>, vector<8x32xf32> -> vector<8x32xf32>
    %c11_120 = arith.constant 11 : index
    %c0_121 = arith.constant 0 : index
    %c0_122 = arith.constant 0 : index
    %148 = vector.load %arg2[%c11_120, %c0_121, %c0_122] : memref<35x1x32xf32, #tpu.memory_space<vmem>>, vector<1x1x32xf32>
    %149 = vector.shape_cast %148 : vector<1x1x32xf32> to vector<1x32xf32>
    %150 = vector.broadcast %149 : vector<1x32xf32> to vector<8x32xf32>
    %151 = arith.addf %147, %150 : vector<8x32xf32>
    %cst_123 = arith.constant 0.000000e+00 : f32
    %152 = vector.broadcast %cst_123 : f32 to vector<8x32xf32>
    %153 = arith.maximumf %151, %152 : vector<8x32xf32>
    %c12 = arith.constant 12 : index
    %c0_124 = arith.constant 0 : index
    %c0_125 = arith.constant 0 : index
    %154 = vector.load %arg1[%c12, %c0_124, %c0_125] : memref<35x32x32xf32, #tpu.memory_space<vmem>>, vector<1x32x32xf32>
    %155 = vector.shape_cast %154 : vector<1x32x32xf32> to vector<32x32xf32>
    %cst_126 = arith.constant dense<0.000000e+00> : vector<8x32xf32>
    %156 = tpu.matmul %153, %155, %cst_126 {dimension_numbers = #tpu.dot_dimension_numbers<[1], [0], [0], [1], [0, 0, 1, 1], [], []>} : vector<8x32xf32>, vector<32x32xf32>, vector<8x32xf32> -> vector<8x32xf32>
    %c12_127 = arith.constant 12 : index
    %c0_128 = arith.constant 0 : index
    %c0_129 = arith.constant 0 : index
    %157 = vector.load %arg2[%c12_127, %c0_128, %c0_129] : memref<35x1x32xf32, #tpu.memory_space<vmem>>, vector<1x1x32xf32>
    %158 = vector.shape_cast %157 : vector<1x1x32xf32> to vector<1x32xf32>
    %159 = vector.broadcast %158 : vector<1x32xf32> to vector<8x32xf32>
    %160 = arith.addf %156, %159 : vector<8x32xf32>
    %cst_130 = arith.constant 0.000000e+00 : f32
    %161 = vector.broadcast %cst_130 : f32 to vector<8x32xf32>
    %162 = arith.maximumf %160, %161 : vector<8x32xf32>
    %c13 = arith.constant 13 : index
    %c0_131 = arith.constant 0 : index
    %c0_132 = arith.constant 0 : index
    %163 = vector.load %arg1[%c13, %c0_131, %c0_132] : memref<35x32x32xf32, #tpu.memory_space<vmem>>, vector<1x32x32xf32>
    %164 = vector.shape_cast %163 : vector<1x32x32xf32> to vector<32x32xf32>
    %cst_133 = arith.constant dense<0.000000e+00> : vector<8x32xf32>
    %165 = tpu.matmul %162, %164, %cst_133 {dimension_numbers = #tpu.dot_dimension_numbers<[1], [0], [0], [1], [0, 0, 1, 1], [], []>} : vector<8x32xf32>, vector<32x32xf32>, vector<8x32xf32> -> vector<8x32xf32>
    %c13_134 = arith.constant 13 : index
    %c0_135 = arith.constant 0 : index
    %c0_136 = arith.constant 0 : index
    %166 = vector.load %arg2[%c13_134, %c0_135, %c0_136] : memref<35x1x32xf32, #tpu.memory_space<vmem>>, vector<1x1x32xf32>
    %167 = vector.shape_cast %166 : vector<1x1x32xf32> to vector<1x32xf32>
    %168 = vector.broadcast %167 : vector<1x32xf32> to vector<8x32xf32>
    %169 = arith.addf %165, %168 : vector<8x32xf32>
    %c14 = arith.constant 14 : index
    %c0_137 = arith.constant 0 : index
    %c0_138 = arith.constant 0 : index
    %170 = vector.load %arg1[%c14, %c0_137, %c0_138] : memref<35x32x32xf32, #tpu.memory_space<vmem>>, vector<1x32x32xf32>
    %171 = vector.shape_cast %170 : vector<1x32x32xf32> to vector<32x32xf32>
    %cst_139 = arith.constant dense<0.000000e+00> : vector<8x32xf32>
    %172 = tpu.matmul %169, %171, %cst_139 {dimension_numbers = #tpu.dot_dimension_numbers<[1], [0], [0], [1], [0, 0, 1, 1], [], []>} : vector<8x32xf32>, vector<32x32xf32>, vector<8x32xf32> -> vector<8x32xf32>
    %c14_140 = arith.constant 14 : index
    %c0_141 = arith.constant 0 : index
    %c0_142 = arith.constant 0 : index
    %173 = vector.load %arg2[%c14_140, %c0_141, %c0_142] : memref<35x1x32xf32, #tpu.memory_space<vmem>>, vector<1x1x32xf32>
    %174 = vector.shape_cast %173 : vector<1x1x32xf32> to vector<1x32xf32>
    %175 = vector.broadcast %174 : vector<1x32xf32> to vector<8x32xf32>
    %176 = arith.addf %172, %175 : vector<8x32xf32>
    %c15 = arith.constant 15 : index
    %c0_143 = arith.constant 0 : index
    %c0_144 = arith.constant 0 : index
    %177 = vector.load %arg1[%c15, %c0_143, %c0_144] : memref<35x32x32xf32, #tpu.memory_space<vmem>>, vector<1x32x32xf32>
    %178 = vector.shape_cast %177 : vector<1x32x32xf32> to vector<32x32xf32>
    %cst_145 = arith.constant dense<0.000000e+00> : vector<8x32xf32>
    %179 = tpu.matmul %169, %178, %cst_145 {dimension_numbers = #tpu.dot_dimension_numbers<[1], [0], [0], [1], [0, 0, 1, 1], [], []>} : vector<8x32xf32>, vector<32x32xf32>, vector<8x32xf32> -> vector<8x32xf32>
    %c15_146 = arith.constant 15 : index
    %c0_147 = arith.constant 0 : index
    %c0_148 = arith.constant 0 : index
    %180 = vector.load %arg2[%c15_146, %c0_147, %c0_148] : memref<35x1x32xf32, #tpu.memory_space<vmem>>, vector<1x1x32xf32>
    %181 = vector.shape_cast %180 : vector<1x1x32xf32> to vector<1x32xf32>
    %182 = vector.broadcast %181 : vector<1x32xf32> to vector<8x32xf32>
    %183 = arith.addf %179, %182 : vector<8x32xf32>
    %184 = arith.addf %80, %137 : vector<8x32xf32>
    %185 = arith.addf %105, %176 : vector<8x32xf32>
    %cst_149 = arith.constant 5.000000e-01 : f32
    %186 = vector.broadcast %cst_149 : f32 to vector<8x32xf32>
    %187 = arith.mulf %186, %144 : vector<8x32xf32>
    %188 = math.exp %187 : vector<8x32xf32>
    %cst_150 = arith.constant 1.000000e-07 : f32
    %189 = vector.broadcast %cst_150 : f32 to vector<8x32xf32>
    %190 = arith.addf %188, %189 : vector<8x32xf32>
    %c3_151 = arith.constant 3 : index
    %c0_152 = arith.constant 0 : index
    %c0_153 = arith.constant 0 : index
    %191 = vector.load %arg0[%c3_151, %c0_152, %c0_153] : memref<6x8x32xf32, #tpu.memory_space<vmem>>, vector<1x8x32xf32>
    %192 = vector.shape_cast %191 : vector<1x8x32xf32> to vector<8x32xf32>
    %193 = arith.mulf %192, %190 : vector<8x32xf32>
    %194 = arith.addf %184, %193 : vector<8x32xf32>
    %cst_154 = arith.constant 5.000000e-01 : f32
    %195 = vector.broadcast %cst_154 : f32 to vector<8x32xf32>
    %196 = arith.mulf %195, %183 : vector<8x32xf32>
    %197 = math.exp %196 : vector<8x32xf32>
    %cst_155 = arith.constant 1.000000e-07 : f32
    %198 = vector.broadcast %cst_155 : f32 to vector<8x32xf32>
    %199 = arith.addf %197, %198 : vector<8x32xf32>
    %c4_156 = arith.constant 4 : index
    %c0_157 = arith.constant 0 : index
    %c0_158 = arith.constant 0 : index
    %200 = vector.load %arg0[%c4_156, %c0_157, %c0_158] : memref<6x8x32xf32, #tpu.memory_space<vmem>>, vector<1x8x32xf32>
    %201 = vector.shape_cast %200 : vector<1x8x32xf32> to vector<8x32xf32>
    %202 = arith.mulf %201, %199 : vector<8x32xf32>
    %203 = arith.addf %185, %202 : vector<8x32xf32>
    %c27 = arith.constant 27 : index
    %c0_159 = arith.constant 0 : index
    %c0_160 = arith.constant 0 : index
    %204 = vector.load %arg1[%c27, %c0_159, %c0_160] : memref<35x32x32xf32, #tpu.memory_space<vmem>>, vector<1x32x32xf32>
    %205 = vector.shape_cast %204 : vector<1x32x32xf32> to vector<32x32xf32>
    %cst_161 = arith.constant dense<0.000000e+00> : vector<8x32xf32>
    %206 = tpu.matmul %194, %205, %cst_161 {dimension_numbers = #tpu.dot_dimension_numbers<[1], [0], [0], [1], [0, 0, 1, 1], [], []>} : vector<8x32xf32>, vector<32x32xf32>, vector<8x32xf32> -> vector<8x32xf32>
    %c28 = arith.constant 28 : index
    %c0_162 = arith.constant 0 : index
    %c0_163 = arith.constant 0 : index
    %207 = vector.load %arg1[%c28, %c0_162, %c0_163] : memref<35x32x32xf32, #tpu.memory_space<vmem>>, vector<1x32x32xf32>
    %208 = vector.shape_cast %207 : vector<1x32x32xf32> to vector<32x32xf32>
    %cst_164 = arith.constant dense<0.000000e+00> : vector<8x32xf32>
    %209 = tpu.matmul %55, %208, %cst_164 {dimension_numbers = #tpu.dot_dimension_numbers<[1], [0], [0], [1], [0, 0, 1, 1], [], []>} : vector<8x32xf32>, vector<32x32xf32>, vector<8x32xf32> -> vector<8x32xf32>
    %210 = arith.addf %206, %209 : vector<8x32xf32>
    %c27_165 = arith.constant 27 : index
    %c0_166 = arith.constant 0 : index
    %c0_167 = arith.constant 0 : index
    %211 = vector.load %arg2[%c27_165, %c0_166, %c0_167] : memref<35x1x32xf32, #tpu.memory_space<vmem>>, vector<1x1x32xf32>
    %212 = vector.shape_cast %211 : vector<1x1x32xf32> to vector<1x32xf32>
    %213 = vector.broadcast %212 : vector<1x32xf32> to vector<8x32xf32>
    %214 = arith.addf %210, %213 : vector<8x32xf32>
    %cst_168 = arith.constant 0.000000e+00 : f32
    %215 = vector.broadcast %cst_168 : f32 to vector<8x32xf32>
    %216 = arith.maximumf %214, %215 : vector<8x32xf32>
    %c29 = arith.constant 29 : index
    %c0_169 = arith.constant 0 : index
    %c0_170 = arith.constant 0 : index
    %217 = vector.load %arg1[%c29, %c0_169, %c0_170] : memref<35x32x32xf32, #tpu.memory_space<vmem>>, vector<1x32x32xf32>
    %218 = vector.shape_cast %217 : vector<1x32x32xf32> to vector<32x32xf32>
    %cst_171 = arith.constant dense<0.000000e+00> : vector<8x32xf32>
    %219 = tpu.matmul %216, %218, %cst_171 {dimension_numbers = #tpu.dot_dimension_numbers<[1], [0], [0], [1], [0, 0, 1, 1], [], []>} : vector<8x32xf32>, vector<32x32xf32>, vector<8x32xf32> -> vector<8x32xf32>
    %c29_172 = arith.constant 29 : index
    %c0_173 = arith.constant 0 : index
    %c0_174 = arith.constant 0 : index
    %220 = vector.load %arg2[%c29_172, %c0_173, %c0_174] : memref<35x1x32xf32, #tpu.memory_space<vmem>>, vector<1x1x32xf32>
    %221 = vector.shape_cast %220 : vector<1x1x32xf32> to vector<1x32xf32>
    %222 = vector.broadcast %221 : vector<1x32xf32> to vector<8x32xf32>
    %223 = arith.addf %219, %222 : vector<8x32xf32>
    %cst_175 = arith.constant 0.000000e+00 : f32
    %224 = vector.broadcast %cst_175 : f32 to vector<8x32xf32>
    %225 = arith.maximumf %223, %224 : vector<8x32xf32>
    %c30 = arith.constant 30 : index
    %c0_176 = arith.constant 0 : index
    %c0_177 = arith.constant 0 : index
    %226 = vector.load %arg1[%c30, %c0_176, %c0_177] : memref<35x32x32xf32, #tpu.memory_space<vmem>>, vector<1x32x32xf32>
    %227 = vector.shape_cast %226 : vector<1x32x32xf32> to vector<32x32xf32>
    %cst_178 = arith.constant dense<0.000000e+00> : vector<8x32xf32>
    %228 = tpu.matmul %225, %227, %cst_178 {dimension_numbers = #tpu.dot_dimension_numbers<[1], [0], [0], [1], [0, 0, 1, 1], [], []>} : vector<8x32xf32>, vector<32x32xf32>, vector<8x32xf32> -> vector<8x32xf32>
    %c30_179 = arith.constant 30 : index
    %c0_180 = arith.constant 0 : index
    %c0_181 = arith.constant 0 : index
    %229 = vector.load %arg2[%c30_179, %c0_180, %c0_181] : memref<35x1x32xf32, #tpu.memory_space<vmem>>, vector<1x1x32xf32>
    %230 = vector.shape_cast %229 : vector<1x1x32xf32> to vector<1x32xf32>
    %231 = vector.broadcast %230 : vector<1x32xf32> to vector<8x32xf32>
    %232 = arith.addf %228, %231 : vector<8x32xf32>
    %c31 = arith.constant 31 : index
    %c0_182 = arith.constant 0 : index
    %c0_183 = arith.constant 0 : index
    %233 = vector.load %arg1[%c31, %c0_182, %c0_183] : memref<35x32x32xf32, #tpu.memory_space<vmem>>, vector<1x32x32xf32>
    %234 = vector.shape_cast %233 : vector<1x32x32xf32> to vector<32x32xf32>
    %cst_184 = arith.constant dense<0.000000e+00> : vector<8x32xf32>
    %235 = tpu.matmul %203, %234, %cst_184 {dimension_numbers = #tpu.dot_dimension_numbers<[1], [0], [0], [1], [0, 0, 1, 1], [], []>} : vector<8x32xf32>, vector<32x32xf32>, vector<8x32xf32> -> vector<8x32xf32>
    %c32 = arith.constant 32 : index
    %c0_185 = arith.constant 0 : index
    %c0_186 = arith.constant 0 : index
    %236 = vector.load %arg1[%c32, %c0_185, %c0_186] : memref<35x32x32xf32, #tpu.memory_space<vmem>>, vector<1x32x32xf32>
    %237 = vector.shape_cast %236 : vector<1x32x32xf32> to vector<32x32xf32>
    %cst_187 = arith.constant dense<0.000000e+00> : vector<8x32xf32>
    %238 = tpu.matmul %55, %237, %cst_187 {dimension_numbers = #tpu.dot_dimension_numbers<[1], [0], [0], [1], [0, 0, 1, 1], [], []>} : vector<8x32xf32>, vector<32x32xf32>, vector<8x32xf32> -> vector<8x32xf32>
    %239 = arith.addf %235, %238 : vector<8x32xf32>
    %c31_188 = arith.constant 31 : index
    %c0_189 = arith.constant 0 : index
    %c0_190 = arith.constant 0 : index
    %240 = vector.load %arg2[%c31_188, %c0_189, %c0_190] : memref<35x1x32xf32, #tpu.memory_space<vmem>>, vector<1x1x32xf32>
    %241 = vector.shape_cast %240 : vector<1x1x32xf32> to vector<1x32xf32>
    %242 = vector.broadcast %241 : vector<1x32xf32> to vector<8x32xf32>
    %243 = arith.addf %239, %242 : vector<8x32xf32>
    %cst_191 = arith.constant 0.000000e+00 : f32
    %244 = vector.broadcast %cst_191 : f32 to vector<8x32xf32>
    %245 = arith.maximumf %243, %244 : vector<8x32xf32>
    %c33 = arith.constant 33 : index
    %c0_192 = arith.constant 0 : index
    %c0_193 = arith.constant 0 : index
    %246 = vector.load %arg1[%c33, %c0_192, %c0_193] : memref<35x32x32xf32, #tpu.memory_space<vmem>>, vector<1x32x32xf32>
    %247 = vector.shape_cast %246 : vector<1x32x32xf32> to vector<32x32xf32>
    %cst_194 = arith.constant dense<0.000000e+00> : vector<8x32xf32>
    %248 = tpu.matmul %245, %247, %cst_194 {dimension_numbers = #tpu.dot_dimension_numbers<[1], [0], [0], [1], [0, 0, 1, 1], [], []>} : vector<8x32xf32>, vector<32x32xf32>, vector<8x32xf32> -> vector<8x32xf32>
    %c33_195 = arith.constant 33 : index
    %c0_196 = arith.constant 0 : index
    %c0_197 = arith.constant 0 : index
    %249 = vector.load %arg2[%c33_195, %c0_196, %c0_197] : memref<35x1x32xf32, #tpu.memory_space<vmem>>, vector<1x1x32xf32>
    %250 = vector.shape_cast %249 : vector<1x1x32xf32> to vector<1x32xf32>
    %251 = vector.broadcast %250 : vector<1x32xf32> to vector<8x32xf32>
    %252 = arith.addf %248, %251 : vector<8x32xf32>
    %cst_198 = arith.constant 0.000000e+00 : f32
    %253 = vector.broadcast %cst_198 : f32 to vector<8x32xf32>
    %254 = arith.maximumf %252, %253 : vector<8x32xf32>
    %c34 = arith.constant 34 : index
    %c0_199 = arith.constant 0 : index
    %c0_200 = arith.constant 0 : index
    %255 = vector.load %arg1[%c34, %c0_199, %c0_200] : memref<35x32x32xf32, #tpu.memory_space<vmem>>, vector<1x32x32xf32>
    %256 = vector.shape_cast %255 : vector<1x32x32xf32> to vector<32x32xf32>
    %cst_201 = arith.constant dense<0.000000e+00> : vector<8x32xf32>
    %257 = tpu.matmul %254, %256, %cst_201 {dimension_numbers = #tpu.dot_dimension_numbers<[1], [0], [0], [1], [0, 0, 1, 1], [], []>} : vector<8x32xf32>, vector<32x32xf32>, vector<8x32xf32> -> vector<8x32xf32>
    %c34_202 = arith.constant 34 : index
    %c0_203 = arith.constant 0 : index
    %c0_204 = arith.constant 0 : index
    %258 = vector.load %arg2[%c34_202, %c0_203, %c0_204] : memref<35x1x32xf32, #tpu.memory_space<vmem>>, vector<1x1x32xf32>
    %259 = vector.shape_cast %258 : vector<1x1x32xf32> to vector<1x32xf32>
    %260 = vector.broadcast %259 : vector<1x32xf32> to vector<8x32xf32>
    %261 = arith.addf %257, %260 : vector<8x32xf32>
    %c16 = arith.constant 16 : index
    %c0_205 = arith.constant 0 : index
    %c0_206 = arith.constant 0 : index
    %262 = vector.load %arg1[%c16, %c0_205, %c0_206] : memref<35x32x32xf32, #tpu.memory_space<vmem>>, vector<1x32x32xf32>
    %263 = vector.shape_cast %262 : vector<1x32x32xf32> to vector<32x32xf32>
    %cst_207 = arith.constant dense<0.000000e+00> : vector<8x32xf32>
    %264 = tpu.matmul %1, %263, %cst_207 {dimension_numbers = #tpu.dot_dimension_numbers<[1], [0], [0], [1], [0, 0, 1, 1], [], []>} : vector<8x32xf32>, vector<32x32xf32>, vector<8x32xf32> -> vector<8x32xf32>
    %c16_208 = arith.constant 16 : index
    %c0_209 = arith.constant 0 : index
    %c0_210 = arith.constant 0 : index
    %265 = vector.load %arg2[%c16_208, %c0_209, %c0_210] : memref<35x1x32xf32, #tpu.memory_space<vmem>>, vector<1x1x32xf32>
    %266 = vector.shape_cast %265 : vector<1x1x32xf32> to vector<1x32xf32>
    %267 = vector.broadcast %266 : vector<1x32xf32> to vector<8x32xf32>
    %268 = arith.addf %264, %267 : vector<8x32xf32>
    %cst_211 = arith.constant 0.000000e+00 : f32
    %269 = vector.broadcast %cst_211 : f32 to vector<8x32xf32>
    %270 = arith.maximumf %268, %269 : vector<8x32xf32>
    %c17 = arith.constant 17 : index
    %c0_212 = arith.constant 0 : index
    %c0_213 = arith.constant 0 : index
    %271 = vector.load %arg1[%c17, %c0_212, %c0_213] : memref<35x32x32xf32, #tpu.memory_space<vmem>>, vector<1x32x32xf32>
    %272 = vector.shape_cast %271 : vector<1x32x32xf32> to vector<32x32xf32>
    %cst_214 = arith.constant dense<0.000000e+00> : vector<8x32xf32>
    %273 = tpu.matmul %270, %272, %cst_214 {dimension_numbers = #tpu.dot_dimension_numbers<[1], [0], [0], [1], [0, 0, 1, 1], [], []>} : vector<8x32xf32>, vector<32x32xf32>, vector<8x32xf32> -> vector<8x32xf32>
    %c17_215 = arith.constant 17 : index
    %c0_216 = arith.constant 0 : index
    %c0_217 = arith.constant 0 : index
    %274 = vector.load %arg2[%c17_215, %c0_216, %c0_217] : memref<35x1x32xf32, #tpu.memory_space<vmem>>, vector<1x1x32xf32>
    %275 = vector.shape_cast %274 : vector<1x1x32xf32> to vector<1x32xf32>
    %276 = vector.broadcast %275 : vector<1x32xf32> to vector<8x32xf32>
    %277 = arith.addf %273, %276 : vector<8x32xf32>
    %cst_218 = arith.constant 0.000000e+00 : f32
    %278 = vector.broadcast %cst_218 : f32 to vector<8x32xf32>
    %279 = arith.maximumf %277, %278 : vector<8x32xf32>
    %c18 = arith.constant 18 : index
    %c0_219 = arith.constant 0 : index
    %c0_220 = arith.constant 0 : index
    %280 = vector.load %arg1[%c18, %c0_219, %c0_220] : memref<35x32x32xf32, #tpu.memory_space<vmem>>, vector<1x32x32xf32>
    %281 = vector.shape_cast %280 : vector<1x32x32xf32> to vector<32x32xf32>
    %cst_221 = arith.constant dense<0.000000e+00> : vector<8x32xf32>
    %282 = tpu.matmul %279, %281, %cst_221 {dimension_numbers = #tpu.dot_dimension_numbers<[1], [0], [0], [1], [0, 0, 1, 1], [], []>} : vector<8x32xf32>, vector<32x32xf32>, vector<8x32xf32> -> vector<8x32xf32>
    %c18_222 = arith.constant 18 : index
    %c0_223 = arith.constant 0 : index
    %c0_224 = arith.constant 0 : index
    %283 = vector.load %arg2[%c18_222, %c0_223, %c0_224] : memref<35x1x32xf32, #tpu.memory_space<vmem>>, vector<1x1x32xf32>
    %284 = vector.shape_cast %283 : vector<1x1x32xf32> to vector<1x32xf32>
    %285 = vector.broadcast %284 : vector<1x32xf32> to vector<8x32xf32>
    %286 = arith.addf %282, %285 : vector<8x32xf32>
    %c19 = arith.constant 19 : index
    %c0_225 = arith.constant 0 : index
    %c0_226 = arith.constant 0 : index
    %287 = vector.load %arg1[%c19, %c0_225, %c0_226] : memref<35x32x32xf32, #tpu.memory_space<vmem>>, vector<1x32x32xf32>
    %288 = vector.shape_cast %287 : vector<1x32x32xf32> to vector<32x32xf32>
    %cst_227 = arith.constant dense<0.000000e+00> : vector<8x32xf32>
    %289 = tpu.matmul %286, %288, %cst_227 {dimension_numbers = #tpu.dot_dimension_numbers<[1], [0], [0], [1], [0, 0, 1, 1], [], []>} : vector<8x32xf32>, vector<32x32xf32>, vector<8x32xf32> -> vector<8x32xf32>
    %c19_228 = arith.constant 19 : index
    %c0_229 = arith.constant 0 : index
    %c0_230 = arith.constant 0 : index
    %290 = vector.load %arg2[%c19_228, %c0_229, %c0_230] : memref<35x1x32xf32, #tpu.memory_space<vmem>>, vector<1x1x32xf32>
    %291 = vector.shape_cast %290 : vector<1x1x32xf32> to vector<1x32xf32>
    %292 = vector.broadcast %291 : vector<1x32xf32> to vector<8x32xf32>
    %293 = arith.addf %289, %292 : vector<8x32xf32>
    %c20 = arith.constant 20 : index
    %c0_231 = arith.constant 0 : index
    %c0_232 = arith.constant 0 : index
    %294 = vector.load %arg1[%c20, %c0_231, %c0_232] : memref<35x32x32xf32, #tpu.memory_space<vmem>>, vector<1x32x32xf32>
    %295 = vector.shape_cast %294 : vector<1x32x32xf32> to vector<32x32xf32>
    %cst_233 = arith.constant dense<0.000000e+00> : vector<8x32xf32>
    %296 = tpu.matmul %286, %295, %cst_233 {dimension_numbers = #tpu.dot_dimension_numbers<[1], [0], [0], [1], [0, 0, 1, 1], [], []>} : vector<8x32xf32>, vector<32x32xf32>, vector<8x32xf32> -> vector<8x32xf32>
    %c20_234 = arith.constant 20 : index
    %c0_235 = arith.constant 0 : index
    %c0_236 = arith.constant 0 : index
    %297 = vector.load %arg2[%c20_234, %c0_235, %c0_236] : memref<35x1x32xf32, #tpu.memory_space<vmem>>, vector<1x1x32xf32>
    %298 = vector.shape_cast %297 : vector<1x1x32xf32> to vector<1x32xf32>
    %299 = vector.broadcast %298 : vector<1x32xf32> to vector<8x32xf32>
    %300 = arith.addf %296, %299 : vector<8x32xf32>
    %cst_237 = arith.constant 5.000000e-01 : f32
    %301 = vector.broadcast %cst_237 : f32 to vector<8x32xf32>
    %302 = arith.mulf %301, %300 : vector<8x32xf32>
    %303 = math.exp %302 : vector<8x32xf32>
    %cst_238 = arith.constant 1.000000e-07 : f32
    %304 = vector.broadcast %cst_238 : f32 to vector<8x32xf32>
    %305 = arith.addf %303, %304 : vector<8x32xf32>
    %c5_239 = arith.constant 5 : index
    %c0_240 = arith.constant 0 : index
    %c0_241 = arith.constant 0 : index
    %306 = vector.load %arg0[%c5_239, %c0_240, %c0_241] : memref<6x8x32xf32, #tpu.memory_space<vmem>>, vector<1x8x32xf32>
    %307 = vector.shape_cast %306 : vector<1x8x32xf32> to vector<8x32xf32>
    %308 = arith.mulf %307, %305 : vector<8x32xf32>
    %309 = arith.addf %293, %308 : vector<8x32xf32>
    %c0_242 = arith.constant 0 : index
    %c0_243 = arith.constant 0 : index
    %c0_244 = arith.constant 0 : index
    %310 = vector.load %arg3[%c0_242, %c0_243, %c0_244] : memref<14x8x32xf32, #tpu.memory_space<vmem>>, vector<1x8x32xf32>
    %311 = vector.shape_cast %310 : vector<1x8x32xf32> to vector<8x32xf32>
    %312 = vector.shape_cast %39 : vector<8x32xf32> to vector<1x8x32xf32>
    tpu.vector_store %arg3[%c0_242, %c0_243, %c0_244], %312 {strides = array<i32>} : memref<14x8x32xf32, #tpu.memory_space<vmem>>, vector<1x8x32xf32>,
    %c1_245 = arith.constant 1 : index
    %c0_246 = arith.constant 0 : index
    %c0_247 = arith.constant 0 : index
    %313 = vector.load %arg3[%c1_245, %c0_246, %c0_247] : memref<14x8x32xf32, #tpu.memory_space<vmem>>, vector<1x8x32xf32>
    %314 = vector.shape_cast %313 : vector<1x8x32xf32> to vector<8x32xf32>
    %315 = vector.shape_cast %46 : vector<8x32xf32> to vector<1x8x32xf32>
    tpu.vector_store %arg3[%c1_245, %c0_246, %c0_247], %315 {strides = array<i32>} : memref<14x8x32xf32, #tpu.memory_space<vmem>>, vector<1x8x32xf32>,
    %c2_248 = arith.constant 2 : index
    %c0_249 = arith.constant 0 : index
    %c0_250 = arith.constant 0 : index
    %316 = vector.load %arg3[%c2_248, %c0_249, %c0_250] : memref<14x8x32xf32, #tpu.memory_space<vmem>>, vector<1x8x32xf32>
    %317 = vector.shape_cast %316 : vector<1x8x32xf32> to vector<8x32xf32>
    %318 = vector.shape_cast %55 : vector<8x32xf32> to vector<1x8x32xf32>
    tpu.vector_store %arg3[%c2_248, %c0_249, %c0_250], %318 {strides = array<i32>} : memref<14x8x32xf32, #tpu.memory_space<vmem>>, vector<1x8x32xf32>,
    %c3_251 = arith.constant 3 : index
    %c0_252 = arith.constant 0 : index
    %c0_253 = arith.constant 0 : index
    %319 = vector.load %arg3[%c3_251, %c0_252, %c0_253] : memref<14x8x32xf32, #tpu.memory_space<vmem>>, vector<1x8x32xf32>
    %320 = vector.shape_cast %319 : vector<1x8x32xf32> to vector<8x32xf32>
    %321 = vector.shape_cast %184 : vector<8x32xf32> to vector<1x8x32xf32>
    tpu.vector_store %arg3[%c3_251, %c0_252, %c0_253], %321 {strides = array<i32>} : memref<14x8x32xf32, #tpu.memory_space<vmem>>, vector<1x8x32xf32>,
    %c4_254 = arith.constant 4 : index
    %c0_255 = arith.constant 0 : index
    %c0_256 = arith.constant 0 : index
    %322 = vector.load %arg3[%c4_254, %c0_255, %c0_256] : memref<14x8x32xf32, #tpu.memory_space<vmem>>, vector<1x8x32xf32>
    %323 = vector.shape_cast %322 : vector<1x8x32xf32> to vector<8x32xf32>
    %324 = vector.shape_cast %144 : vector<8x32xf32> to vector<1x8x32xf32>
    tpu.vector_store %arg3[%c4_254, %c0_255, %c0_256], %324 {strides = array<i32>} : memref<14x8x32xf32, #tpu.memory_space<vmem>>, vector<1x8x32xf32>,
    %c5_257 = arith.constant 5 : index
    %c0_258 = arith.constant 0 : index
    %c0_259 = arith.constant 0 : index
    %325 = vector.load %arg3[%c5_257, %c0_258, %c0_259] : memref<14x8x32xf32, #tpu.memory_space<vmem>>, vector<1x8x32xf32>
    %326 = vector.shape_cast %325 : vector<1x8x32xf32> to vector<8x32xf32>
    %327 = vector.shape_cast %194 : vector<8x32xf32> to vector<1x8x32xf32>
    tpu.vector_store %arg3[%c5_257, %c0_258, %c0_259], %327 {strides = array<i32>} : memref<14x8x32xf32, #tpu.memory_space<vmem>>, vector<1x8x32xf32>,
    %c6_260 = arith.constant 6 : index
    %c0_261 = arith.constant 0 : index
    %c0_262 = arith.constant 0 : index
    %328 = vector.load %arg3[%c6_260, %c0_261, %c0_262] : memref<14x8x32xf32, #tpu.memory_space<vmem>>, vector<1x8x32xf32>
    %329 = vector.shape_cast %328 : vector<1x8x32xf32> to vector<8x32xf32>
    %330 = vector.shape_cast %185 : vector<8x32xf32> to vector<1x8x32xf32>
    tpu.vector_store %arg3[%c6_260, %c0_261, %c0_262], %330 {strides = array<i32>} : memref<14x8x32xf32, #tpu.memory_space<vmem>>, vector<1x8x32xf32>,
    %c7_263 = arith.constant 7 : index
    %c0_264 = arith.constant 0 : index
    %c0_265 = arith.constant 0 : index
    %331 = vector.load %arg3[%c7_263, %c0_264, %c0_265] : memref<14x8x32xf32, #tpu.memory_space<vmem>>, vector<1x8x32xf32>
    %332 = vector.shape_cast %331 : vector<1x8x32xf32> to vector<8x32xf32>
    %333 = vector.shape_cast %183 : vector<8x32xf32> to vector<1x8x32xf32>
    tpu.vector_store %arg3[%c7_263, %c0_264, %c0_265], %333 {strides = array<i32>} : memref<14x8x32xf32, #tpu.memory_space<vmem>>, vector<1x8x32xf32>,
    %c8_266 = arith.constant 8 : index
    %c0_267 = arith.constant 0 : index
    %c0_268 = arith.constant 0 : index
    %334 = vector.load %arg3[%c8_266, %c0_267, %c0_268] : memref<14x8x32xf32, #tpu.memory_space<vmem>>, vector<1x8x32xf32>
    %335 = vector.shape_cast %334 : vector<1x8x32xf32> to vector<8x32xf32>
    %336 = vector.shape_cast %203 : vector<8x32xf32> to vector<1x8x32xf32>
    tpu.vector_store %arg3[%c8_266, %c0_267, %c0_268], %336 {strides = array<i32>} : memref<14x8x32xf32, #tpu.memory_space<vmem>>, vector<1x8x32xf32>,
    %c9_269 = arith.constant 9 : index
    %c0_270 = arith.constant 0 : index
    %c0_271 = arith.constant 0 : index
    %337 = vector.load %arg3[%c9_269, %c0_270, %c0_271] : memref<14x8x32xf32, #tpu.memory_space<vmem>>, vector<1x8x32xf32>
    %338 = vector.shape_cast %337 : vector<1x8x32xf32> to vector<8x32xf32>
    %339 = vector.shape_cast %293 : vector<8x32xf32> to vector<1x8x32xf32>
    tpu.vector_store %arg3[%c9_269, %c0_270, %c0_271], %339 {strides = array<i32>} : memref<14x8x32xf32, #tpu.memory_space<vmem>>, vector<1x8x32xf32>,
    %c10_272 = arith.constant 10 : index
    %c0_273 = arith.constant 0 : index
    %c0_274 = arith.constant 0 : index
    %340 = vector.load %arg3[%c10_272, %c0_273, %c0_274] : memref<14x8x32xf32, #tpu.memory_space<vmem>>, vector<1x8x32xf32>
    %341 = vector.shape_cast %340 : vector<1x8x32xf32> to vector<8x32xf32>
    %342 = vector.shape_cast %300 : vector<8x32xf32> to vector<1x8x32xf32>
    tpu.vector_store %arg3[%c10_272, %c0_273, %c0_274], %342 {strides = array<i32>} : memref<14x8x32xf32, #tpu.memory_space<vmem>>, vector<1x8x32xf32>,
    %c11_275 = arith.constant 11 : index
    %c0_276 = arith.constant 0 : index
    %c0_277 = arith.constant 0 : index
    %343 = vector.load %arg3[%c11_275, %c0_276, %c0_277] : memref<14x8x32xf32, #tpu.memory_space<vmem>>, vector<1x8x32xf32>
    %344 = vector.shape_cast %343 : vector<1x8x32xf32> to vector<8x32xf32>
    %345 = vector.shape_cast %309 : vector<8x32xf32> to vector<1x8x32xf32>
    tpu.vector_store %arg3[%c11_275, %c0_276, %c0_277], %345 {strides = array<i32>} : memref<14x8x32xf32, #tpu.memory_space<vmem>>, vector<1x8x32xf32>,
    %c12_278 = arith.constant 12 : index
    %c0_279 = arith.constant 0 : index
    %c0_280 = arith.constant 0 : index
    %346 = vector.load %arg3[%c12_278, %c0_279, %c0_280] : memref<14x8x32xf32, #tpu.memory_space<vmem>>, vector<1x8x32xf32>
    %347 = vector.shape_cast %346 : vector<1x8x32xf32> to vector<8x32xf32>
    %348 = vector.shape_cast %232 : vector<8x32xf32> to vector<1x8x32xf32>
    tpu.vector_store %arg3[%c12_278, %c0_279, %c0_280], %348 {strides = array<i32>} : memref<14x8x32xf32, #tpu.memory_space<vmem>>, vector<1x8x32xf32>,
    %c13_281 = arith.constant 13 : index
    %c0_282 = arith.constant 0 : index
    %c0_283 = arith.constant 0 : index
    %349 = vector.load %arg3[%c13_281, %c0_282, %c0_283] : memref<14x8x32xf32, #tpu.memory_space<vmem>>, vector<1x8x32xf32>
    %350 = vector.shape_cast %349 : vector<1x8x32xf32> to vector<8x32xf32>
    %351 = vector.shape_cast %261 : vector<8x32xf32> to vector<1x8x32xf32>
    tpu.vector_store %arg3[%c13_281, %c0_282, %c0_283], %351 {strides = array<i32>} : memref<14x8x32xf32, #tpu.memory_space<vmem>>, vector<1x8x32xf32>,
    return
  }
}

</mosaic_0001>

<llo_original>
// kernel: _lambda_.1
$region0: #{_lambda_.1}
  #allocation0 [shape = 'u32[]', space=smem, size = 0x4, offset = 0x4, fixed_abs, tag = 'smem constant byte address 0x4 - core index']
  #allocation1 [shape = 'u32[144,128]{1,0:T(1,128)}', space=vmem, size = 0x12000, scoped, tag = 'internal scratch']
  %s0 = inlined_call_operand.vmem [shape: f32[6,8,32], index: 0, kind: input, shape index: {}]
  %s1 = inlined_call_operand.hbm [shape: f32[35,32,32], index: 1, kind: input, shape index: {}]
  %s2 = inlined_call_operand.vmem [shape: f32[35,1,32], index: 2, kind: input, shape index: {}]
  %s3 = inlined_call_operand.vmem [shape: f32[14,8,32], index: 3, kind: output, shape index: {}]
  %s4 = sld [smem:[#allocation0]]
  $region26: #{_lambda_.1} parent=0
    _
  %s6 = ssub.s32 1, %s4
  %s7 = scalar_select 0, %s6, %s4
  $region1: #{_lambda_.1} parent=0
    #allocation2 [shape = 'u8[573440]{0}', space=vmem, size = 0x8c000, scoped, tag = 'input window, operand 1, single buffered']
    #allocation3 [shape = 's32[1]{0}', space=sflag, size = 0x4, scoped, tag = 'scoped memory for _lambda_.1']
    %8 = vsyncpa [#allocation3], 0
    // Predicated region
    $region2: #{_lambda_.1} parent=1 // pred_check
      _
    $region3: #{_lambda_.1} parent=1 // pred_check_branch
      %10 = sbr.rel (0) target = $region5
    $region4: #{_lambda_.1} parent=1 // pred_region
      _
    $region5: #{_lambda_.1} parent=1 // pred_fallthru
      _
    // Predicated region
    $region6: #{_lambda_.1} parent=1 // pred_check
      _
    $region7: #{_lambda_.1} parent=1 // pred_check_branch
      %12 = sbr.rel (0) target = $region9
    $region8: #{_lambda_.1} parent=1 // pred_region
      %s14 = ssub.s32 17920, 17920
      %15 = vsyncadd [#allocation3], %s14
      %s16 = sshll.u32 [#allocation2], 4
      %s17 = int_to_ptr.vmem [resolvable:$true] %s16
      %22 = dma.hbm_to_vmem [thread:$0]  %s1, 17920, %s17, [#allocation3], 128, 128, 8
    $region9: #{_lambda_.1} parent=1 // pred_fallthru
      _
    // Predicated region
    $region10: #{_lambda_.1} parent=1 // pred_check
      _
    $region11: #{_lambda_.1} parent=1 // pred_check_branch
      %24 = sbr.rel (0) target = $region13
    $region12: #{_lambda_.1} parent=1 // pred_region
      _
    $region13: #{_lambda_.1} parent=1 // pred_fallthru
      _
    // Predicated region
    $region14: #{_lambda_.1} parent=1 // pred_check
      _
    $region15: #{_lambda_.1} parent=1 // pred_check_branch
      %26 = sbr.rel (0) target = $region17
    $region16: #{_lambda_.1} parent=1 // pred_region
      %27 = dma.done [#allocation3], 17920
    $region17: #{_lambda_.1} parent=1 // pred_fallthru
      _
    %v28 = vld [vmem:[%s0] sm:$0xff]
    %s29 = scalar_lea.vmem %s0, 8
    %v30 = vld [vmem:[%s29] sm:$0xff]
    %v31 = vld [vmem:[#allocation2] sm:$0xff]
    %v32 = vld [vmem:[#allocation2 + $0x8] sm:$0xff]
    %v33 = vld [vmem:[#allocation2 + $0x10] sm:$0xff]
    %v34 = vld [vmem:[#allocation2 + $0x18] sm:$0xff]
    %s35 = scalar_lea.vmem [#allocation2], 32
    %v36 = vld [vmem:[%s35] sm:$0xff]
    %v37 = vld [vmem:[%s35 + $0x8] sm:$0xff]
    %v38 = vld [vmem:[%s35 + $0x10] sm:$0xff]
    %v39 = vld [vmem:[%s35 + $0x18] sm:$0xff]
    %vm40 = vcmask 261120
    %v42 = vsel %vm40, %v30, 0
    %44 = vmatprep.subr.mxu0 0.0
    %45 = vmatpush1.msra.mxu0 0.0
    %46 = vmatprep.subr.mxu0 0.0
    %47 = vmatpush1.msra.mxu0 0.0
    %48 = vmatprep.subr.mxu0 0.0
    %49 = vmatpush1.msra.mxu0 0.0
    %50 = vmatprep.subr.mxu0 0.0
    %51 = vmatpush1.msra.mxu0 0.0
    %52 = vmatprep.subr.mxu0 0.0
    %53 = vmatpush1.msra.mxu0 0.0
    %54 = vmatprep.subr.mxu0 0.0
    %55 = vmatpush1.msra.mxu0 0.0
    %56 = vmatprep.subr.mxu0 0.0
    %57 = vmatpush1.msra.mxu0 0.0
    %58 = vmatprep.subr.mxu0 0.0
    %59 = vmatpush1.msra.mxu0 0.0
    %60 = vmatprep.subr.mxu0 0.0
    %61 = vmatpush1.msra.mxu0 0.0
    %62 = vmatprep.subr.mxu0 0.0
    %63 = vmatpush1.msra.mxu0 0.0
    %64 = vmatprep.subr.mxu0 0.0
    %65 = vmatpush1.msra.mxu0 0.0
    %66 = vmatprep.subr.mxu0 0.0
    %67 = vmatpush1.msra.mxu0 0.0
    %68 = vmatprep.subr.mxu0 0.0
    %69 = vmatpush1.msra.mxu0 %v39
    %70 = vmatprep.subr.mxu0 0.0
    %71 = vmatpush1.msra.mxu0 %v38
    %72 = vmatprep.subr.mxu0 0.0
    %73 = vmatpush1.msra.mxu0 %v37
    %74 = vmatprep.subr.mxu0 0.0
    %75 = vmatpush1.msra.mxu0 %v36
    %76 = vmatprep.subr.mxu0 0.0
    %77 = vmatpush2.msra.mxu0 0.0
    %78 = vmatprep.subr.mxu0 0.0
    %79 = vmatpush2.msra.mxu0 0.0
    %80 = vmatprep.subr.mxu0 0.0
    %81 = vmatpush2.msra.mxu0 0.0
    %82 = vmatprep.subr.mxu0 0.0
    %83 = vmatpush2.msra.mxu0 0.0
    %84 = vmatprep.subr.mxu0 0.0
    %85 = vmatpush2.msra.mxu0 0.0
    %86 = vmatprep.subr.mxu0 0.0
    %87 = vmatpush2.msra.mxu0 0.0
    %88 = vmatprep.subr.mxu0 0.0
    %89 = vmatpush2.msra.mxu0 0.0
    %90 = vmatprep.subr.mxu0 0.0
    %91 = vmatpush2.msra.mxu0 0.0
    %92 = vmatprep.subr.mxu0 0.0
    %93 = vmatpush2.msra.mxu0 0.0
    %94 = vmatprep.subr.mxu0 0.0
    %95 = vmatpush2.msra.mxu0 0.0
    %96 = vmatprep.subr.mxu0 0.0
    %97 = vmatpush2.msra.mxu0 0.0
    %98 = vmatprep.subr.mxu0 0.0
    %99 = vmatpush2.msra.mxu0 0.0
    %100 = vmatprep.subr.mxu0 0.0
    %101 = vmatpush2.msra.mxu0 0.0
    %102 = vmatprep.subr.mxu0 0.0
    %103 = vmatpush2.msra.mxu0 0.0
    %104 = vmatprep.subr.mxu0 0.0
    %105 = vmatpush2.msra.mxu0 0.0
    %106 = vmatprep.subr.mxu0 0.0
    %107 = vmatpush2.msra.mxu0 0.0
    %108 = vmatprep.mubr.f32.mxu0 0.0
    %109 = vmatmul.mubr.f32.gmra.mxu0 %v42
    %v110 = vpop.f32.mrf.mxu0
    %v111 = vadd.f32 0.0, %v110
    %v112 = vpop.f32.mrf.mxu0
    %113 = vdwg.mxu0
    %v115 = vsel %vm40, %v28, 0
    %117 = vmatprep.subr.mxu0 0.0
    %118 = vmatpush1.msra.mxu0 0.0
    %119 = vmatprep.subr.mxu0 0.0
    %120 = vmatpush1.msra.mxu0 0.0
    %121 = vmatprep.subr.mxu0 0.0
    %122 = vmatpush1.msra.mxu0 0.0
    %123 = vmatprep.subr.mxu0 0.0
    %124 = vmatpush1.msra.mxu0 0.0
    %125 = vmatprep.subr.mxu0 0.0
    %126 = vmatpush1.msra.mxu0 0.0
    %127 = vmatprep.subr.mxu0 0.0
    %128 = vmatpush1.msra.mxu0 0.0
    %129 = vmatprep.subr.mxu0 0.0
    %130 = vmatpush1.msra.mxu0 0.0
    %131 = vmatprep.subr.mxu0 0.0
    %132 = vmatpush1.msra.mxu0 0.0
    %133 = vmatprep.subr.mxu0 0.0
    %134 = vmatpush1.msra.mxu0 0.0
    %135 = vmatprep.subr.mxu0 0.0
    %136 = vmatpush1.msra.mxu0 0.0
    %137 = vmatprep.subr.mxu0 0.0
    %138 = vmatpush1.msra.mxu0 0.0
    %139 = vmatprep.subr.mxu0 0.0
    %140 = vmatpush1.msra.mxu0 0.0
    %141 = vmatprep.subr.mxu0 0.0
    %142 = vmatpush1.msra.mxu0 %v34
    %143 = vmatprep.subr.mxu0 0.0
    %144 = vmatpush1.msra.mxu0 %v33
    %145 = vmatprep.subr.mxu0 0.0
    %146 = vmatpush1.msra.mxu0 %v32
    %147 = vmatprep.subr.mxu0 0.0
    %148 = vmatpush1.msra.mxu0 %v31
    %149 = vmatprep.subr.mxu0 0.0
    %150 = vmatpush2.msra.mxu0 0.0
    %151 = vmatprep.subr.mxu0 0.0
    %152 = vmatpush2.msra.mxu0 0.0
    %153 = vmatprep.subr.mxu0 0.0
    %154 = vmatpush2.msra.mxu0 0.0
    %155 = vmatprep.subr.mxu0 0.0
    %156 = vmatpush2.msra.mxu0 0.0
    %157 = vmatprep.subr.mxu0 0.0
    %158 = vmatpush2.msra.mxu0 0.0
    %159 = vmatprep.subr.mxu0 0.0
    %160 = vmatpush2.msra.mxu0 0.0
    %161 = vmatprep.subr.mxu0 0.0
    %162 = vmatpush2.msra.mxu0 0.0
    %163 = vmatprep.subr.mxu0 0.0
    %164 = vmatpush2.msra.mxu0 0.0
    %165 = vmatprep.subr.mxu0 0.0
    %166 = vmatpush2.msra.mxu0 0.0
    %167 = vmatprep.subr.mxu0 0.0
    %168 = vmatpush2.msra.mxu0 0.0
    %169 = vmatprep.subr.mxu0 0.0
    %170 = vmatpush2.msra.mxu0 0.0
    %171 = vmatprep.subr.mxu0 0.0
    %172 = vmatpush2.msra.mxu0 0.0
    %173 = vmatprep.subr.mxu0 0.0
    %174 = vmatpush2.msra.mxu0 0.0
    %175 = vmatprep.subr.mxu0 0.0
    %176 = vmatpush2.msra.mxu0 0.0
    %177 = vmatprep.subr.mxu0 0.0
    %178 = vmatpush2.msra.mxu0 0.0
    %179 = vmatprep.subr.mxu0 0.0
    %180 = vmatpush2.msra.mxu0 0.0
    %181 = vmatprep.mubr.f32.mxu0 0.0
    %182 = vmatmul.mubr.f32.gmra.mxu0 %v115
    %v183 = vpop.f32.mrf.mxu0
    %v184 = vadd.f32 %v111, %v183
    %v185 = vpop.f32.mrf.mxu0
    %186 = vdwg.mxu0
    %v187 = vld [vmem:[%s2] sm:$0x1]
    %v189 = vlaneseq
    %v190 = vshrl.u32 %v189, 7
    %v191 = vsub.s32 0, %v190
    %v192 = vrot.slane %v187, %v191
    %v194 = vadd.f32 %v184, %v192
    %v195 = vmax.f32 %v194, 0.0
    %s196 = scalar_lea.vmem [#allocation2], 64
    %v197 = vld [vmem:[%s196] sm:$0xff]
    %v198 = vld [vmem:[%s196 + $0x8] sm:$0xff]
    %v199 = vld [vmem:[%s196 + $0x10] sm:$0xff]
    %v200 = vld [vmem:[%s196 + $0x18] sm:$0xff]
    %s201 = scalar_lea.vmem %s2, 2
    %v202 = vld [vmem:[%s201] sm:$0x1]
    %v204 = vlaneseq
    %v205 = vshrl.u32 %v204, 7
    %v206 = vsub.s32 0, %v205
    %v207 = vrot.slane %v202, %v206
    %v210 = vsel %vm40, %v195, 0
    %212 = vmatprep.subr.mxu0 0.0
    %213 = vmatpush1.msra.mxu0 0.0
    %214 = vmatprep.subr.mxu0 0.0
    %215 = vmatpush1.msra.mxu0 0.0
    %216 = vmatprep.subr.mxu0 0.0
    %217 = vmatpush1.msra.mxu0 0.0
    %218 = vmatprep.subr.mxu0 0.0
    %219 = vmatpush1.msra.mxu0 0.0
    %220 = vmatprep.subr.mxu0 0.0
    %221 = vmatpush1.msra.mxu0 0.0
    %222 = vmatprep.subr.mxu0 0.0
    %223 = vmatpush1.msra.mxu0 0.0
    %224 = vmatprep.subr.mxu0 0.0
    %225 = vmatpush1.msra.mxu0 0.0
    %226 = vmatprep.subr.mxu0 0.0
    %227 = vmatpush1.msra.mxu0 0.0
    %228 = vmatprep.subr.mxu0 0.0
    %229 = vmatpush1.msra.mxu0 0.0
    %230 = vmatprep.subr.mxu0 0.0
    %231 = vmatpush1.msra.mxu0 0.0
    %232 = vmatprep.subr.mxu0 0.0
    %233 = vmatpush1.msra.mxu0 0.0
    %234 = vmatprep.subr.mxu0 0.0
    %235 = vmatpush1.msra.mxu0 0.0
    %236 = vmatprep.subr.mxu0 0.0
    %237 = vmatpush1.msra.mxu0 %v200
    %238 = vmatprep.subr.mxu0 0.0
    %239 = vmatpush1.msra.mxu0 %v199
    %240 = vmatprep.subr.mxu0 0.0
    %241 = vmatpush1.msra.mxu0 %v198
    %242 = vmatprep.subr.mxu0 0.0
    %243 = vmatpush1.msra.mxu0 %v197
    %244 = vmatprep.subr.mxu0 0.0
    %245 = vmatpush2.msra.mxu0 0.0
    %246 = vmatprep.subr.mxu0 0.0
    %247 = vmatpush2.msra.mxu0 0.0
    %248 = vmatprep.subr.mxu0 0.0
    %249 = vmatpush2.msra.mxu0 0.0
    %250 = vmatprep.subr.mxu0 0.0
    %251 = vmatpush2.msra.mxu0 0.0
    %252 = vmatprep.subr.mxu0 0.0
    %253 = vmatpush2.msra.mxu0 0.0
    %254 = vmatprep.subr.mxu0 0.0
    %255 = vmatpush2.msra.mxu0 0.0
    %256 = vmatprep.subr.mxu0 0.0
    %257 = vmatpush2.msra.mxu0 0.0
    %258 = vmatprep.subr.mxu0 0.0
    %259 = vmatpush2.msra.mxu0 0.0
    %260 = vmatprep.subr.mxu0 0.0
    %261 = vmatpush2.msra.mxu0 0.0
    %262 = vmatprep.subr.mxu0 0.0
    %263 = vmatpush2.msra.mxu0 0.0
    %264 = vmatprep.subr.mxu0 0.0
    %265 = vmatpush2.msra.mxu0 0.0
    %266 = vmatprep.subr.mxu0 0.0
    %267 = vmatpush2.msra.mxu0 0.0
    %268 = vmatprep.subr.mxu0 0.0
    %269 = vmatpush2.msra.mxu0 0.0
    %270 = vmatprep.subr.mxu0 0.0
    %271 = vmatpush2.msra.mxu0 0.0
    %272 = vmatprep.subr.mxu0 0.0
    %273 = vmatpush2.msra.mxu0 0.0
    %274 = vmatprep.subr.mxu0 0.0
    %275 = vmatpush2.msra.mxu0 0.0
    %276 = vmatprep.mubr.f32.mxu0 0.0
    %277 = vmatmul.mubr.f32.gmra.mxu0 %v210
    %v278 = vpop.f32.mrf.mxu0
    %v279 = vadd.f32 %v207, %v278
    %v280 = vpop.f32.mrf.mxu0
    %281 = vdwg.mxu0
    %v282 = vmax.f32 %v279, 0.0
    %s283 = scalar_lea.vmem [#allocation2], 96
    %v284 = vld [vmem:[%s283] sm:$0xff]
    %v285 = vld [vmem:[%s283 + $0x8] sm:$0xff]
    %v286 = vld [vmem:[%s283 + $0x10] sm:$0xff]
    %v287 = vld [vmem:[%s283 + $0x18] sm:$0xff]
    %s288 = scalar_lea.vmem %s2, 3
    %v289 = vld [vmem:[%s288] sm:$0x1]
    %v291 = vlaneseq
    %v292 = vshrl.u32 %v291, 7
    %v293 = vsub.s32 0, %v292
    %v294 = vrot.slane %v289, %v293
    %v297 = vsel %vm40, %v282, 0
    %299 = vmatprep.subr.mxu0 0.0
    %300 = vmatpush1.msra.mxu0 0.0
    %301 = vmatprep.subr.mxu0 0.0
    %302 = vmatpush1.msra.mxu0 0.0
    %303 = vmatprep.subr.mxu0 0.0
    %304 = vmatpush1.msra.mxu0 0.0
    %305 = vmatprep.subr.mxu0 0.0
    %306 = vmatpush1.msra.mxu0 0.0
    %307 = vmatprep.subr.mxu0 0.0
    %308 = vmatpush1.msra.mxu0 0.0
    %309 = vmatprep.subr.mxu0 0.0
    %310 = vmatpush1.msra.mxu0 0.0
    %311 = vmatprep.subr.mxu0 0.0
    %312 = vmatpush1.msra.mxu0 0.0
    %313 = vmatprep.subr.mxu0 0.0
    %314 = vmatpush1.msra.mxu0 0.0
    %315 = vmatprep.subr.mxu0 0.0
    %316 = vmatpush1.msra.mxu0 0.0
    %317 = vmatprep.subr.mxu0 0.0
    %318 = vmatpush1.msra.mxu0 0.0
    %319 = vmatprep.subr.mxu0 0.0
    %320 = vmatpush1.msra.mxu0 0.0
    %321 = vmatprep.subr.mxu0 0.0
    %322 = vmatpush1.msra.mxu0 0.0
    %323 = vmatprep.subr.mxu0 0.0
    %324 = vmatpush1.msra.mxu0 %v287
    %325 = vmatprep.subr.mxu0 0.0
    %326 = vmatpush1.msra.mxu0 %v286
    %327 = vmatprep.subr.mxu0 0.0
    %328 = vmatpush1.msra.mxu0 %v285
    %329 = vmatprep.subr.mxu0 0.0
    %330 = vmatpush1.msra.mxu0 %v284
    %331 = vmatprep.subr.mxu0 0.0
    %332 = vmatpush2.msra.mxu0 0.0
    %333 = vmatprep.subr.mxu0 0.0
    %334 = vmatpush2.msra.mxu0 0.0
    %335 = vmatprep.subr.mxu0 0.0
    %336 = vmatpush2.msra.mxu0 0.0
    %337 = vmatprep.subr.mxu0 0.0
    %338 = vmatpush2.msra.mxu0 0.0
    %339 = vmatprep.subr.mxu0 0.0
    %340 = vmatpush2.msra.mxu0 0.0
    %341 = vmatprep.subr.mxu0 0.0
    %342 = vmatpush2.msra.mxu0 0.0
    %343 = vmatprep.subr.mxu0 0.0
    %344 = vmatpush2.msra.mxu0 0.0
    %345 = vmatprep.subr.mxu0 0.0
    %346 = vmatpush2.msra.mxu0 0.0
    %347 = vmatprep.subr.mxu0 0.0
    %348 = vmatpush2.msra.mxu0 0.0
    %349 = vmatprep.subr.mxu0 0.0
    %350 = vmatpush2.msra.mxu0 0.0
    %351 = vmatprep.subr.mxu0 0.0
    %352 = vmatpush2.msra.mxu0 0.0
    %353 = vmatprep.subr.mxu0 0.0
    %354 = vmatpush2.msra.mxu0 0.0
    %355 = vmatprep.subr.mxu0 0.0
    %356 = vmatpush2.msra.mxu0 0.0
    %357 = vmatprep.subr.mxu0 0.0
    %358 = vmatpush2.msra.mxu0 0.0
    %359 = vmatprep.subr.mxu0 0.0
    %360 = vmatpush2.msra.mxu0 0.0
    %361 = vmatprep.subr.mxu0 0.0
    %362 = vmatpush2.msra.mxu0 0.0
    %363 = vmatprep.mubr.f32.mxu0 0.0
    %364 = vmatmul.mubr.f32.gmra.mxu0 %v297
    %v365 = vpop.f32.mrf.mxu0
    %v366 = vadd.f32 %v294, %v365
    %v367 = vpop.f32.mrf.mxu0
    %368 = vdwg.mxu0
    %s369 = scalar_lea.vmem [#allocation2], 128
    %v370 = vld [vmem:[%s369] sm:$0xff]
    %v371 = vld [vmem:[%s369 + $0x8] sm:$0xff]
    %v372 = vld [vmem:[%s369 + $0x10] sm:$0xff]
    %v373 = vld [vmem:[%s369 + $0x18] sm:$0xff]
    %s374 = scalar_lea.vmem %s2, 4
    %v375 = vld [vmem:[%s374] sm:$0x1]
    %v377 = vlaneseq
    %v378 = vshrl.u32 %v377, 7
    %v379 = vsub.s32 0, %v378
    %v380 = vrot.slane %v375, %v379
    %v383 = vsel %vm40, %v366, 0
    %385 = vmatprep.subr.mxu0 0.0
    %386 = vmatpush1.msra.mxu0 0.0
    %387 = vmatprep.subr.mxu0 0.0
    %388 = vmatpush1.msra.mxu0 0.0
    %389 = vmatprep.subr.mxu0 0.0
    %390 = vmatpush1.msra.mxu0 0.0
    %391 = vmatprep.subr.mxu0 0.0
    %392 = vmatpush1.msra.mxu0 0.0
    %393 = vmatprep.subr.mxu0 0.0
    %394 = vmatpush1.msra.mxu0 0.0
    %395 = vmatprep.subr.mxu0 0.0
    %396 = vmatpush1.msra.mxu0 0.0
    %397 = vmatprep.subr.mxu0 0.0
    %398 = vmatpush1.msra.mxu0 0.0
    %399 = vmatprep.subr.mxu0 0.0
    %400 = vmatpush1.msra.mxu0 0.0
    %401 = vmatprep.subr.mxu0 0.0
    %402 = vmatpush1.msra.mxu0 0.0
    %403 = vmatprep.subr.mxu0 0.0
    %404 = vmatpush1.msra.mxu0 0.0
    %405 = vmatprep.subr.mxu0 0.0
    %406 = vmatpush1.msra.mxu0 0.0
    %407 = vmatprep.subr.mxu0 0.0
    %408 = vmatpush1.msra.mxu0 0.0
    %409 = vmatprep.subr.mxu0 0.0
    %410 = vmatpush1.msra.mxu0 %v373
    %411 = vmatprep.subr.mxu0 0.0
    %412 = vmatpush1.msra.mxu0 %v372
    %413 = vmatprep.subr.mxu0 0.0
    %414 = vmatpush1.msra.mxu0 %v371
    %415 = vmatprep.subr.mxu0 0.0
    %416 = vmatpush1.msra.mxu0 %v370
    %417 = vmatprep.subr.mxu0 0.0
    %418 = vmatpush2.msra.mxu0 0.0
    %419 = vmatprep.subr.mxu0 0.0
    %420 = vmatpush2.msra.mxu0 0.0
    %421 = vmatprep.subr.mxu0 0.0
    %422 = vmatpush2.msra.mxu0 0.0
    %423 = vmatprep.subr.mxu0 0.0
    %424 = vmatpush2.msra.mxu0 0.0
    %425 = vmatprep.subr.mxu0 0.0
    %426 = vmatpush2.msra.mxu0 0.0
    %427 = vmatprep.subr.mxu0 0.0
    %428 = vmatpush2.msra.mxu0 0.0
    %429 = vmatprep.subr.mxu0 0.0
    %430 = vmatpush2.msra.mxu0 0.0
    %431 = vmatprep.subr.mxu0 0.0
    %432 = vmatpush2.msra.mxu0 0.0
    %433 = vmatprep.subr.mxu0 0.0
    %434 = vmatpush2.msra.mxu0 0.0
    %435 = vmatprep.subr.mxu0 0.0
    %436 = vmatpush2.msra.mxu0 0.0
    %437 = vmatprep.subr.mxu0 0.0
    %438 = vmatpush2.msra.mxu0 0.0
    %439 = vmatprep.subr.mxu0 0.0
    %440 = vmatpush2.msra.mxu0 0.0
    %441 = vmatprep.subr.mxu0 0.0
    %442 = vmatpush2.msra.mxu0 0.0
    %443 = vmatprep.subr.mxu0 0.0
    %444 = vmatpush2.msra.mxu0 0.0
    %445 = vmatprep.subr.mxu0 0.0
    %446 = vmatpush2.msra.mxu0 0.0
    %447 = vmatprep.subr.mxu0 0.0
    %448 = vmatpush2.msra.mxu0 0.0
    %449 = vmatprep.mubr.f32.mxu0 0.0
    %450 = vmatmul.mubr.f32.gmra.mxu0 %v383
    %v451 = vpop.f32.mrf.mxu0
    %v452 = vadd.f32 %v380, %v451
    %v453 = vpop.f32.mrf.mxu0
    %454 = vdwg.mxu0
    %s455 = scalar_lea.vmem [#allocation2], 160
    %v456 = vld [vmem:[%s455] sm:$0xff]
    %v457 = vld [vmem:[%s455 + $0x8] sm:$0xff]
    %v458 = vld [vmem:[%s455 + $0x10] sm:$0xff]
    %v459 = vld [vmem:[%s455 + $0x18] sm:$0xff]
    %s460 = scalar_lea.vmem %s2, 5
    %v461 = vld [vmem:[%s460] sm:$0x1]
    %v463 = vlaneseq
    %v464 = vshrl.u32 %v463, 7
    %v465 = vsub.s32 0, %v464
    %v466 = vrot.slane %v461, %v465
    %468 = vmatprep.subr.mxu0 0.0
    %469 = vmatpush1.msra.mxu0 0.0
    %470 = vmatprep.subr.mxu0 0.0
    %471 = vmatpush1.msra.mxu0 0.0
    %472 = vmatprep.subr.mxu0 0.0
    %473 = vmatpush1.msra.mxu0 0.0
    %474 = vmatprep.subr.mxu0 0.0
    %475 = vmatpush1.msra.mxu0 0.0
    %476 = vmatprep.subr.mxu0 0.0
    %477 = vmatpush1.msra.mxu0 0.0
    %478 = vmatprep.subr.mxu0 0.0
    %479 = vmatpush1.msra.mxu0 0.0
    %480 = vmatprep.subr.mxu0 0.0
    %481 = vmatpush1.msra.mxu0 0.0
    %482 = vmatprep.subr.mxu0 0.0
    %483 = vmatpush1.msra.mxu0 0.0
    %484 = vmatprep.subr.mxu0 0.0
    %485 = vmatpush1.msra.mxu0 0.0
    %486 = vmatprep.subr.mxu0 0.0
    %487 = vmatpush1.msra.mxu0 0.0
    %488 = vmatprep.subr.mxu0 0.0
    %489 = vmatpush1.msra.mxu0 0.0
    %490 = vmatprep.subr.mxu0 0.0
    %491 = vmatpush1.msra.mxu0 0.0
    %492 = vmatprep.subr.mxu0 0.0
    %493 = vmatpush1.msra.mxu0 %v459
    %494 = vmatprep.subr.mxu0 0.0
    %495 = vmatpush1.msra.mxu0 %v458
    %496 = vmatprep.subr.mxu0 0.0
    %497 = vmatpush1.msra.mxu0 %v457
    %498 = vmatprep.subr.mxu0 0.0
    %499 = vmatpush1.msra.mxu0 %v456
    %500 = vmatprep.subr.mxu0 0.0
    %501 = vmatpush2.msra.mxu0 0.0
    %502 = vmatprep.subr.mxu0 0.0
    %503 = vmatpush2.msra.mxu0 0.0
    %504 = vmatprep.subr.mxu0 0.0
    %505 = vmatpush2.msra.mxu0 0.0
    %506 = vmatprep.subr.mxu0 0.0
    %507 = vmatpush2.msra.mxu0 0.0
    %508 = vmatprep.subr.mxu0 0.0
    %509 = vmatpush2.msra.mxu0 0.0
    %510 = vmatprep.subr.mxu0 0.0
    %511 = vmatpush2.msra.mxu0 0.0
    %512 = vmatprep.subr.mxu0 0.0
    %513 = vmatpush2.msra.mxu0 0.0
    %514 = vmatprep.subr.mxu0 0.0
    %515 = vmatpush2.msra.mxu0 0.0
    %516 = vmatprep.subr.mxu0 0.0
    %517 = vmatpush2.msra.mxu0 0.0
    %518 = vmatprep.subr.mxu0 0.0
    %519 = vmatpush2.msra.mxu0 0.0
    %520 = vmatprep.subr.mxu0 0.0
    %521 = vmatpush2.msra.mxu0 0.0
    %522 = vmatprep.subr.mxu0 0.0
    %523 = vmatpush2.msra.mxu0 0.0
    %524 = vmatprep.subr.mxu0 0.0
    %525 = vmatpush2.msra.mxu0 0.0
    %526 = vmatprep.subr.mxu0 0.0
    %527 = vmatpush2.msra.mxu0 0.0
    %528 = vmatprep.subr.mxu0 0.0
    %529 = vmatpush2.msra.mxu0 0.0
    %530 = vmatprep.subr.mxu0 0.0
    %531 = vmatpush2.msra.mxu0 0.0
    %532 = vmatprep.mubr.f32.mxu0 0.0
    %533 = vmatmul.mubr.f32.gmra.mxu0 %v383
    %v534 = vpop.f32.mrf.mxu0
    %v535 = vadd.f32 %v466, %v534
    %v536 = vpop.f32.mrf.mxu0
    %537 = vdwg.mxu0
    %v538 = vmul.f32 %v535, 0.5
    %v539 = vmul.f32 %v538, 1.442695
    %v540 = vpow.pop %v539
    %v541 = vadd.f32 %v540, 1e-07
    %s542 = scalar_lea.vmem %s0, 16
    %v543 = vld [vmem:[%s542] sm:$0xff]
    %v544 = vmul.f32 %v543, %v541
    %v545 = vadd.f32 %v452, %v544
    %s546 = scalar_lea.vmem [#allocation2], 672
    %v547 = vld [vmem:[%s546] sm:$0xff]
    %v548 = vld [vmem:[%s546 + $0x8] sm:$0xff]
    %v549 = vld [vmem:[%s546 + $0x10] sm:$0xff]
    %v550 = vld [vmem:[%s546 + $0x18] sm:$0xff]
    %s551 = scalar_lea.vmem %s2, 21
    %v552 = vld [vmem:[%s551] sm:$0x1]
    %v554 = vlaneseq
    %v555 = vshrl.u32 %v554, 7
    %v556 = vsub.s32 0, %v555
    %v557 = vrot.slane %v552, %v556
    %v560 = vsel %vm40, %v545, 0
    %562 = vmatprep.subr.mxu0 0.0
    %563 = vmatpush1.msra.mxu0 0.0
    %564 = vmatprep.subr.mxu0 0.0
    %565 = vmatpush1.msra.mxu0 0.0
    %566 = vmatprep.subr.mxu0 0.0
    %567 = vmatpush1.msra.mxu0 0.0
    %568 = vmatprep.subr.mxu0 0.0
    %569 = vmatpush1.msra.mxu0 0.0
    %570 = vmatprep.subr.mxu0 0.0
    %571 = vmatpush1.msra.mxu0 0.0
    %572 = vmatprep.subr.mxu0 0.0
    %573 = vmatpush1.msra.mxu0 0.0
    %574 = vmatprep.subr.mxu0 0.0
    %575 = vmatpush1.msra.mxu0 0.0
    %576 = vmatprep.subr.mxu0 0.0
    %577 = vmatpush1.msra.mxu0 0.0
    %578 = vmatprep.subr.mxu0 0.0
    %579 = vmatpush1.msra.mxu0 0.0
    %580 = vmatprep.subr.mxu0 0.0
    %581 = vmatpush1.msra.mxu0 0.0
    %582 = vmatprep.subr.mxu0 0.0
    %583 = vmatpush1.msra.mxu0 0.0
    %584 = vmatprep.subr.mxu0 0.0
    %585 = vmatpush1.msra.mxu0 0.0
    %586 = vmatprep.subr.mxu0 0.0
    %587 = vmatpush1.msra.mxu0 %v550
    %588 = vmatprep.subr.mxu0 0.0
    %589 = vmatpush1.msra.mxu0 %v549
    %590 = vmatprep.subr.mxu0 0.0
    %591 = vmatpush1.msra.mxu0 %v548
    %592 = vmatprep.subr.mxu0 0.0
    %593 = vmatpush1.msra.mxu0 %v547
    %594 = vmatprep.subr.mxu0 0.0
    %595 = vmatpush2.msra.mxu0 0.0
    %596 = vmatprep.subr.mxu0 0.0
    %597 = vmatpush2.msra.mxu0 0.0
    %598 = vmatprep.subr.mxu0 0.0
    %599 = vmatpush2.msra.mxu0 0.0
    %600 = vmatprep.subr.mxu0 0.0
    %601 = vmatpush2.msra.mxu0 0.0
    %602 = vmatprep.subr.mxu0 0.0
    %603 = vmatpush2.msra.mxu0 0.0
    %604 = vmatprep.subr.mxu0 0.0
    %605 = vmatpush2.msra.mxu0 0.0
    %606 = vmatprep.subr.mxu0 0.0
    %607 = vmatpush2.msra.mxu0 0.0
    %608 = vmatprep.subr.mxu0 0.0
    %609 = vmatpush2.msra.mxu0 0.0
    %610 = vmatprep.subr.mxu0 0.0
    %611 = vmatpush2.msra.mxu0 0.0
    %612 = vmatprep.subr.mxu0 0.0
    %613 = vmatpush2.msra.mxu0 0.0
    %614 = vmatprep.subr.mxu0 0.0
    %615 = vmatpush2.msra.mxu0 0.0
    %616 = vmatprep.subr.mxu0 0.0
    %617 = vmatpush2.msra.mxu0 0.0
    %618 = vmatprep.subr.mxu0 0.0
    %619 = vmatpush2.msra.mxu0 0.0
    %620 = vmatprep.subr.mxu0 0.0
    %621 = vmatpush2.msra.mxu0 0.0
    %622 = vmatprep.subr.mxu0 0.0
    %623 = vmatpush2.msra.mxu0 0.0
    %624 = vmatprep.subr.mxu0 0.0
    %625 = vmatpush2.msra.mxu0 0.0
    %626 = vmatprep.mubr.f32.mxu0 0.0
    %627 = vmatmul.mubr.f32.gmra.mxu0 %v560
    %v628 = vpop.f32.mrf.mxu0
    %v629 = vadd.f32 %v557, %v628
    %v630 = vpop.f32.mrf.mxu0
    %631 = vdwg.mxu0
    %v632 = vmax.f32 %v629, 0.0
    %s633 = scalar_lea.vmem [#allocation2], 704
    %v634 = vld [vmem:[%s633] sm:$0xff]
    %v635 = vld [vmem:[%s633 + $0x8] sm:$0xff]
    %v636 = vld [vmem:[%s633 + $0x10] sm:$0xff]
    %v637 = vld [vmem:[%s633 + $0x18] sm:$0xff]
    %s638 = scalar_lea.vmem %s2, 22
    %v639 = vld [vmem:[%s638] sm:$0x1]
    %v641 = vlaneseq
    %v642 = vshrl.u32 %v641, 7
    %v643 = vsub.s32 0, %v642
    %v644 = vrot.slane %v639, %v643
    %v647 = vsel %vm40, %v632, 0
    %649 = vmatprep.subr.mxu0 0.0
    %650 = vmatpush1.msra.mxu0 0.0
    %651 = vmatprep.subr.mxu0 0.0
    %652 = vmatpush1.msra.mxu0 0.0
    %653 = vmatprep.subr.mxu0 0.0
    %654 = vmatpush1.msra.mxu0 0.0
    %655 = vmatprep.subr.mxu0 0.0
    %656 = vmatpush1.msra.mxu0 0.0
    %657 = vmatprep.subr.mxu0 0.0
    %658 = vmatpush1.msra.mxu0 0.0
    %659 = vmatprep.subr.mxu0 0.0
    %660 = vmatpush1.msra.mxu0 0.0
    %661 = vmatprep.subr.mxu0 0.0
    %662 = vmatpush1.msra.mxu0 0.0
    %663 = vmatprep.subr.mxu0 0.0
    %664 = vmatpush1.msra.mxu0 0.0
    %665 = vmatprep.subr.mxu0 0.0
    %666 = vmatpush1.msra.mxu0 0.0
    %667 = vmatprep.subr.mxu0 0.0
    %668 = vmatpush1.msra.mxu0 0.0
    %669 = vmatprep.subr.mxu0 0.0
    %670 = vmatpush1.msra.mxu0 0.0
    %671 = vmatprep.subr.mxu0 0.0
    %672 = vmatpush1.msra.mxu0 0.0
    %673 = vmatprep.subr.mxu0 0.0
    %674 = vmatpush1.msra.mxu0 %v637
    %675 = vmatprep.subr.mxu0 0.0
    %676 = vmatpush1.msra.mxu0 %v636
    %677 = vmatprep.subr.mxu0 0.0
    %678 = vmatpush1.msra.mxu0 %v635
    %679 = vmatprep.subr.mxu0 0.0
    %680 = vmatpush1.msra.mxu0 %v634
    %681 = vmatprep.subr.mxu0 0.0
    %682 = vmatpush2.msra.mxu0 0.0
    %683 = vmatprep.subr.mxu0 0.0
    %684 = vmatpush2.msra.mxu0 0.0
    %685 = vmatprep.subr.mxu0 0.0
    %686 = vmatpush2.msra.mxu0 0.0
    %687 = vmatprep.subr.mxu0 0.0
    %688 = vmatpush2.msra.mxu0 0.0
    %689 = vmatprep.subr.mxu0 0.0
    %690 = vmatpush2.msra.mxu0 0.0
    %691 = vmatprep.subr.mxu0 0.0
    %692 = vmatpush2.msra.mxu0 0.0
    %693 = vmatprep.subr.mxu0 0.0
    %694 = vmatpush2.msra.mxu0 0.0
    %695 = vmatprep.subr.mxu0 0.0
    %696 = vmatpush2.msra.mxu0 0.0
    %697 = vmatprep.subr.mxu0 0.0
    %698 = vmatpush2.msra.mxu0 0.0
    %699 = vmatprep.subr.mxu0 0.0
    %700 = vmatpush2.msra.mxu0 0.0
    %701 = vmatprep.subr.mxu0 0.0
    %702 = vmatpush2.msra.mxu0 0.0
    %703 = vmatprep.subr.mxu0 0.0
    %704 = vmatpush2.msra.mxu0 0.0
    %705 = vmatprep.subr.mxu0 0.0
    %706 = vmatpush2.msra.mxu0 0.0
    %707 = vmatprep.subr.mxu0 0.0
    %708 = vmatpush2.msra.mxu0 0.0
    %709 = vmatprep.subr.mxu0 0.0
    %710 = vmatpush2.msra.mxu0 0.0
    %711 = vmatprep.subr.mxu0 0.0
    %712 = vmatpush2.msra.mxu0 0.0
    %713 = vmatprep.mubr.f32.mxu0 0.0
    %714 = vmatmul.mubr.f32.gmra.mxu0 %v647
    %v715 = vpop.f32.mrf.mxu0
    %v716 = vadd.f32 %v644, %v715
    %v717 = vpop.f32.mrf.mxu0
    %718 = vdwg.mxu0
    %v719 = vmax.f32 %v716, 0.0
    %s720 = scalar_lea.vmem [#allocation2], 736
    %v721 = vld [vmem:[%s720] sm:$0xff]
    %v722 = vld [vmem:[%s720 + $0x8] sm:$0xff]
    %v723 = vld [vmem:[%s720 + $0x10] sm:$0xff]
    %v724 = vld [vmem:[%s720 + $0x18] sm:$0xff]
    %s725 = scalar_lea.vmem %s2, 23
    %v726 = vld [vmem:[%s725] sm:$0x1]
    %v728 = vlaneseq
    %v729 = vshrl.u32 %v728, 7
    %v730 = vsub.s32 0, %v729
    %v731 = vrot.slane %v726, %v730
    %v734 = vsel %vm40, %v719, 0
    %736 = vmatprep.subr.mxu0 0.0
    %737 = vmatpush1.msra.mxu0 0.0
    %738 = vmatprep.subr.mxu0 0.0
    %739 = vmatpush1.msra.mxu0 0.0
    %740 = vmatprep.subr.mxu0 0.0
    %741 = vmatpush1.msra.mxu0 0.0
    %742 = vmatprep.subr.mxu0 0.0
    %743 = vmatpush1.msra.mxu0 0.0
    %744 = vmatprep.subr.mxu0 0.0
    %745 = vmatpush1.msra.mxu0 0.0
    %746 = vmatprep.subr.mxu0 0.0
    %747 = vmatpush1.msra.mxu0 0.0
    %748 = vmatprep.subr.mxu0 0.0
    %749 = vmatpush1.msra.mxu0 0.0
    %750 = vmatprep.subr.mxu0 0.0
    %751 = vmatpush1.msra.mxu0 0.0
    %752 = vmatprep.subr.mxu0 0.0
    %753 = vmatpush1.msra.mxu0 0.0
    %754 = vmatprep.subr.mxu0 0.0
    %755 = vmatpush1.msra.mxu0 0.0
    %756 = vmatprep.subr.mxu0 0.0
    %757 = vmatpush1.msra.mxu0 0.0
    %758 = vmatprep.subr.mxu0 0.0
    %759 = vmatpush1.msra.mxu0 0.0
    %760 = vmatprep.subr.mxu0 0.0
    %761 = vmatpush1.msra.mxu0 %v724
    %762 = vmatprep.subr.mxu0 0.0
    %763 = vmatpush1.msra.mxu0 %v723
    %764 = vmatprep.subr.mxu0 0.0
    %765 = vmatpush1.msra.mxu0 %v722
    %766 = vmatprep.subr.mxu0 0.0
    %767 = vmatpush1.msra.mxu0 %v721
    %768 = vmatprep.subr.mxu0 0.0
    %769 = vmatpush2.msra.mxu0 0.0
    %770 = vmatprep.subr.mxu0 0.0
    %771 = vmatpush2.msra.mxu0 0.0
    %772 = vmatprep.subr.mxu0 0.0
    %773 = vmatpush2.msra.mxu0 0.0
    %774 = vmatprep.subr.mxu0 0.0
    %775 = vmatpush2.msra.mxu0 0.0
    %776 = vmatprep.subr.mxu0 0.0
    %777 = vmatpush2.msra.mxu0 0.0
    %778 = vmatprep.subr.mxu0 0.0
    %779 = vmatpush2.msra.mxu0 0.0
    %780 = vmatprep.subr.mxu0 0.0
    %781 = vmatpush2.msra.mxu0 0.0
    %782 = vmatprep.subr.mxu0 0.0
    %783 = vmatpush2.msra.mxu0 0.0
    %784 = vmatprep.subr.mxu0 0.0
    %785 = vmatpush2.msra.mxu0 0.0
    %786 = vmatprep.subr.mxu0 0.0
    %787 = vmatpush2.msra.mxu0 0.0
    %788 = vmatprep.subr.mxu0 0.0
    %789 = vmatpush2.msra.mxu0 0.0
    %790 = vmatprep.subr.mxu0 0.0
    %791 = vmatpush2.msra.mxu0 0.0
    %792 = vmatprep.subr.mxu0 0.0
    %793 = vmatpush2.msra.mxu0 0.0
    %794 = vmatprep.subr.mxu0 0.0
    %795 = vmatpush2.msra.mxu0 0.0
    %796 = vmatprep.subr.mxu0 0.0
    %797 = vmatpush2.msra.mxu0 0.0
    %798 = vmatprep.subr.mxu0 0.0
    %799 = vmatpush2.msra.mxu0 0.0
    %800 = vmatprep.mubr.f32.mxu0 0.0
    %801 = vmatmul.mubr.f32.gmra.mxu0 %v734
    %v802 = vpop.f32.mrf.mxu0
    %v803 = vadd.f32 %v731, %v802
    %v804 = vpop.f32.mrf.mxu0
    %805 = vdwg.mxu0
    %s806 = scalar_lea.vmem [#allocation2], 768
    %v807 = vld [vmem:[%s806] sm:$0xff]
    %v808 = vld [vmem:[%s806 + $0x8] sm:$0xff]
    %v809 = vld [vmem:[%s806 + $0x10] sm:$0xff]
    %v810 = vld [vmem:[%s806 + $0x18] sm:$0xff]
    %s811 = scalar_lea.vmem %s2, 24
    %v812 = vld [vmem:[%s811] sm:$0x1]
    %v814 = vlaneseq
    %v815 = vshrl.u32 %v814, 7
    %v816 = vsub.s32 0, %v815
    %v817 = vrot.slane %v812, %v816
    %819 = vmatprep.subr.mxu0 0.0
    %820 = vmatpush1.msra.mxu0 0.0
    %821 = vmatprep.subr.mxu0 0.0
    %822 = vmatpush1.msra.mxu0 0.0
    %823 = vmatprep.subr.mxu0 0.0
    %824 = vmatpush1.msra.mxu0 0.0
    %825 = vmatprep.subr.mxu0 0.0
    %826 = vmatpush1.msra.mxu0 0.0
    %827 = vmatprep.subr.mxu0 0.0
    %828 = vmatpush1.msra.mxu0 0.0
    %829 = vmatprep.subr.mxu0 0.0
    %830 = vmatpush1.msra.mxu0 0.0
    %831 = vmatprep.subr.mxu0 0.0
    %832 = vmatpush1.msra.mxu0 0.0
    %833 = vmatprep.subr.mxu0 0.0
    %834 = vmatpush1.msra.mxu0 0.0
    %835 = vmatprep.subr.mxu0 0.0
    %836 = vmatpush1.msra.mxu0 0.0
    %837 = vmatprep.subr.mxu0 0.0
    %838 = vmatpush1.msra.mxu0 0.0
    %839 = vmatprep.subr.mxu0 0.0
    %840 = vmatpush1.msra.mxu0 0.0
    %841 = vmatprep.subr.mxu0 0.0
    %842 = vmatpush1.msra.mxu0 0.0
    %843 = vmatprep.subr.mxu0 0.0
    %844 = vmatpush1.msra.mxu0 %v810
    %845 = vmatprep.subr.mxu0 0.0
    %846 = vmatpush1.msra.mxu0 %v809
    %847 = vmatprep.subr.mxu0 0.0
    %848 = vmatpush1.msra.mxu0 %v808
    %849 = vmatprep.subr.mxu0 0.0
    %850 = vmatpush1.msra.mxu0 %v807
    %851 = vmatprep.subr.mxu0 0.0
    %852 = vmatpush2.msra.mxu0 0.0
    %853 = vmatprep.subr.mxu0 0.0
    %854 = vmatpush2.msra.mxu0 0.0
    %855 = vmatprep.subr.mxu0 0.0
    %856 = vmatpush2.msra.mxu0 0.0
    %857 = vmatprep.subr.mxu0 0.0
    %858 = vmatpush2.msra.mxu0 0.0
    %859 = vmatprep.subr.mxu0 0.0
    %860 = vmatpush2.msra.mxu0 0.0
    %861 = vmatprep.subr.mxu0 0.0
    %862 = vmatpush2.msra.mxu0 0.0
    %863 = vmatprep.subr.mxu0 0.0
    %864 = vmatpush2.msra.mxu0 0.0
    %865 = vmatprep.subr.mxu0 0.0
    %866 = vmatpush2.msra.mxu0 0.0
    %867 = vmatprep.subr.mxu0 0.0
    %868 = vmatpush2.msra.mxu0 0.0
    %869 = vmatprep.subr.mxu0 0.0
    %870 = vmatpush2.msra.mxu0 0.0
    %871 = vmatprep.subr.mxu0 0.0
    %872 = vmatpush2.msra.mxu0 0.0
    %873 = vmatprep.subr.mxu0 0.0
    %874 = vmatpush2.msra.mxu0 0.0
    %875 = vmatprep.subr.mxu0 0.0
    %876 = vmatpush2.msra.mxu0 0.0
    %877 = vmatprep.subr.mxu0 0.0
    %878 = vmatpush2.msra.mxu0 0.0
    %879 = vmatprep.subr.mxu0 0.0
    %880 = vmatpush2.msra.mxu0 0.0
    %881 = vmatprep.subr.mxu0 0.0
    %882 = vmatpush2.msra.mxu0 0.0
    %883 = vmatprep.mubr.f32.mxu0 0.0
    %884 = vmatmul.mubr.f32.gmra.mxu0 %v560
    %v885 = vpop.f32.mrf.mxu0
    %v886 = vadd.f32 %v817, %v885
    %v887 = vpop.f32.mrf.mxu0
    %888 = vdwg.mxu0
    %v889 = vmax.f32 %v886, 0.0
    %s890 = scalar_lea.vmem [#allocation2], 800
    %v891 = vld [vmem:[%s890] sm:$0xff]
    %v892 = vld [vmem:[%s890 + $0x8] sm:$0xff]
    %v893 = vld [vmem:[%s890 + $0x10] sm:$0xff]
    %v894 = vld [vmem:[%s890 + $0x18] sm:$0xff]
    %s895 = scalar_lea.vmem %s2, 25
    %v896 = vld [vmem:[%s895] sm:$0x1]
    %v898 = vlaneseq
    %v899 = vshrl.u32 %v898, 7
    %v900 = vsub.s32 0, %v899
    %v901 = vrot.slane %v896, %v900
    %v904 = vsel %vm40, %v889, 0
    %906 = vmatprep.subr.mxu0 0.0
    %907 = vmatpush1.msra.mxu0 0.0
    %908 = vmatprep.subr.mxu0 0.0
    %909 = vmatpush1.msra.mxu0 0.0
    %910 = vmatprep.subr.mxu0 0.0
    %911 = vmatpush1.msra.mxu0 0.0
    %912 = vmatprep.subr.mxu0 0.0
    %913 = vmatpush1.msra.mxu0 0.0
    %914 = vmatprep.subr.mxu0 0.0
    %915 = vmatpush1.msra.mxu0 0.0
    %916 = vmatprep.subr.mxu0 0.0
    %917 = vmatpush1.msra.mxu0 0.0
    %918 = vmatprep.subr.mxu0 0.0
    %919 = vmatpush1.msra.mxu0 0.0
    %920 = vmatprep.subr.mxu0 0.0
    %921 = vmatpush1.msra.mxu0 0.0
    %922 = vmatprep.subr.mxu0 0.0
    %923 = vmatpush1.msra.mxu0 0.0
    %924 = vmatprep.subr.mxu0 0.0
    %925 = vmatpush1.msra.mxu0 0.0
    %926 = vmatprep.subr.mxu0 0.0
    %927 = vmatpush1.msra.mxu0 0.0
    %928 = vmatprep.subr.mxu0 0.0
    %929 = vmatpush1.msra.mxu0 0.0
    %930 = vmatprep.subr.mxu0 0.0
    %931 = vmatpush1.msra.mxu0 %v894
    %932 = vmatprep.subr.mxu0 0.0
    %933 = vmatpush1.msra.mxu0 %v893
    %934 = vmatprep.subr.mxu0 0.0
    %935 = vmatpush1.msra.mxu0 %v892
    %936 = vmatprep.subr.mxu0 0.0
    %937 = vmatpush1.msra.mxu0 %v891
    %938 = vmatprep.subr.mxu0 0.0
    %939 = vmatpush2.msra.mxu0 0.0
    %940 = vmatprep.subr.mxu0 0.0
    %941 = vmatpush2.msra.mxu0 0.0
    %942 = vmatprep.subr.mxu0 0.0
    %943 = vmatpush2.msra.mxu0 0.0
    %944 = vmatprep.subr.mxu0 0.0
    %945 = vmatpush2.msra.mxu0 0.0
    %946 = vmatprep.subr.mxu0 0.0
    %947 = vmatpush2.msra.mxu0 0.0
    %948 = vmatprep.subr.mxu0 0.0
    %949 = vmatpush2.msra.mxu0 0.0
    %950 = vmatprep.subr.mxu0 0.0
    %951 = vmatpush2.msra.mxu0 0.0
    %952 = vmatprep.subr.mxu0 0.0
    %953 = vmatpush2.msra.mxu0 0.0
    %954 = vmatprep.subr.mxu0 0.0
    %955 = vmatpush2.msra.mxu0 0.0
    %956 = vmatprep.subr.mxu0 0.0
    %957 = vmatpush2.msra.mxu0 0.0
    %958 = vmatprep.subr.mxu0 0.0
    %959 = vmatpush2.msra.mxu0 0.0
    %960 = vmatprep.subr.mxu0 0.0
    %961 = vmatpush2.msra.mxu0 0.0
    %962 = vmatprep.subr.mxu0 0.0
    %963 = vmatpush2.msra.mxu0 0.0
    %964 = vmatprep.subr.mxu0 0.0
    %965 = vmatpush2.msra.mxu0 0.0
    %966 = vmatprep.subr.mxu0 0.0
    %967 = vmatpush2.msra.mxu0 0.0
    %968 = vmatprep.subr.mxu0 0.0
    %969 = vmatpush2.msra.mxu0 0.0
    %970 = vmatprep.mubr.f32.mxu0 0.0
    %971 = vmatmul.mubr.f32.gmra.mxu0 %v904
    %v972 = vpop.f32.mrf.mxu0
    %v973 = vadd.f32 %v901, %v972
    %v974 = vpop.f32.mrf.mxu0
    %975 = vdwg.mxu0
    %v976 = vmax.f32 %v973, 0.0
    %s977 = scalar_lea.vmem [#allocation2], 832
    %v978 = vld [vmem:[%s977] sm:$0xff]
    %v979 = vld [vmem:[%s977 + $0x8] sm:$0xff]
    %v980 = vld [vmem:[%s977 + $0x10] sm:$0xff]
    %v981 = vld [vmem:[%s977 + $0x18] sm:$0xff]
    %s982 = scalar_lea.vmem %s2, 26
    %v983 = vld [vmem:[%s982] sm:$0x1]
    %v985 = vlaneseq
    %v986 = vshrl.u32 %v985, 7
    %v987 = vsub.s32 0, %v986
    %v988 = vrot.slane %v983, %v987
    %v991 = vsel %vm40, %v976, 0
    %993 = vmatprep.subr.mxu0 0.0
    %994 = vmatpush1.msra.mxu0 0.0
    %995 = vmatprep.subr.mxu0 0.0
    %996 = vmatpush1.msra.mxu0 0.0
    %997 = vmatprep.subr.mxu0 0.0
    %998 = vmatpush1.msra.mxu0 0.0
    %999 = vmatprep.subr.mxu0 0.0
    %1000 = vmatpush1.msra.mxu0 0.0
    %1001 = vmatprep.subr.mxu0 0.0
    %1002 = vmatpush1.msra.mxu0 0.0
    %1003 = vmatprep.subr.mxu0 0.0
    %1004 = vmatpush1.msra.mxu0 0.0
    %1005 = vmatprep.subr.mxu0 0.0
    %1006 = vmatpush1.msra.mxu0 0.0
    %1007 = vmatprep.subr.mxu0 0.0
    %1008 = vmatpush1.msra.mxu0 0.0
    %1009 = vmatprep.subr.mxu0 0.0
    %1010 = vmatpush1.msra.mxu0 0.0
    %1011 = vmatprep.subr.mxu0 0.0
    %1012 = vmatpush1.msra.mxu0 0.0
    %1013 = vmatprep.subr.mxu0 0.0
    %1014 = vmatpush1.msra.mxu0 0.0
    %1015 = vmatprep.subr.mxu0 0.0
    %1016 = vmatpush1.msra.mxu0 0.0
    %1017 = vmatprep.subr.mxu0 0.0
    %1018 = vmatpush1.msra.mxu0 %v981
    %1019 = vmatprep.subr.mxu0 0.0
    %1020 = vmatpush1.msra.mxu0 %v980
    %1021 = vmatprep.subr.mxu0 0.0
    %1022 = vmatpush1.msra.mxu0 %v979
    %1023 = vmatprep.subr.mxu0 0.0
    %1024 = vmatpush1.msra.mxu0 %v978
    %1025 = vmatprep.subr.mxu0 0.0
    %1026 = vmatpush2.msra.mxu0 0.0
    %1027 = vmatprep.subr.mxu0 0.0
    %1028 = vmatpush2.msra.mxu0 0.0
    %1029 = vmatprep.subr.mxu0 0.0
    %1030 = vmatpush2.msra.mxu0 0.0
    %1031 = vmatprep.subr.mxu0 0.0
    %1032 = vmatpush2.msra.mxu0 0.0
    %1033 = vmatprep.subr.mxu0 0.0
    %1034 = vmatpush2.msra.mxu0 0.0
    %1035 = vmatprep.subr.mxu0 0.0
    %1036 = vmatpush2.msra.mxu0 0.0
    %1037 = vmatprep.subr.mxu0 0.0
    %1038 = vmatpush2.msra.mxu0 0.0
    %1039 = vmatprep.subr.mxu0 0.0
    %1040 = vmatpush2.msra.mxu0 0.0
    %1041 = vmatprep.subr.mxu0 0.0
    %1042 = vmatpush2.msra.mxu0 0.0
    %1043 = vmatprep.subr.mxu0 0.0
    %1044 = vmatpush2.msra.mxu0 0.0
    %1045 = vmatprep.subr.mxu0 0.0
    %1046 = vmatpush2.msra.mxu0 0.0
    %1047 = vmatprep.subr.mxu0 0.0
    %1048 = vmatpush2.msra.mxu0 0.0
    %1049 = vmatprep.subr.mxu0 0.0
    %1050 = vmatpush2.msra.mxu0 0.0
    %1051 = vmatprep.subr.mxu0 0.0
    %1052 = vmatpush2.msra.mxu0 0.0
    %1053 = vmatprep.subr.mxu0 0.0
    %1054 = vmatpush2.msra.mxu0 0.0
    %1055 = vmatprep.subr.mxu0 0.0
    %1056 = vmatpush2.msra.mxu0 0.0
    %1057 = vmatprep.mubr.f32.mxu0 0.0
    %1058 = vmatmul.mubr.f32.gmra.mxu0 %v991
    %v1059 = vpop.f32.mrf.mxu0
    %v1060 = vadd.f32 %v988, %v1059
    %v1061 = vpop.f32.mrf.mxu0
    %1062 = vdwg.mxu0
    %s1063 = scalar_lea.vmem [#allocation2], 192
    %v1064 = vld [vmem:[%s1063] sm:$0xff]
    %v1065 = vld [vmem:[%s1063 + $0x8] sm:$0xff]
    %v1066 = vld [vmem:[%s1063 + $0x10] sm:$0xff]
    %v1067 = vld [vmem:[%s1063 + $0x18] sm:$0xff]
    %s1068 = scalar_lea.vmem %s2, 6
    %v1069 = vld [vmem:[%s1068] sm:$0x1]
    %v1071 = vlaneseq
    %v1072 = vshrl.u32 %v1071, 7
    %v1073 = vsub.s32 0, %v1072
    %v1074 = vrot.slane %v1069, %v1073
    %1076 = vmatprep.subr.mxu0 0.0
    %1077 = vmatpush1.msra.mxu0 0.0
    %1078 = vmatprep.subr.mxu0 0.0
    %1079 = vmatpush1.msra.mxu0 0.0
    %1080 = vmatprep.subr.mxu0 0.0
    %1081 = vmatpush1.msra.mxu0 0.0
    %1082 = vmatprep.subr.mxu0 0.0
    %1083 = vmatpush1.msra.mxu0 0.0
    %1084 = vmatprep.subr.mxu0 0.0
    %1085 = vmatpush1.msra.mxu0 0.0
    %1086 = vmatprep.subr.mxu0 0.0
    %1087 = vmatpush1.msra.mxu0 0.0
    %1088 = vmatprep.subr.mxu0 0.0
    %1089 = vmatpush1.msra.mxu0 0.0
    %1090 = vmatprep.subr.mxu0 0.0
    %1091 = vmatpush1.msra.mxu0 0.0
    %1092 = vmatprep.subr.mxu0 0.0
    %1093 = vmatpush1.msra.mxu0 0.0
    %1094 = vmatprep.subr.mxu0 0.0
    %1095 = vmatpush1.msra.mxu0 0.0
    %1096 = vmatprep.subr.mxu0 0.0
    %1097 = vmatpush1.msra.mxu0 0.0
    %1098 = vmatprep.subr.mxu0 0.0
    %1099 = vmatpush1.msra.mxu0 0.0
    %1100 = vmatprep.subr.mxu0 0.0
    %1101 = vmatpush1.msra.mxu0 %v1067
    %1102 = vmatprep.subr.mxu0 0.0
    %1103 = vmatpush1.msra.mxu0 %v1066
    %1104 = vmatprep.subr.mxu0 0.0
    %1105 = vmatpush1.msra.mxu0 %v1065
    %1106 = vmatprep.subr.mxu0 0.0
    %1107 = vmatpush1.msra.mxu0 %v1064
    %1108 = vmatprep.subr.mxu0 0.0
    %1109 = vmatpush2.msra.mxu0 0.0
    %1110 = vmatprep.subr.mxu0 0.0
    %1111 = vmatpush2.msra.mxu0 0.0
    %1112 = vmatprep.subr.mxu0 0.0
    %1113 = vmatpush2.msra.mxu0 0.0
    %1114 = vmatprep.subr.mxu0 0.0
    %1115 = vmatpush2.msra.mxu0 0.0
    %1116 = vmatprep.subr.mxu0 0.0
    %1117 = vmatpush2.msra.mxu0 0.0
    %1118 = vmatprep.subr.mxu0 0.0
    %1119 = vmatpush2.msra.mxu0 0.0
    %1120 = vmatprep.subr.mxu0 0.0
    %1121 = vmatpush2.msra.mxu0 0.0
    %1122 = vmatprep.subr.mxu0 0.0
    %1123 = vmatpush2.msra.mxu0 0.0
    %1124 = vmatprep.subr.mxu0 0.0
    %1125 = vmatpush2.msra.mxu0 0.0
    %1126 = vmatprep.subr.mxu0 0.0
    %1127 = vmatpush2.msra.mxu0 0.0
    %1128 = vmatprep.subr.mxu0 0.0
    %1129 = vmatpush2.msra.mxu0 0.0
    %1130 = vmatprep.subr.mxu0 0.0
    %1131 = vmatpush2.msra.mxu0 0.0
    %1132 = vmatprep.subr.mxu0 0.0
    %1133 = vmatpush2.msra.mxu0 0.0
    %1134 = vmatprep.subr.mxu0 0.0
    %1135 = vmatpush2.msra.mxu0 0.0
    %1136 = vmatprep.subr.mxu0 0.0
    %1137 = vmatpush2.msra.mxu0 0.0
    %1138 = vmatprep.subr.mxu0 0.0
    %1139 = vmatpush2.msra.mxu0 0.0
    %1140 = vmatprep.mubr.f32.mxu0 0.0
    %1141 = vmatmul.mubr.f32.gmra.mxu0 %v115
    %v1142 = vpop.f32.mrf.mxu0
    %v1143 = vadd.f32 %v1074, %v1142
    %v1144 = vpop.f32.mrf.mxu0
    %1145 = vdwg.mxu0
    %v1146 = vmax.f32 %v1143, 0.0
    %s1147 = scalar_lea.vmem [#allocation2], 224
    %v1148 = vld [vmem:[%s1147] sm:$0xff]
    %v1149 = vld [vmem:[%s1147 + $0x8] sm:$0xff]
    %v1150 = vld [vmem:[%s1147 + $0x10] sm:$0xff]
    %v1151 = vld [vmem:[%s1147 + $0x18] sm:$0xff]
    %s1152 = scalar_lea.vmem %s2, 7
    %v1153 = vld [vmem:[%s1152] sm:$0x1]
    %v1155 = vlaneseq
    %v1156 = vshrl.u32 %v1155, 7
    %v1157 = vsub.s32 0, %v1156
    %v1158 = vrot.slane %v1153, %v1157
    %v1161 = vsel %vm40, %v1146, 0
    %1163 = vmatprep.subr.mxu0 0.0
    %1164 = vmatpush1.msra.mxu0 0.0
    %1165 = vmatprep.subr.mxu0 0.0
    %1166 = vmatpush1.msra.mxu0 0.0
    %1167 = vmatprep.subr.mxu0 0.0
    %1168 = vmatpush1.msra.mxu0 0.0
    %1169 = vmatprep.subr.mxu0 0.0
    %1170 = vmatpush1.msra.mxu0 0.0
    %1171 = vmatprep.subr.mxu0 0.0
    %1172 = vmatpush1.msra.mxu0 0.0
    %1173 = vmatprep.subr.mxu0 0.0
    %1174 = vmatpush1.msra.mxu0 0.0
    %1175 = vmatprep.subr.mxu0 0.0
    %1176 = vmatpush1.msra.mxu0 0.0
    %1177 = vmatprep.subr.mxu0 0.0
    %1178 = vmatpush1.msra.mxu0 0.0
    %1179 = vmatprep.subr.mxu0 0.0
    %1180 = vmatpush1.msra.mxu0 0.0
    %1181 = vmatprep.subr.mxu0 0.0
    %1182 = vmatpush1.msra.mxu0 0.0
    %1183 = vmatprep.subr.mxu0 0.0
    %1184 = vmatpush1.msra.mxu0 0.0
    %1185 = vmatprep.subr.mxu0 0.0
    %1186 = vmatpush1.msra.mxu0 0.0
    %1187 = vmatprep.subr.mxu0 0.0
    %1188 = vmatpush1.msra.mxu0 %v1151
    %1189 = vmatprep.subr.mxu0 0.0
    %1190 = vmatpush1.msra.mxu0 %v1150
    %1191 = vmatprep.subr.mxu0 0.0
    %1192 = vmatpush1.msra.mxu0 %v1149
    %1193 = vmatprep.subr.mxu0 0.0
    %1194 = vmatpush1.msra.mxu0 %v1148
    %1195 = vmatprep.subr.mxu0 0.0
    %1196 = vmatpush2.msra.mxu0 0.0
    %1197 = vmatprep.subr.mxu0 0.0
    %1198 = vmatpush2.msra.mxu0 0.0
    %1199 = vmatprep.subr.mxu0 0.0
    %1200 = vmatpush2.msra.mxu0 0.0
    %1201 = vmatprep.subr.mxu0 0.0
    %1202 = vmatpush2.msra.mxu0 0.0
    %1203 = vmatprep.subr.mxu0 0.0
    %1204 = vmatpush2.msra.mxu0 0.0
    %1205 = vmatprep.subr.mxu0 0.0
    %1206 = vmatpush2.msra.mxu0 0.0
    %1207 = vmatprep.subr.mxu0 0.0
    %1208 = vmatpush2.msra.mxu0 0.0
    %1209 = vmatprep.subr.mxu0 0.0
    %1210 = vmatpush2.msra.mxu0 0.0
    %1211 = vmatprep.subr.mxu0 0.0
    %1212 = vmatpush2.msra.mxu0 0.0
    %1213 = vmatprep.subr.mxu0 0.0
    %1214 = vmatpush2.msra.mxu0 0.0
    %1215 = vmatprep.subr.mxu0 0.0
    %1216 = vmatpush2.msra.mxu0 0.0
    %1217 = vmatprep.subr.mxu0 0.0
    %1218 = vmatpush2.msra.mxu0 0.0
    %1219 = vmatprep.subr.mxu0 0.0
    %1220 = vmatpush2.msra.mxu0 0.0
    %1221 = vmatprep.subr.mxu0 0.0
    %1222 = vmatpush2.msra.mxu0 0.0
    %1223 = vmatprep.subr.mxu0 0.0
    %1224 = vmatpush2.msra.mxu0 0.0
    %1225 = vmatprep.subr.mxu0 0.0
    %1226 = vmatpush2.msra.mxu0 0.0
    %1227 = vmatprep.mubr.f32.mxu0 0.0
    %1228 = vmatmul.mubr.f32.gmra.mxu0 %v1161
    %v1229 = vpop.f32.mrf.mxu0
    %v1230 = vadd.f32 %v1158, %v1229
    %v1231 = vpop.f32.mrf.mxu0
    %1232 = vdwg.mxu0
    %v1233 = vmax.f32 %v1230, 0.0
    %s1234 = scalar_lea.vmem [#allocation2], 256
    %v1235 = vld [vmem:[%s1234] sm:$0xff]
    %v1236 = vld [vmem:[%s1234 + $0x8] sm:$0xff]
    %v1237 = vld [vmem:[%s1234 + $0x10] sm:$0xff]
    %v1238 = vld [vmem:[%s1234 + $0x18] sm:$0xff]
    %s1239 = scalar_lea.vmem %s2, 8
    %v1240 = vld [vmem:[%s1239] sm:$0x1]
    %v1242 = vlaneseq
    %v1243 = vshrl.u32 %v1242, 7
    %v1244 = vsub.s32 0, %v1243
    %v1245 = vrot.slane %v1240, %v1244
    %v1248 = vsel %vm40, %v1233, 0
    %1250 = vmatprep.subr.mxu0 0.0
    %1251 = vmatpush1.msra.mxu0 0.0
    %1252 = vmatprep.subr.mxu0 0.0
    %1253 = vmatpush1.msra.mxu0 0.0
    %1254 = vmatprep.subr.mxu0 0.0
    %1255 = vmatpush1.msra.mxu0 0.0
    %1256 = vmatprep.subr.mxu0 0.0
    %1257 = vmatpush1.msra.mxu0 0.0
    %1258 = vmatprep.subr.mxu0 0.0
    %1259 = vmatpush1.msra.mxu0 0.0
    %1260 = vmatprep.subr.mxu0 0.0
    %1261 = vmatpush1.msra.mxu0 0.0
    %1262 = vmatprep.subr.mxu0 0.0
    %1263 = vmatpush1.msra.mxu0 0.0
    %1264 = vmatprep.subr.mxu0 0.0
    %1265 = vmatpush1.msra.mxu0 0.0
    %1266 = vmatprep.subr.mxu0 0.0
    %1267 = vmatpush1.msra.mxu0 0.0
    %1268 = vmatprep.subr.mxu0 0.0
    %1269 = vmatpush1.msra.mxu0 0.0
    %1270 = vmatprep.subr.mxu0 0.0
    %1271 = vmatpush1.msra.mxu0 0.0
    %1272 = vmatprep.subr.mxu0 0.0
    %1273 = vmatpush1.msra.mxu0 0.0
    %1274 = vmatprep.subr.mxu0 0.0
    %1275 = vmatpush1.msra.mxu0 %v1238
    %1276 = vmatprep.subr.mxu0 0.0
    %1277 = vmatpush1.msra.mxu0 %v1237
    %1278 = vmatprep.subr.mxu0 0.0
    %1279 = vmatpush1.msra.mxu0 %v1236
    %1280 = vmatprep.subr.mxu0 0.0
    %1281 = vmatpush1.msra.mxu0 %v1235
    %1282 = vmatprep.subr.mxu0 0.0
    %1283 = vmatpush2.msra.mxu0 0.0
    %1284 = vmatprep.subr.mxu0 0.0
    %1285 = vmatpush2.msra.mxu0 0.0
    %1286 = vmatprep.subr.mxu0 0.0
    %1287 = vmatpush2.msra.mxu0 0.0
    %1288 = vmatprep.subr.mxu0 0.0
    %1289 = vmatpush2.msra.mxu0 0.0
    %1290 = vmatprep.subr.mxu0 0.0
    %1291 = vmatpush2.msra.mxu0 0.0
    %1292 = vmatprep.subr.mxu0 0.0
    %1293 = vmatpush2.msra.mxu0 0.0
    %1294 = vmatprep.subr.mxu0 0.0
    %1295 = vmatpush2.msra.mxu0 0.0
    %1296 = vmatprep.subr.mxu0 0.0
    %1297 = vmatpush2.msra.mxu0 0.0
    %1298 = vmatprep.subr.mxu0 0.0
    %1299 = vmatpush2.msra.mxu0 0.0
    %1300 = vmatprep.subr.mxu0 0.0
    %1301 = vmatpush2.msra.mxu0 0.0
    %1302 = vmatprep.subr.mxu0 0.0
    %1303 = vmatpush2.msra.mxu0 0.0
    %1304 = vmatprep.subr.mxu0 0.0
    %1305 = vmatpush2.msra.mxu0 0.0
    %1306 = vmatprep.subr.mxu0 0.0
    %1307 = vmatpush2.msra.mxu0 0.0
    %1308 = vmatprep.subr.mxu0 0.0
    %1309 = vmatpush2.msra.mxu0 0.0
    %1310 = vmatprep.subr.mxu0 0.0
    %1311 = vmatpush2.msra.mxu0 0.0
    %1312 = vmatprep.subr.mxu0 0.0
    %1313 = vmatpush2.msra.mxu0 0.0
    %1314 = vmatprep.mubr.f32.mxu0 0.0
    %1315 = vmatmul.mubr.f32.gmra.mxu0 %v1248
    %v1316 = vpop.f32.mrf.mxu0
    %v1317 = vadd.f32 %v1245, %v1316
    %v1318 = vpop.f32.mrf.mxu0
    %1319 = vdwg.mxu0
    %s1320 = scalar_lea.vmem [#allocation2], 288
    %v1321 = vld [vmem:[%s1320] sm:$0xff]
    %v1322 = vld [vmem:[%s1320 + $0x8] sm:$0xff]
    %v1323 = vld [vmem:[%s1320 + $0x10] sm:$0xff]
    %v1324 = vld [vmem:[%s1320 + $0x18] sm:$0xff]
    %s1325 = scalar_lea.vmem %s2, 9
    %v1326 = vld [vmem:[%s1325] sm:$0x1]
    %v1328 = vlaneseq
    %v1329 = vshrl.u32 %v1328, 7
    %v1330 = vsub.s32 0, %v1329
    %v1331 = vrot.slane %v1326, %v1330
    %v1334 = vsel %vm40, %v1317, 0
    %1336 = vmatprep.subr.mxu0 0.0
    %1337 = vmatpush1.msra.mxu0 0.0
    %1338 = vmatprep.subr.mxu0 0.0
    %1339 = vmatpush1.msra.mxu0 0.0
    %1340 = vmatprep.subr.mxu0 0.0
    %1341 = vmatpush1.msra.mxu0 0.0
    %1342 = vmatprep.subr.mxu0 0.0
    %1343 = vmatpush1.msra.mxu0 0.0
    %1344 = vmatprep.subr.mxu0 0.0
    %1345 = vmatpush1.msra.mxu0 0.0
    %1346 = vmatprep.subr.mxu0 0.0
    %1347 = vmatpush1.msra.mxu0 0.0
    %1348 = vmatprep.subr.mxu0 0.0
    %1349 = vmatpush1.msra.mxu0 0.0
    %1350 = vmatprep.subr.mxu0 0.0
    %1351 = vmatpush1.msra.mxu0 0.0
    %1352 = vmatprep.subr.mxu0 0.0
    %1353 = vmatpush1.msra.mxu0 0.0
    %1354 = vmatprep.subr.mxu0 0.0
    %1355 = vmatpush1.msra.mxu0 0.0
    %1356 = vmatprep.subr.mxu0 0.0
    %1357 = vmatpush1.msra.mxu0 0.0
    %1358 = vmatprep.subr.mxu0 0.0
    %1359 = vmatpush1.msra.mxu0 0.0
    %1360 = vmatprep.subr.mxu0 0.0
    %1361 = vmatpush1.msra.mxu0 %v1324
    %1362 = vmatprep.subr.mxu0 0.0
    %1363 = vmatpush1.msra.mxu0 %v1323
    %1364 = vmatprep.subr.mxu0 0.0
    %1365 = vmatpush1.msra.mxu0 %v1322
    %1366 = vmatprep.subr.mxu0 0.0
    %1367 = vmatpush1.msra.mxu0 %v1321
    %1368 = vmatprep.subr.mxu0 0.0
    %1369 = vmatpush2.msra.mxu0 0.0
    %1370 = vmatprep.subr.mxu0 0.0
    %1371 = vmatpush2.msra.mxu0 0.0
    %1372 = vmatprep.subr.mxu0 0.0
    %1373 = vmatpush2.msra.mxu0 0.0
    %1374 = vmatprep.subr.mxu0 0.0
    %1375 = vmatpush2.msra.mxu0 0.0
    %1376 = vmatprep.subr.mxu0 0.0
    %1377 = vmatpush2.msra.mxu0 0.0
    %1378 = vmatprep.subr.mxu0 0.0
    %1379 = vmatpush2.msra.mxu0 0.0
    %1380 = vmatprep.subr.mxu0 0.0
    %1381 = vmatpush2.msra.mxu0 0.0
    %1382 = vmatprep.subr.mxu0 0.0
    %1383 = vmatpush2.msra.mxu0 0.0
    %1384 = vmatprep.subr.mxu0 0.0
    %1385 = vmatpush2.msra.mxu0 0.0
    %1386 = vmatprep.subr.mxu0 0.0
    %1387 = vmatpush2.msra.mxu0 0.0
    %1388 = vmatprep.subr.mxu0 0.0
    %1389 = vmatpush2.msra.mxu0 0.0
    %1390 = vmatprep.subr.mxu0 0.0
    %1391 = vmatpush2.msra.mxu0 0.0
    %1392 = vmatprep.subr.mxu0 0.0
    %1393 = vmatpush2.msra.mxu0 0.0
    %1394 = vmatprep.subr.mxu0 0.0
    %1395 = vmatpush2.msra.mxu0 0.0
    %1396 = vmatprep.subr.mxu0 0.0
    %1397 = vmatpush2.msra.mxu0 0.0
    %1398 = vmatprep.subr.mxu0 0.0
    %1399 = vmatpush2.msra.mxu0 0.0
    %1400 = vmatprep.mubr.f32.mxu0 0.0
    %1401 = vmatmul.mubr.f32.gmra.mxu0 %v1334
    %v1402 = vpop.f32.mrf.mxu0
    %v1403 = vadd.f32 %v1331, %v1402
    %v1404 = vpop.f32.mrf.mxu0
    %1405 = vdwg.mxu0
    %s1406 = scalar_lea.vmem [#allocation2], 320
    %v1407 = vld [vmem:[%s1406] sm:$0xff]
    %v1408 = vld [vmem:[%s1406 + $0x8] sm:$0xff]
    %v1409 = vld [vmem:[%s1406 + $0x10] sm:$0xff]
    %v1410 = vld [vmem:[%s1406 + $0x18] sm:$0xff]
    %s1411 = scalar_lea.vmem %s2, 10
    %v1412 = vld [vmem:[%s1411] sm:$0x1]
    %v1414 = vlaneseq
    %v1415 = vshrl.u32 %v1414, 7
    %v1416 = vsub.s32 0, %v1415
    %v1417 = vrot.slane %v1412, %v1416
    %1419 = vmatprep.subr.mxu0 0.0
    %1420 = vmatpush1.msra.mxu0 0.0
    %1421 = vmatprep.subr.mxu0 0.0
    %1422 = vmatpush1.msra.mxu0 0.0
    %1423 = vmatprep.subr.mxu0 0.0
    %1424 = vmatpush1.msra.mxu0 0.0
    %1425 = vmatprep.subr.mxu0 0.0
    %1426 = vmatpush1.msra.mxu0 0.0
    %1427 = vmatprep.subr.mxu0 0.0
    %1428 = vmatpush1.msra.mxu0 0.0
    %1429 = vmatprep.subr.mxu0 0.0
    %1430 = vmatpush1.msra.mxu0 0.0
    %1431 = vmatprep.subr.mxu0 0.0
    %1432 = vmatpush1.msra.mxu0 0.0
    %1433 = vmatprep.subr.mxu0 0.0
    %1434 = vmatpush1.msra.mxu0 0.0
    %1435 = vmatprep.subr.mxu0 0.0
    %1436 = vmatpush1.msra.mxu0 0.0
    %1437 = vmatprep.subr.mxu0 0.0
    %1438 = vmatpush1.msra.mxu0 0.0
    %1439 = vmatprep.subr.mxu0 0.0
    %1440 = vmatpush1.msra.mxu0 0.0
    %1441 = vmatprep.subr.mxu0 0.0
    %1442 = vmatpush1.msra.mxu0 0.0
    %1443 = vmatprep.subr.mxu0 0.0
    %1444 = vmatpush1.msra.mxu0 %v1410
    %1445 = vmatprep.subr.mxu0 0.0
    %1446 = vmatpush1.msra.mxu0 %v1409
    %1447 = vmatprep.subr.mxu0 0.0
    %1448 = vmatpush1.msra.mxu0 %v1408
    %1449 = vmatprep.subr.mxu0 0.0
    %1450 = vmatpush1.msra.mxu0 %v1407
    %1451 = vmatprep.subr.mxu0 0.0
    %1452 = vmatpush2.msra.mxu0 0.0
    %1453 = vmatprep.subr.mxu0 0.0
    %1454 = vmatpush2.msra.mxu0 0.0
    %1455 = vmatprep.subr.mxu0 0.0
    %1456 = vmatpush2.msra.mxu0 0.0
    %1457 = vmatprep.subr.mxu0 0.0
    %1458 = vmatpush2.msra.mxu0 0.0
    %1459 = vmatprep.subr.mxu0 0.0
    %1460 = vmatpush2.msra.mxu0 0.0
    %1461 = vmatprep.subr.mxu0 0.0
    %1462 = vmatpush2.msra.mxu0 0.0
    %1463 = vmatprep.subr.mxu0 0.0
    %1464 = vmatpush2.msra.mxu0 0.0
    %1465 = vmatprep.subr.mxu0 0.0
    %1466 = vmatpush2.msra.mxu0 0.0
    %1467 = vmatprep.subr.mxu0 0.0
    %1468 = vmatpush2.msra.mxu0 0.0
    %1469 = vmatprep.subr.mxu0 0.0
    %1470 = vmatpush2.msra.mxu0 0.0
    %1471 = vmatprep.subr.mxu0 0.0
    %1472 = vmatpush2.msra.mxu0 0.0
    %1473 = vmatprep.subr.mxu0 0.0
    %1474 = vmatpush2.msra.mxu0 0.0
    %1475 = vmatprep.subr.mxu0 0.0
    %1476 = vmatpush2.msra.mxu0 0.0
    %1477 = vmatprep.subr.mxu0 0.0
    %1478 = vmatpush2.msra.mxu0 0.0
    %1479 = vmatprep.subr.mxu0 0.0
    %1480 = vmatpush2.msra.mxu0 0.0
    %1481 = vmatprep.subr.mxu0 0.0
    %1482 = vmatpush2.msra.mxu0 0.0
    %1483 = vmatprep.mubr.f32.mxu0 0.0
    %1484 = vmatmul.mubr.f32.gmra.mxu0 %v1334
    %v1485 = vpop.f32.mrf.mxu0
    %v1486 = vadd.f32 %v1417, %v1485
    %v1487 = vpop.f32.mrf.mxu0
    %1488 = vdwg.mxu0
    %s1489 = scalar_lea.vmem [#allocation2], 352
    %v1490 = vld [vmem:[%s1489] sm:$0xff]
    %v1491 = vld [vmem:[%s1489 + $0x8] sm:$0xff]
    %v1492 = vld [vmem:[%s1489 + $0x10] sm:$0xff]
    %v1493 = vld [vmem:[%s1489 + $0x18] sm:$0xff]
    %s1494 = scalar_lea.vmem %s2, 11
    %v1495 = vld [vmem:[%s1494] sm:$0x1]
    %v1497 = vlaneseq
    %v1498 = vshrl.u32 %v1497, 7
    %v1499 = vsub.s32 0, %v1498
    %v1500 = vrot.slane %v1495, %v1499
    %1502 = vmatprep.subr.mxu0 0.0
    %1503 = vmatpush1.msra.mxu0 0.0
    %1504 = vmatprep.subr.mxu0 0.0
    %1505 = vmatpush1.msra.mxu0 0.0
    %1506 = vmatprep.subr.mxu0 0.0
    %1507 = vmatpush1.msra.mxu0 0.0
    %1508 = vmatprep.subr.mxu0 0.0
    %1509 = vmatpush1.msra.mxu0 0.0
    %1510 = vmatprep.subr.mxu0 0.0
    %1511 = vmatpush1.msra.mxu0 0.0
    %1512 = vmatprep.subr.mxu0 0.0
    %1513 = vmatpush1.msra.mxu0 0.0
    %1514 = vmatprep.subr.mxu0 0.0
    %1515 = vmatpush1.msra.mxu0 0.0
    %1516 = vmatprep.subr.mxu0 0.0
    %1517 = vmatpush1.msra.mxu0 0.0
    %1518 = vmatprep.subr.mxu0 0.0
    %1519 = vmatpush1.msra.mxu0 0.0
    %1520 = vmatprep.subr.mxu0 0.0
    %1521 = vmatpush1.msra.mxu0 0.0
    %1522 = vmatprep.subr.mxu0 0.0
    %1523 = vmatpush1.msra.mxu0 0.0
    %1524 = vmatprep.subr.mxu0 0.0
    %1525 = vmatpush1.msra.mxu0 0.0
    %1526 = vmatprep.subr.mxu0 0.0
    %1527 = vmatpush1.msra.mxu0 %v1493
    %1528 = vmatprep.subr.mxu0 0.0
    %1529 = vmatpush1.msra.mxu0 %v1492
    %1530 = vmatprep.subr.mxu0 0.0
    %1531 = vmatpush1.msra.mxu0 %v1491
    %1532 = vmatprep.subr.mxu0 0.0
    %1533 = vmatpush1.msra.mxu0 %v1490
    %1534 = vmatprep.subr.mxu0 0.0
    %1535 = vmatpush2.msra.mxu0 0.0
    %1536 = vmatprep.subr.mxu0 0.0
    %1537 = vmatpush2.msra.mxu0 0.0
    %1538 = vmatprep.subr.mxu0 0.0
    %1539 = vmatpush2.msra.mxu0 0.0
    %1540 = vmatprep.subr.mxu0 0.0
    %1541 = vmatpush2.msra.mxu0 0.0
    %1542 = vmatprep.subr.mxu0 0.0
    %1543 = vmatpush2.msra.mxu0 0.0
    %1544 = vmatprep.subr.mxu0 0.0
    %1545 = vmatpush2.msra.mxu0 0.0
    %1546 = vmatprep.subr.mxu0 0.0
    %1547 = vmatpush2.msra.mxu0 0.0
    %1548 = vmatprep.subr.mxu0 0.0
    %1549 = vmatpush2.msra.mxu0 0.0
    %1550 = vmatprep.subr.mxu0 0.0
    %1551 = vmatpush2.msra.mxu0 0.0
    %1552 = vmatprep.subr.mxu0 0.0
    %1553 = vmatpush2.msra.mxu0 0.0
    %1554 = vmatprep.subr.mxu0 0.0
    %1555 = vmatpush2.msra.mxu0 0.0
    %1556 = vmatprep.subr.mxu0 0.0
    %1557 = vmatpush2.msra.mxu0 0.0
    %1558 = vmatprep.subr.mxu0 0.0
    %1559 = vmatpush2.msra.mxu0 0.0
    %1560 = vmatprep.subr.mxu0 0.0
    %1561 = vmatpush2.msra.mxu0 0.0
    %1562 = vmatprep.subr.mxu0 0.0
    %1563 = vmatpush2.msra.mxu0 0.0
    %1564 = vmatprep.subr.mxu0 0.0
    %1565 = vmatpush2.msra.mxu0 0.0
    %1566 = vmatprep.mubr.f32.mxu0 0.0
    %1567 = vmatmul.mubr.f32.gmra.mxu0 %v42
    %v1568 = vpop.f32.mrf.mxu0
    %v1569 = vadd.f32 %v1500, %v1568
    %v1570 = vpop.f32.mrf.mxu0
    %1571 = vdwg.mxu0
    %v1572 = vmax.f32 %v1569, 0.0
    %s1573 = scalar_lea.vmem [#allocation2], 384
    %v1574 = vld [vmem:[%s1573] sm:$0xff]
    %v1575 = vld [vmem:[%s1573 + $0x8] sm:$0xff]
    %v1576 = vld [vmem:[%s1573 + $0x10] sm:$0xff]
    %v1577 = vld [vmem:[%s1573 + $0x18] sm:$0xff]
    %s1578 = scalar_lea.vmem %s2, 12
    %v1579 = vld [vmem:[%s1578] sm:$0x1]
    %v1581 = vlaneseq
    %v1582 = vshrl.u32 %v1581, 7
    %v1583 = vsub.s32 0, %v1582
    %v1584 = vrot.slane %v1579, %v1583
    %v1587 = vsel %vm40, %v1572, 0
    %1589 = vmatprep.subr.mxu0 0.0
    %1590 = vmatpush1.msra.mxu0 0.0
    %1591 = vmatprep.subr.mxu0 0.0
    %1592 = vmatpush1.msra.mxu0 0.0
    %1593 = vmatprep.subr.mxu0 0.0
    %1594 = vmatpush1.msra.mxu0 0.0
    %1595 = vmatprep.subr.mxu0 0.0
    %1596 = vmatpush1.msra.mxu0 0.0
    %1597 = vmatprep.subr.mxu0 0.0
    %1598 = vmatpush1.msra.mxu0 0.0
    %1599 = vmatprep.subr.mxu0 0.0
    %1600 = vmatpush1.msra.mxu0 0.0
    %1601 = vmatprep.subr.mxu0 0.0
    %1602 = vmatpush1.msra.mxu0 0.0
    %1603 = vmatprep.subr.mxu0 0.0
    %1604 = vmatpush1.msra.mxu0 0.0
    %1605 = vmatprep.subr.mxu0 0.0
    %1606 = vmatpush1.msra.mxu0 0.0
    %1607 = vmatprep.subr.mxu0 0.0
    %1608 = vmatpush1.msra.mxu0 0.0
    %1609 = vmatprep.subr.mxu0 0.0
    %1610 = vmatpush1.msra.mxu0 0.0
    %1611 = vmatprep.subr.mxu0 0.0
    %1612 = vmatpush1.msra.mxu0 0.0
    %1613 = vmatprep.subr.mxu0 0.0
    %1614 = vmatpush1.msra.mxu0 %v1577
    %1615 = vmatprep.subr.mxu0 0.0
    %1616 = vmatpush1.msra.mxu0 %v1576
    %1617 = vmatprep.subr.mxu0 0.0
    %1618 = vmatpush1.msra.mxu0 %v1575
    %1619 = vmatprep.subr.mxu0 0.0
    %1620 = vmatpush1.msra.mxu0 %v1574
    %1621 = vmatprep.subr.mxu0 0.0
    %1622 = vmatpush2.msra.mxu0 0.0
    %1623 = vmatprep.subr.mxu0 0.0
    %1624 = vmatpush2.msra.mxu0 0.0
    %1625 = vmatprep.subr.mxu0 0.0
    %1626 = vmatpush2.msra.mxu0 0.0
    %1627 = vmatprep.subr.mxu0 0.0
    %1628 = vmatpush2.msra.mxu0 0.0
    %1629 = vmatprep.subr.mxu0 0.0
    %1630 = vmatpush2.msra.mxu0 0.0
    %1631 = vmatprep.subr.mxu0 0.0
    %1632 = vmatpush2.msra.mxu0 0.0
    %1633 = vmatprep.subr.mxu0 0.0
    %1634 = vmatpush2.msra.mxu0 0.0
    %1635 = vmatprep.subr.mxu0 0.0
    %1636 = vmatpush2.msra.mxu0 0.0
    %1637 = vmatprep.subr.mxu0 0.0
    %1638 = vmatpush2.msra.mxu0 0.0
    %1639 = vmatprep.subr.mxu0 0.0
    %1640 = vmatpush2.msra.mxu0 0.0
    %1641 = vmatprep.subr.mxu0 0.0
    %1642 = vmatpush2.msra.mxu0 0.0
    %1643 = vmatprep.subr.mxu0 0.0
    %1644 = vmatpush2.msra.mxu0 0.0
    %1645 = vmatprep.subr.mxu0 0.0
    %1646 = vmatpush2.msra.mxu0 0.0
    %1647 = vmatprep.subr.mxu0 0.0
    %1648 = vmatpush2.msra.mxu0 0.0
    %1649 = vmatprep.subr.mxu0 0.0
    %1650 = vmatpush2.msra.mxu0 0.0
    %1651 = vmatprep.subr.mxu0 0.0
    %1652 = vmatpush2.msra.mxu0 0.0
    %1653 = vmatprep.mubr.f32.mxu0 0.0
    %1654 = vmatmul.mubr.f32.gmra.mxu0 %v1587
    %v1655 = vpop.f32.mrf.mxu0
    %v1656 = vadd.f32 %v1584, %v1655
    %v1657 = vpop.f32.mrf.mxu0
    %1658 = vdwg.mxu0
    %v1659 = vmax.f32 %v1656, 0.0
    %s1660 = scalar_lea.vmem [#allocation2], 416
    %v1661 = vld [vmem:[%s1660] sm:$0xff]
    %v1662 = vld [vmem:[%s1660 + $0x8] sm:$0xff]
    %v1663 = vld [vmem:[%s1660 + $0x10] sm:$0xff]
    %v1664 = vld [vmem:[%s1660 + $0x18] sm:$0xff]
    %s1665 = scalar_lea.vmem %s2, 13
    %v1666 = vld [vmem:[%s1665] sm:$0x1]
    %v1668 = vlaneseq
    %v1669 = vshrl.u32 %v1668, 7
    %v1670 = vsub.s32 0, %v1669
    %v1671 = vrot.slane %v1666, %v1670
    %v1674 = vsel %vm40, %v1659, 0
    %1676 = vmatprep.subr.mxu0 0.0
    %1677 = vmatpush1.msra.mxu0 0.0
    %1678 = vmatprep.subr.mxu0 0.0
    %1679 = vmatpush1.msra.mxu0 0.0
    %1680 = vmatprep.subr.mxu0 0.0
    %1681 = vmatpush1.msra.mxu0 0.0
    %1682 = vmatprep.subr.mxu0 0.0
    %1683 = vmatpush1.msra.mxu0 0.0
    %1684 = vmatprep.subr.mxu0 0.0
    %1685 = vmatpush1.msra.mxu0 0.0
    %1686 = vmatprep.subr.mxu0 0.0
    %1687 = vmatpush1.msra.mxu0 0.0
    %1688 = vmatprep.subr.mxu0 0.0
    %1689 = vmatpush1.msra.mxu0 0.0
    %1690 = vmatprep.subr.mxu0 0.0
    %1691 = vmatpush1.msra.mxu0 0.0
    %1692 = vmatprep.subr.mxu0 0.0
    %1693 = vmatpush1.msra.mxu0 0.0
    %1694 = vmatprep.subr.mxu0 0.0
    %1695 = vmatpush1.msra.mxu0 0.0
    %1696 = vmatprep.subr.mxu0 0.0
    %1697 = vmatpush1.msra.mxu0 0.0
    %1698 = vmatprep.subr.mxu0 0.0
    %1699 = vmatpush1.msra.mxu0 0.0
    %1700 = vmatprep.subr.mxu0 0.0
    %1701 = vmatpush1.msra.mxu0 %v1664
    %1702 = vmatprep.subr.mxu0 0.0
    %1703 = vmatpush1.msra.mxu0 %v1663
    %1704 = vmatprep.subr.mxu0 0.0
    %1705 = vmatpush1.msra.mxu0 %v1662
    %1706 = vmatprep.subr.mxu0 0.0
    %1707 = vmatpush1.msra.mxu0 %v1661
    %1708 = vmatprep.subr.mxu0 0.0
    %1709 = vmatpush2.msra.mxu0 0.0
    %1710 = vmatprep.subr.mxu0 0.0
    %1711 = vmatpush2.msra.mxu0 0.0
    %1712 = vmatprep.subr.mxu0 0.0
    %1713 = vmatpush2.msra.mxu0 0.0
    %1714 = vmatprep.subr.mxu0 0.0
    %1715 = vmatpush2.msra.mxu0 0.0
    %1716 = vmatprep.subr.mxu0 0.0
    %1717 = vmatpush2.msra.mxu0 0.0
    %1718 = vmatprep.subr.mxu0 0.0
    %1719 = vmatpush2.msra.mxu0 0.0
    %1720 = vmatprep.subr.mxu0 0.0
    %1721 = vmatpush2.msra.mxu0 0.0
    %1722 = vmatprep.subr.mxu0 0.0
    %1723 = vmatpush2.msra.mxu0 0.0
    %1724 = vmatprep.subr.mxu0 0.0
    %1725 = vmatpush2.msra.mxu0 0.0
    %1726 = vmatprep.subr.mxu0 0.0
    %1727 = vmatpush2.msra.mxu0 0.0
    %1728 = vmatprep.subr.mxu0 0.0
    %1729 = vmatpush2.msra.mxu0 0.0
    %1730 = vmatprep.subr.mxu0 0.0
    %1731 = vmatpush2.msra.mxu0 0.0
    %1732 = vmatprep.subr.mxu0 0.0
    %1733 = vmatpush2.msra.mxu0 0.0
    %1734 = vmatprep.subr.mxu0 0.0
    %1735 = vmatpush2.msra.mxu0 0.0
    %1736 = vmatprep.subr.mxu0 0.0
    %1737 = vmatpush2.msra.mxu0 0.0
    %1738 = vmatprep.subr.mxu0 0.0
    %1739 = vmatpush2.msra.mxu0 0.0
    %1740 = vmatprep.mubr.f32.mxu0 0.0
    %1741 = vmatmul.mubr.f32.gmra.mxu0 %v1674
    %v1742 = vpop.f32.mrf.mxu0
    %v1743 = vadd.f32 %v1671, %v1742
    %v1744 = vpop.f32.mrf.mxu0
    %1745 = vdwg.mxu0
    %s1746 = scalar_lea.vmem [#allocation2], 448
    %v1747 = vld [vmem:[%s1746] sm:$0xff]
    %v1748 = vld [vmem:[%s1746 + $0x8] sm:$0xff]
    %v1749 = vld [vmem:[%s1746 + $0x10] sm:$0xff]
    %v1750 = vld [vmem:[%s1746 + $0x18] sm:$0xff]
    %s1751 = scalar_lea.vmem %s2, 14
    %v1752 = vld [vmem:[%s1751] sm:$0x1]
    %v1754 = vlaneseq
    %v1755 = vshrl.u32 %v1754, 7
    %v1756 = vsub.s32 0, %v1755
    %v1757 = vrot.slane %v1752, %v1756
    %v1760 = vsel %vm40, %v1743, 0
    %1762 = vmatprep.subr.mxu0 0.0
    %1763 = vmatpush1.msra.mxu0 0.0
    %1764 = vmatprep.subr.mxu0 0.0
    %1765 = vmatpush1.msra.mxu0 0.0
    %1766 = vmatprep.subr.mxu0 0.0
    %1767 = vmatpush1.msra.mxu0 0.0
    %1768 = vmatprep.subr.mxu0 0.0
    %1769 = vmatpush1.msra.mxu0 0.0
    %1770 = vmatprep.subr.mxu0 0.0
    %1771 = vmatpush1.msra.mxu0 0.0
    %1772 = vmatprep.subr.mxu0 0.0
    %1773 = vmatpush1.msra.mxu0 0.0
    %1774 = vmatprep.subr.mxu0 0.0
    %1775 = vmatpush1.msra.mxu0 0.0
    %1776 = vmatprep.subr.mxu0 0.0
    %1777 = vmatpush1.msra.mxu0 0.0
    %1778 = vmatprep.subr.mxu0 0.0
    %1779 = vmatpush1.msra.mxu0 0.0
    %1780 = vmatprep.subr.mxu0 0.0
    %1781 = vmatpush1.msra.mxu0 0.0
    %1782 = vmatprep.subr.mxu0 0.0
    %1783 = vmatpush1.msra.mxu0 0.0
    %1784 = vmatprep.subr.mxu0 0.0
    %1785 = vmatpush1.msra.mxu0 0.0
    %1786 = vmatprep.subr.mxu0 0.0
    %1787 = vmatpush1.msra.mxu0 %v1750
    %1788 = vmatprep.subr.mxu0 0.0
    %1789 = vmatpush1.msra.mxu0 %v1749
    %1790 = vmatprep.subr.mxu0 0.0
    %1791 = vmatpush1.msra.mxu0 %v1748
    %1792 = vmatprep.subr.mxu0 0.0
    %1793 = vmatpush1.msra.mxu0 %v1747
    %1794 = vmatprep.subr.mxu0 0.0
    %1795 = vmatpush2.msra.mxu0 0.0
    %1796 = vmatprep.subr.mxu0 0.0
    %1797 = vmatpush2.msra.mxu0 0.0
    %1798 = vmatprep.subr.mxu0 0.0
    %1799 = vmatpush2.msra.mxu0 0.0
    %1800 = vmatprep.subr.mxu0 0.0
    %1801 = vmatpush2.msra.mxu0 0.0
    %1802 = vmatprep.subr.mxu0 0.0
    %1803 = vmatpush2.msra.mxu0 0.0
    %1804 = vmatprep.subr.mxu0 0.0
    %1805 = vmatpush2.msra.mxu0 0.0
    %1806 = vmatprep.subr.mxu0 0.0
    %1807 = vmatpush2.msra.mxu0 0.0
    %1808 = vmatprep.subr.mxu0 0.0
    %1809 = vmatpush2.msra.mxu0 0.0
    %1810 = vmatprep.subr.mxu0 0.0
    %1811 = vmatpush2.msra.mxu0 0.0
    %1812 = vmatprep.subr.mxu0 0.0
    %1813 = vmatpush2.msra.mxu0 0.0
    %1814 = vmatprep.subr.mxu0 0.0
    %1815 = vmatpush2.msra.mxu0 0.0
    %1816 = vmatprep.subr.mxu0 0.0
    %1817 = vmatpush2.msra.mxu0 0.0
    %1818 = vmatprep.subr.mxu0 0.0
    %1819 = vmatpush2.msra.mxu0 0.0
    %1820 = vmatprep.subr.mxu0 0.0
    %1821 = vmatpush2.msra.mxu0 0.0
    %1822 = vmatprep.subr.mxu0 0.0
    %1823 = vmatpush2.msra.mxu0 0.0
    %1824 = vmatprep.subr.mxu0 0.0
    %1825 = vmatpush2.msra.mxu0 0.0
    %1826 = vmatprep.mubr.f32.mxu0 0.0
    %1827 = vmatmul.mubr.f32.gmra.mxu0 %v1760
    %v1828 = vpop.f32.mrf.mxu0
    %v1829 = vadd.f32 %v1757, %v1828
    %v1830 = vpop.f32.mrf.mxu0
    %1831 = vdwg.mxu0
    %s1832 = scalar_lea.vmem [#allocation2], 480
    %v1833 = vld [vmem:[%s1832] sm:$0xff]
    %v1834 = vld [vmem:[%s1832 + $0x8] sm:$0xff]
    %v1835 = vld [vmem:[%s1832 + $0x10] sm:$0xff]
    %v1836 = vld [vmem:[%s1832 + $0x18] sm:$0xff]
    %s1837 = scalar_lea.vmem %s2, 15
    %v1838 = vld [vmem:[%s1837] sm:$0x1]
    %v1840 = vlaneseq
    %v1841 = vshrl.u32 %v1840, 7
    %v1842 = vsub.s32 0, %v1841
    %v1843 = vrot.slane %v1838, %v1842
    %1845 = vmatprep.subr.mxu0 0.0
    %1846 = vmatpush1.msra.mxu0 0.0
    %1847 = vmatprep.subr.mxu0 0.0
    %1848 = vmatpush1.msra.mxu0 0.0
    %1849 = vmatprep.subr.mxu0 0.0
    %1850 = vmatpush1.msra.mxu0 0.0
    %1851 = vmatprep.subr.mxu0 0.0
    %1852 = vmatpush1.msra.mxu0 0.0
    %1853 = vmatprep.subr.mxu0 0.0
    %1854 = vmatpush1.msra.mxu0 0.0
    %1855 = vmatprep.subr.mxu0 0.0
    %1856 = vmatpush1.msra.mxu0 0.0
    %1857 = vmatprep.subr.mxu0 0.0
    %1858 = vmatpush1.msra.mxu0 0.0
    %1859 = vmatprep.subr.mxu0 0.0
    %1860 = vmatpush1.msra.mxu0 0.0
    %1861 = vmatprep.subr.mxu0 0.0
    %1862 = vmatpush1.msra.mxu0 0.0
    %1863 = vmatprep.subr.mxu0 0.0
    %1864 = vmatpush1.msra.mxu0 0.0
    %1865 = vmatprep.subr.mxu0 0.0
    %1866 = vmatpush1.msra.mxu0 0.0
    %1867 = vmatprep.subr.mxu0 0.0
    %1868 = vmatpush1.msra.mxu0 0.0
    %1869 = vmatprep.subr.mxu0 0.0
    %1870 = vmatpush1.msra.mxu0 %v1836
    %1871 = vmatprep.subr.mxu0 0.0
    %1872 = vmatpush1.msra.mxu0 %v1835
    %1873 = vmatprep.subr.mxu0 0.0
    %1874 = vmatpush1.msra.mxu0 %v1834
    %1875 = vmatprep.subr.mxu0 0.0
    %1876 = vmatpush1.msra.mxu0 %v1833
    %1877 = vmatprep.subr.mxu0 0.0
    %1878 = vmatpush2.msra.mxu0 0.0
    %1879 = vmatprep.subr.mxu0 0.0
    %1880 = vmatpush2.msra.mxu0 0.0
    %1881 = vmatprep.subr.mxu0 0.0
    %1882 = vmatpush2.msra.mxu0 0.0
    %1883 = vmatprep.subr.mxu0 0.0
    %1884 = vmatpush2.msra.mxu0 0.0
    %1885 = vmatprep.subr.mxu0 0.0
    %1886 = vmatpush2.msra.mxu0 0.0
    %1887 = vmatprep.subr.mxu0 0.0
    %1888 = vmatpush2.msra.mxu0 0.0
    %1889 = vmatprep.subr.mxu0 0.0
    %1890 = vmatpush2.msra.mxu0 0.0
    %1891 = vmatprep.subr.mxu0 0.0
    %1892 = vmatpush2.msra.mxu0 0.0
    %1893 = vmatprep.subr.mxu0 0.0
    %1894 = vmatpush2.msra.mxu0 0.0
    %1895 = vmatprep.subr.mxu0 0.0
    %1896 = vmatpush2.msra.mxu0 0.0
    %1897 = vmatprep.subr.mxu0 0.0
    %1898 = vmatpush2.msra.mxu0 0.0
    %1899 = vmatprep.subr.mxu0 0.0
    %1900 = vmatpush2.msra.mxu0 0.0
    %1901 = vmatprep.subr.mxu0 0.0
    %1902 = vmatpush2.msra.mxu0 0.0
    %1903 = vmatprep.subr.mxu0 0.0
    %1904 = vmatpush2.msra.mxu0 0.0
    %1905 = vmatprep.subr.mxu0 0.0
    %1906 = vmatpush2.msra.mxu0 0.0
    %1907 = vmatprep.subr.mxu0 0.0
    %1908 = vmatpush2.msra.mxu0 0.0
    %1909 = vmatprep.mubr.f32.mxu0 0.0
    %1910 = vmatmul.mubr.f32.gmra.mxu0 %v1760
    %v1911 = vpop.f32.mrf.mxu0
    %v1912 = vadd.f32 %v1843, %v1911
    %v1913 = vpop.f32.mrf.mxu0
    %1914 = vdwg.mxu0
    %v1915 = vadd.f32 %v803, %v1403
    %v1916 = vadd.f32 %v1060, %v1829
    %v1917 = vmul.f32 %v1486, 0.5
    %v1918 = vmul.f32 %v1917, 1.442695
    %v1919 = vpow.pop %v1918
    %v1920 = vadd.f32 %v1919, 1e-07
    %s1921 = scalar_lea.vmem %s0, 24
    %v1922 = vld [vmem:[%s1921] sm:$0xff]
    %v1923 = vmul.f32 %v1922, %v1920
    %v1924 = vadd.f32 %v1915, %v1923
    %v1925 = vmul.f32 %v1912, 0.5
    %v1926 = vmul.f32 %v1925, 1.442695
    %v1927 = vpow.pop %v1926
    %v1928 = vadd.f32 %v1927, 1e-07
    %s1929 = scalar_lea.vmem %s0, 32
    %v1930 = vld [vmem:[%s1929] sm:$0xff]
    %v1931 = vmul.f32 %v1930, %v1928
    %v1932 = vadd.f32 %v1916, %v1931
    %s1933 = scalar_lea.vmem [#allocation2], 864
    %v1934 = vld [vmem:[%s1933] sm:$0xff]
    %v1935 = vld [vmem:[%s1933 + $0x8] sm:$0xff]
    %v1936 = vld [vmem:[%s1933 + $0x10] sm:$0xff]
    %v1937 = vld [vmem:[%s1933 + $0x18] sm:$0xff]
    %s1938 = scalar_lea.vmem [#allocation2], 896
    %v1939 = vld [vmem:[%s1938] sm:$0xff]
    %v1940 = vld [vmem:[%s1938 + $0x8] sm:$0xff]
    %v1941 = vld [vmem:[%s1938 + $0x10] sm:$0xff]
    %v1942 = vld [vmem:[%s1938 + $0x18] sm:$0xff]
    %1943 = vmatprep.subr.mxu0 0.0
    %1944 = vmatpush1.msra.mxu0 0.0
    %1945 = vmatprep.subr.mxu0 0.0
    %1946 = vmatpush1.msra.mxu0 0.0
    %1947 = vmatprep.subr.mxu0 0.0
    %1948 = vmatpush1.msra.mxu0 0.0
    %1949 = vmatprep.subr.mxu0 0.0
    %1950 = vmatpush1.msra.mxu0 0.0
    %1951 = vmatprep.subr.mxu0 0.0
    %1952 = vmatpush1.msra.mxu0 0.0
    %1953 = vmatprep.subr.mxu0 0.0
    %1954 = vmatpush1.msra.mxu0 0.0
    %1955 = vmatprep.subr.mxu0 0.0
    %1956 = vmatpush1.msra.mxu0 0.0
    %1957 = vmatprep.subr.mxu0 0.0
    %1958 = vmatpush1.msra.mxu0 0.0
    %1959 = vmatprep.subr.mxu0 0.0
    %1960 = vmatpush1.msra.mxu0 0.0
    %1961 = vmatprep.subr.mxu0 0.0
    %1962 = vmatpush1.msra.mxu0 0.0
    %1963 = vmatprep.subr.mxu0 0.0
    %1964 = vmatpush1.msra.mxu0 0.0
    %1965 = vmatprep.subr.mxu0 0.0
    %1966 = vmatpush1.msra.mxu0 0.0
    %1967 = vmatprep.subr.mxu0 0.0
    %1968 = vmatpush1.msra.mxu0 %v1942
    %1969 = vmatprep.subr.mxu0 0.0
    %1970 = vmatpush1.msra.mxu0 %v1941
    %1971 = vmatprep.subr.mxu0 0.0
    %1972 = vmatpush1.msra.mxu0 %v1940
    %1973 = vmatprep.subr.mxu0 0.0
    %1974 = vmatpush1.msra.mxu0 %v1939
    %1975 = vmatprep.subr.mxu0 0.0
    %1976 = vmatpush2.msra.mxu0 0.0
    %1977 = vmatprep.subr.mxu0 0.0
    %1978 = vmatpush2.msra.mxu0 0.0
    %1979 = vmatprep.subr.mxu0 0.0
    %1980 = vmatpush2.msra.mxu0 0.0
    %1981 = vmatprep.subr.mxu0 0.0
    %1982 = vmatpush2.msra.mxu0 0.0
    %1983 = vmatprep.subr.mxu0 0.0
    %1984 = vmatpush2.msra.mxu0 0.0
    %1985 = vmatprep.subr.mxu0 0.0
    %1986 = vmatpush2.msra.mxu0 0.0
    %1987 = vmatprep.subr.mxu0 0.0
    %1988 = vmatpush2.msra.mxu0 0.0
    %1989 = vmatprep.subr.mxu0 0.0
    %1990 = vmatpush2.msra.mxu0 0.0
    %1991 = vmatprep.subr.mxu0 0.0
    %1992 = vmatpush2.msra.mxu0 0.0
    %1993 = vmatprep.subr.mxu0 0.0
    %1994 = vmatpush2.msra.mxu0 0.0
    %1995 = vmatprep.subr.mxu0 0.0
    %1996 = vmatpush2.msra.mxu0 0.0
    %1997 = vmatprep.subr.mxu0 0.0
    %1998 = vmatpush2.msra.mxu0 0.0
    %1999 = vmatprep.subr.mxu0 0.0
    %2000 = vmatpush2.msra.mxu0 0.0
    %2001 = vmatprep.subr.mxu0 0.0
    %2002 = vmatpush2.msra.mxu0 0.0
    %2003 = vmatprep.subr.mxu0 0.0
    %2004 = vmatpush2.msra.mxu0 0.0
    %2005 = vmatprep.subr.mxu0 0.0
    %2006 = vmatpush2.msra.mxu0 0.0
    %2007 = vmatprep.mubr.f32.mxu0 0.0
    %2008 = vmatmul.mubr.f32.gmra.mxu0 %v560
    %v2009 = vpop.f32.mrf.mxu0
    %v2010 = vadd.f32 0.0, %v2009
    %v2011 = vpop.f32.mrf.mxu0
    %2012 = vdwg.mxu0
    %v2014 = vsel %vm40, %v1924, 0
    %2016 = vmatprep.subr.mxu0 0.0
    %2017 = vmatpush1.msra.mxu0 0.0
    %2018 = vmatprep.subr.mxu0 0.0
    %2019 = vmatpush1.msra.mxu0 0.0
    %2020 = vmatprep.subr.mxu0 0.0
    %2021 = vmatpush1.msra.mxu0 0.0
    %2022 = vmatprep.subr.mxu0 0.0
    %2023 = vmatpush1.msra.mxu0 0.0
    %2024 = vmatprep.subr.mxu0 0.0
    %2025 = vmatpush1.msra.mxu0 0.0
    %2026 = vmatprep.subr.mxu0 0.0
    %2027 = vmatpush1.msra.mxu0 0.0
    %2028 = vmatprep.subr.mxu0 0.0
    %2029 = vmatpush1.msra.mxu0 0.0
    %2030 = vmatprep.subr.mxu0 0.0
    %2031 = vmatpush1.msra.mxu0 0.0
    %2032 = vmatprep.subr.mxu0 0.0
    %2033 = vmatpush1.msra.mxu0 0.0
    %2034 = vmatprep.subr.mxu0 0.0
    %2035 = vmatpush1.msra.mxu0 0.0
    %2036 = vmatprep.subr.mxu0 0.0
    %2037 = vmatpush1.msra.mxu0 0.0
    %2038 = vmatprep.subr.mxu0 0.0
    %2039 = vmatpush1.msra.mxu0 0.0
    %2040 = vmatprep.subr.mxu0 0.0
    %2041 = vmatpush1.msra.mxu0 %v1937
    %2042 = vmatprep.subr.mxu0 0.0
    %2043 = vmatpush1.msra.mxu0 %v1936
    %2044 = vmatprep.subr.mxu0 0.0
    %2045 = vmatpush1.msra.mxu0 %v1935
    %2046 = vmatprep.subr.mxu0 0.0
    %2047 = vmatpush1.msra.mxu0 %v1934
    %2048 = vmatprep.subr.mxu0 0.0
    %2049 = vmatpush2.msra.mxu0 0.0
    %2050 = vmatprep.subr.mxu0 0.0
    %2051 = vmatpush2.msra.mxu0 0.0
    %2052 = vmatprep.subr.mxu0 0.0
    %2053 = vmatpush2.msra.mxu0 0.0
    %2054 = vmatprep.subr.mxu0 0.0
    %2055 = vmatpush2.msra.mxu0 0.0
    %2056 = vmatprep.subr.mxu0 0.0
    %2057 = vmatpush2.msra.mxu0 0.0
    %2058 = vmatprep.subr.mxu0 0.0
    %2059 = vmatpush2.msra.mxu0 0.0
    %2060 = vmatprep.subr.mxu0 0.0
    %2061 = vmatpush2.msra.mxu0 0.0
    %2062 = vmatprep.subr.mxu0 0.0
    %2063 = vmatpush2.msra.mxu0 0.0
    %2064 = vmatprep.subr.mxu0 0.0
    %2065 = vmatpush2.msra.mxu0 0.0
    %2066 = vmatprep.subr.mxu0 0.0
    %2067 = vmatpush2.msra.mxu0 0.0
    %2068 = vmatprep.subr.mxu0 0.0
    %2069 = vmatpush2.msra.mxu0 0.0
    %2070 = vmatprep.subr.mxu0 0.0
    %2071 = vmatpush2.msra.mxu0 0.0
    %2072 = vmatprep.subr.mxu0 0.0
    %2073 = vmatpush2.msra.mxu0 0.0
    %2074 = vmatprep.subr.mxu0 0.0
    %2075 = vmatpush2.msra.mxu0 0.0
    %2076 = vmatprep.subr.mxu0 0.0
    %2077 = vmatpush2.msra.mxu0 0.0
    %2078 = vmatprep.subr.mxu0 0.0
    %2079 = vmatpush2.msra.mxu0 0.0
    %2080 = vmatprep.mubr.f32.mxu0 0.0
    %2081 = vmatmul.mubr.f32.gmra.mxu0 %v2014
    %v2082 = vpop.f32.mrf.mxu0
    %v2083 = vadd.f32 %v2010, %v2082
    %v2084 = vpop.f32.mrf.mxu0
    %2085 = vdwg.mxu0
    %s2086 = scalar_lea.vmem %s2, 27
    %v2087 = vld [vmem:[%s2086] sm:$0x1]
    %v2089 = vlaneseq
    %v2090 = vshrl.u32 %v2089, 7
    %v2091 = vsub.s32 0, %v2090
    %v2092 = vrot.slane %v2087, %v2091
    %v2094 = vadd.f32 %v2083, %v2092
    %v2095 = vmax.f32 %v2094, 0.0
    %s2096 = scalar_lea.vmem [#allocation2], 928
    %v2097 = vld [vmem:[%s2096] sm:$0xff]
    %v2098 = vld [vmem:[%s2096 + $0x8] sm:$0xff]
    %v2099 = vld [vmem:[%s2096 + $0x10] sm:$0xff]
    %v2100 = vld [vmem:[%s2096 + $0x18] sm:$0xff]
    %s2101 = scalar_lea.vmem %s2, 29
    %v2102 = vld [vmem:[%s2101] sm:$0x1]
    %v2104 = vlaneseq
    %v2105 = vshrl.u32 %v2104, 7
    %v2106 = vsub.s32 0, %v2105
    %v2107 = vrot.slane %v2102, %v2106
    %v2110 = vsel %vm40, %v2095, 0
    %2112 = vmatprep.subr.mxu0 0.0
    %2113 = vmatpush1.msra.mxu0 0.0
    %2114 = vmatprep.subr.mxu0 0.0
    %2115 = vmatpush1.msra.mxu0 0.0
    %2116 = vmatprep.subr.mxu0 0.0
    %2117 = vmatpush1.msra.mxu0 0.0
    %2118 = vmatprep.subr.mxu0 0.0
    %2119 = vmatpush1.msra.mxu0 0.0
    %2120 = vmatprep.subr.mxu0 0.0
    %2121 = vmatpush1.msra.mxu0 0.0
    %2122 = vmatprep.subr.mxu0 0.0
    %2123 = vmatpush1.msra.mxu0 0.0
    %2124 = vmatprep.subr.mxu0 0.0
    %2125 = vmatpush1.msra.mxu0 0.0
    %2126 = vmatprep.subr.mxu0 0.0
    %2127 = vmatpush1.msra.mxu0 0.0
    %2128 = vmatprep.subr.mxu0 0.0
    %2129 = vmatpush1.msra.mxu0 0.0
    %2130 = vmatprep.subr.mxu0 0.0
    %2131 = vmatpush1.msra.mxu0 0.0
    %2132 = vmatprep.subr.mxu0 0.0
    %2133 = vmatpush1.msra.mxu0 0.0
    %2134 = vmatprep.subr.mxu0 0.0
    %2135 = vmatpush1.msra.mxu0 0.0
    %2136 = vmatprep.subr.mxu0 0.0
    %2137 = vmatpush1.msra.mxu0 %v2100
    %2138 = vmatprep.subr.mxu0 0.0
    %2139 = vmatpush1.msra.mxu0 %v2099
    %2140 = vmatprep.subr.mxu0 0.0
    %2141 = vmatpush1.msra.mxu0 %v2098
    %2142 = vmatprep.subr.mxu0 0.0
    %2143 = vmatpush1.msra.mxu0 %v2097
    %2144 = vmatprep.subr.mxu0 0.0
    %2145 = vmatpush2.msra.mxu0 0.0
    %2146 = vmatprep.subr.mxu0 0.0
    %2147 = vmatpush2.msra.mxu0 0.0
    %2148 = vmatprep.subr.mxu0 0.0
    %2149 = vmatpush2.msra.mxu0 0.0
    %2150 = vmatprep.subr.mxu0 0.0
    %2151 = vmatpush2.msra.mxu0 0.0
    %2152 = vmatprep.subr.mxu0 0.0
    %2153 = vmatpush2.msra.mxu0 0.0
    %2154 = vmatprep.subr.mxu0 0.0
    %2155 = vmatpush2.msra.mxu0 0.0
    %2156 = vmatprep.subr.mxu0 0.0
    %2157 = vmatpush2.msra.mxu0 0.0
    %2158 = vmatprep.subr.mxu0 0.0
    %2159 = vmatpush2.msra.mxu0 0.0
    %2160 = vmatprep.subr.mxu0 0.0
    %2161 = vmatpush2.msra.mxu0 0.0
    %2162 = vmatprep.subr.mxu0 0.0
    %2163 = vmatpush2.msra.mxu0 0.0
    %2164 = vmatprep.subr.mxu0 0.0
    %2165 = vmatpush2.msra.mxu0 0.0
    %2166 = vmatprep.subr.mxu0 0.0
    %2167 = vmatpush2.msra.mxu0 0.0
    %2168 = vmatprep.subr.mxu0 0.0
    %2169 = vmatpush2.msra.mxu0 0.0
    %2170 = vmatprep.subr.mxu0 0.0
    %2171 = vmatpush2.msra.mxu0 0.0
    %2172 = vmatprep.subr.mxu0 0.0
    %2173 = vmatpush2.msra.mxu0 0.0
    %2174 = vmatprep.subr.mxu0 0.0
    %2175 = vmatpush2.msra.mxu0 0.0
    %2176 = vmatprep.mubr.f32.mxu0 0.0
    %2177 = vmatmul.mubr.f32.gmra.mxu0 %v2110
    %v2178 = vpop.f32.mrf.mxu0
    %v2179 = vadd.f32 %v2107, %v2178
    %v2180 = vpop.f32.mrf.mxu0
    %2181 = vdwg.mxu0
    %v2182 = vmax.f32 %v2179, 0.0
    %s2183 = scalar_lea.vmem [#allocation2], 960
    %v2184 = vld [vmem:[%s2183] sm:$0xff]
    %v2185 = vld [vmem:[%s2183 + $0x8] sm:$0xff]
    %v2186 = vld [vmem:[%s2183 + $0x10] sm:$0xff]
    %v2187 = vld [vmem:[%s2183 + $0x18] sm:$0xff]
    %s2188 = scalar_lea.vmem %s2, 30
    %v2189 = vld [vmem:[%s2188] sm:$0x1]
    %v2191 = vlaneseq
    %v2192 = vshrl.u32 %v2191, 7
    %v2193 = vsub.s32 0, %v2192
    %v2194 = vrot.slane %v2189, %v2193
    %v2197 = vsel %vm40, %v2182, 0
    %2199 = vmatprep.subr.mxu0 0.0
    %2200 = vmatpush1.msra.mxu0 0.0
    %2201 = vmatprep.subr.mxu0 0.0
    %2202 = vmatpush1.msra.mxu0 0.0
    %2203 = vmatprep.subr.mxu0 0.0
    %2204 = vmatpush1.msra.mxu0 0.0
    %2205 = vmatprep.subr.mxu0 0.0
    %2206 = vmatpush1.msra.mxu0 0.0
    %2207 = vmatprep.subr.mxu0 0.0
    %2208 = vmatpush1.msra.mxu0 0.0
    %2209 = vmatprep.subr.mxu0 0.0
    %2210 = vmatpush1.msra.mxu0 0.0
    %2211 = vmatprep.subr.mxu0 0.0
    %2212 = vmatpush1.msra.mxu0 0.0
    %2213 = vmatprep.subr.mxu0 0.0
    %2214 = vmatpush1.msra.mxu0 0.0
    %2215 = vmatprep.subr.mxu0 0.0
    %2216 = vmatpush1.msra.mxu0 0.0
    %2217 = vmatprep.subr.mxu0 0.0
    %2218 = vmatpush1.msra.mxu0 0.0
    %2219 = vmatprep.subr.mxu0 0.0
    %2220 = vmatpush1.msra.mxu0 0.0
    %2221 = vmatprep.subr.mxu0 0.0
    %2222 = vmatpush1.msra.mxu0 0.0
    %2223 = vmatprep.subr.mxu0 0.0
    %2224 = vmatpush1.msra.mxu0 %v2187
    %2225 = vmatprep.subr.mxu0 0.0
    %2226 = vmatpush1.msra.mxu0 %v2186
    %2227 = vmatprep.subr.mxu0 0.0
    %2228 = vmatpush1.msra.mxu0 %v2185
    %2229 = vmatprep.subr.mxu0 0.0
    %2230 = vmatpush1.msra.mxu0 %v2184
    %2231 = vmatprep.subr.mxu0 0.0
    %2232 = vmatpush2.msra.mxu0 0.0
    %2233 = vmatprep.subr.mxu0 0.0
    %2234 = vmatpush2.msra.mxu0 0.0
    %2235 = vmatprep.subr.mxu0 0.0
    %2236 = vmatpush2.msra.mxu0 0.0
    %2237 = vmatprep.subr.mxu0 0.0
    %2238 = vmatpush2.msra.mxu0 0.0
    %2239 = vmatprep.subr.mxu0 0.0
    %2240 = vmatpush2.msra.mxu0 0.0
    %2241 = vmatprep.subr.mxu0 0.0
    %2242 = vmatpush2.msra.mxu0 0.0
    %2243 = vmatprep.subr.mxu0 0.0
    %2244 = vmatpush2.msra.mxu0 0.0
    %2245 = vmatprep.subr.mxu0 0.0
    %2246 = vmatpush2.msra.mxu0 0.0
    %2247 = vmatprep.subr.mxu0 0.0
    %2248 = vmatpush2.msra.mxu0 0.0
    %2249 = vmatprep.subr.mxu0 0.0
    %2250 = vmatpush2.msra.mxu0 0.0
    %2251 = vmatprep.subr.mxu0 0.0
    %2252 = vmatpush2.msra.mxu0 0.0
    %2253 = vmatprep.subr.mxu0 0.0
    %2254 = vmatpush2.msra.mxu0 0.0
    %2255 = vmatprep.subr.mxu0 0.0
    %2256 = vmatpush2.msra.mxu0 0.0
    %2257 = vmatprep.subr.mxu0 0.0
    %2258 = vmatpush2.msra.mxu0 0.0
    %2259 = vmatprep.subr.mxu0 0.0
    %2260 = vmatpush2.msra.mxu0 0.0
    %2261 = vmatprep.subr.mxu0 0.0
    %2262 = vmatpush2.msra.mxu0 0.0
    %2263 = vmatprep.mubr.f32.mxu0 0.0
    %2264 = vmatmul.mubr.f32.gmra.mxu0 %v2197
    %v2265 = vpop.f32.mrf.mxu0
    %v2266 = vadd.f32 %v2194, %v2265
    %v2267 = vpop.f32.mrf.mxu0
    %2268 = vdwg.mxu0
    %s2269 = scalar_lea.vmem [#allocation2], 992
    %v2270 = vld [vmem:[%s2269] sm:$0xff]
    %v2271 = vld [vmem:[%s2269 + $0x8] sm:$0xff]
    %v2272 = vld [vmem:[%s2269 + $0x10] sm:$0xff]
    %v2273 = vld [vmem:[%s2269 + $0x18] sm:$0xff]
    %s2274 = scalar_lea.vmem [#allocation2], 1024
    %v2275 = vld [vmem:[%s2274] sm:$0xff]
    %v2276 = vld [vmem:[%s2274 + $0x8] sm:$0xff]
    %v2277 = vld [vmem:[%s2274 + $0x10] sm:$0xff]
    %v2278 = vld [vmem:[%s2274 + $0x18] sm:$0xff]
    %2279 = vmatprep.subr.mxu0 0.0
    %2280 = vmatpush1.msra.mxu0 0.0
    %2281 = vmatprep.subr.mxu0 0.0
    %2282 = vmatpush1.msra.mxu0 0.0
    %2283 = vmatprep.subr.mxu0 0.0
    %2284 = vmatpush1.msra.mxu0 0.0
    %2285 = vmatprep.subr.mxu0 0.0
    %2286 = vmatpush1.msra.mxu0 0.0
    %2287 = vmatprep.subr.mxu0 0.0
    %2288 = vmatpush1.msra.mxu0 0.0
    %2289 = vmatprep.subr.mxu0 0.0
    %2290 = vmatpush1.msra.mxu0 0.0
    %2291 = vmatprep.subr.mxu0 0.0
    %2292 = vmatpush1.msra.mxu0 0.0
    %2293 = vmatprep.subr.mxu0 0.0
    %2294 = vmatpush1.msra.mxu0 0.0
    %2295 = vmatprep.subr.mxu0 0.0
    %2296 = vmatpush1.msra.mxu0 0.0
    %2297 = vmatprep.subr.mxu0 0.0
    %2298 = vmatpush1.msra.mxu0 0.0
    %2299 = vmatprep.subr.mxu0 0.0
    %2300 = vmatpush1.msra.mxu0 0.0
    %2301 = vmatprep.subr.mxu0 0.0
    %2302 = vmatpush1.msra.mxu0 0.0
    %2303 = vmatprep.subr.mxu0 0.0
    %2304 = vmatpush1.msra.mxu0 %v2278
    %2305 = vmatprep.subr.mxu0 0.0
    %2306 = vmatpush1.msra.mxu0 %v2277
    %2307 = vmatprep.subr.mxu0 0.0
    %2308 = vmatpush1.msra.mxu0 %v2276
    %2309 = vmatprep.subr.mxu0 0.0
    %2310 = vmatpush1.msra.mxu0 %v2275
    %2311 = vmatprep.subr.mxu0 0.0
    %2312 = vmatpush2.msra.mxu0 0.0
    %2313 = vmatprep.subr.mxu0 0.0
    %2314 = vmatpush2.msra.mxu0 0.0
    %2315 = vmatprep.subr.mxu0 0.0
    %2316 = vmatpush2.msra.mxu0 0.0
    %2317 = vmatprep.subr.mxu0 0.0
    %2318 = vmatpush2.msra.mxu0 0.0
    %2319 = vmatprep.subr.mxu0 0.0
    %2320 = vmatpush2.msra.mxu0 0.0
    %2321 = vmatprep.subr.mxu0 0.0
    %2322 = vmatpush2.msra.mxu0 0.0
    %2323 = vmatprep.subr.mxu0 0.0
    %2324 = vmatpush2.msra.mxu0 0.0
    %2325 = vmatprep.subr.mxu0 0.0
    %2326 = vmatpush2.msra.mxu0 0.0
    %2327 = vmatprep.subr.mxu0 0.0
    %2328 = vmatpush2.msra.mxu0 0.0
    %2329 = vmatprep.subr.mxu0 0.0
    %2330 = vmatpush2.msra.mxu0 0.0
    %2331 = vmatprep.subr.mxu0 0.0
    %2332 = vmatpush2.msra.mxu0 0.0
    %2333 = vmatprep.subr.mxu0 0.0
    %2334 = vmatpush2.msra.mxu0 0.0
    %2335 = vmatprep.subr.mxu0 0.0
    %2336 = vmatpush2.msra.mxu0 0.0
    %2337 = vmatprep.subr.mxu0 0.0
    %2338 = vmatpush2.msra.mxu0 0.0
    %2339 = vmatprep.subr.mxu0 0.0
    %2340 = vmatpush2.msra.mxu0 0.0
    %2341 = vmatprep.subr.mxu0 0.0
    %2342 = vmatpush2.msra.mxu0 0.0
    %2343 = vmatprep.mubr.f32.mxu0 0.0
    %2344 = vmatmul.mubr.f32.gmra.mxu0 %v560
    %v2345 = vpop.f32.mrf.mxu0
    %v2346 = vadd.f32 0.0, %v2345
    %v2347 = vpop.f32.mrf.mxu0
    %2348 = vdwg.mxu0
    %v2350 = vsel %vm40, %v1932, 0
    %2352 = vmatprep.subr.mxu0 0.0
    %2353 = vmatpush1.msra.mxu0 0.0
    %2354 = vmatprep.subr.mxu0 0.0
    %2355 = vmatpush1.msra.mxu0 0.0
    %2356 = vmatprep.subr.mxu0 0.0
    %2357 = vmatpush1.msra.mxu0 0.0
    %2358 = vmatprep.subr.mxu0 0.0
    %2359 = vmatpush1.msra.mxu0 0.0
    %2360 = vmatprep.subr.mxu0 0.0
    %2361 = vmatpush1.msra.mxu0 0.0
    %2362 = vmatprep.subr.mxu0 0.0
    %2363 = vmatpush1.msra.mxu0 0.0
    %2364 = vmatprep.subr.mxu0 0.0
    %2365 = vmatpush1.msra.mxu0 0.0
    %2366 = vmatprep.subr.mxu0 0.0
    %2367 = vmatpush1.msra.mxu0 0.0
    %2368 = vmatprep.subr.mxu0 0.0
    %2369 = vmatpush1.msra.mxu0 0.0
    %2370 = vmatprep.subr.mxu0 0.0
    %2371 = vmatpush1.msra.mxu0 0.0
    %2372 = vmatprep.subr.mxu0 0.0
    %2373 = vmatpush1.msra.mxu0 0.0
    %2374 = vmatprep.subr.mxu0 0.0
    %2375 = vmatpush1.msra.mxu0 0.0
    %2376 = vmatprep.subr.mxu0 0.0
    %2377 = vmatpush1.msra.mxu0 %v2273
    %2378 = vmatprep.subr.mxu0 0.0
    %2379 = vmatpush1.msra.mxu0 %v2272
    %2380 = vmatprep.subr.mxu0 0.0
    %2381 = vmatpush1.msra.mxu0 %v2271
    %2382 = vmatprep.subr.mxu0 0.0
    %2383 = vmatpush1.msra.mxu0 %v2270
    %2384 = vmatprep.subr.mxu0 0.0
    %2385 = vmatpush2.msra.mxu0 0.0
    %2386 = vmatprep.subr.mxu0 0.0
    %2387 = vmatpush2.msra.mxu0 0.0
    %2388 = vmatprep.subr.mxu0 0.0
    %2389 = vmatpush2.msra.mxu0 0.0
    %2390 = vmatprep.subr.mxu0 0.0
    %2391 = vmatpush2.msra.mxu0 0.0
    %2392 = vmatprep.subr.mxu0 0.0
    %2393 = vmatpush2.msra.mxu0 0.0
    %2394 = vmatprep.subr.mxu0 0.0
    %2395 = vmatpush2.msra.mxu0 0.0
    %2396 = vmatprep.subr.mxu0 0.0
    %2397 = vmatpush2.msra.mxu0 0.0
    %2398 = vmatprep.subr.mxu0 0.0
    %2399 = vmatpush2.msra.mxu0 0.0
    %2400 = vmatprep.subr.mxu0 0.0
    %2401 = vmatpush2.msra.mxu0 0.0
    %2402 = vmatprep.subr.mxu0 0.0
    %2403 = vmatpush2.msra.mxu0 0.0
    %2404 = vmatprep.subr.mxu0 0.0
    %2405 = vmatpush2.msra.mxu0 0.0
    %2406 = vmatprep.subr.mxu0 0.0
    %2407 = vmatpush2.msra.mxu0 0.0
    %2408 = vmatprep.subr.mxu0 0.0
    %2409 = vmatpush2.msra.mxu0 0.0
    %2410 = vmatprep.subr.mxu0 0.0
    %2411 = vmatpush2.msra.mxu0 0.0
    %2412 = vmatprep.subr.mxu0 0.0
    %2413 = vmatpush2.msra.mxu0 0.0
    %2414 = vmatprep.subr.mxu0 0.0
    %2415 = vmatpush2.msra.mxu0 0.0
    %2416 = vmatprep.mubr.f32.mxu0 0.0
    %2417 = vmatmul.mubr.f32.gmra.mxu0 %v2350
    %v2418 = vpop.f32.mrf.mxu0
    %v2419 = vadd.f32 %v2346, %v2418
    %v2420 = vpop.f32.mrf.mxu0
    %2421 = vdwg.mxu0
    %s2422 = scalar_lea.vmem %s2, 31
    %v2423 = vld [vmem:[%s2422] sm:$0x1]
    %v2425 = vlaneseq
    %v2426 = vshrl.u32 %v2425, 7
    %v2427 = vsub.s32 0, %v2426
    %v2428 = vrot.slane %v2423, %v2427
    %v2430 = vadd.f32 %v2419, %v2428
    %v2431 = vmax.f32 %v2430, 0.0
    %s2432 = scalar_lea.vmem [#allocation2], 1056
    %v2433 = vld [vmem:[%s2432] sm:$0xff]
    %v2434 = vld [vmem:[%s2432 + $0x8] sm:$0xff]
    %v2435 = vld [vmem:[%s2432 + $0x10] sm:$0xff]
    %v2436 = vld [vmem:[%s2432 + $0x18] sm:$0xff]
    %s2437 = scalar_lea.vmem %s2, 33
    %v2438 = vld [vmem:[%s2437] sm:$0x1]
    %v2440 = vlaneseq
    %v2441 = vshrl.u32 %v2440, 7
    %v2442 = vsub.s32 0, %v2441
    %v2443 = vrot.slane %v2438, %v2442
    %v2446 = vsel %vm40, %v2431, 0
    %2448 = vmatprep.subr.mxu0 0.0
    %2449 = vmatpush1.msra.mxu0 0.0
    %2450 = vmatprep.subr.mxu0 0.0
    %2451 = vmatpush1.msra.mxu0 0.0
    %2452 = vmatprep.subr.mxu0 0.0
    %2453 = vmatpush1.msra.mxu0 0.0
    %2454 = vmatprep.subr.mxu0 0.0
    %2455 = vmatpush1.msra.mxu0 0.0
    %2456 = vmatprep.subr.mxu0 0.0
    %2457 = vmatpush1.msra.mxu0 0.0
    %2458 = vmatprep.subr.mxu0 0.0
    %2459 = vmatpush1.msra.mxu0 0.0
    %2460 = vmatprep.subr.mxu0 0.0
    %2461 = vmatpush1.msra.mxu0 0.0
    %2462 = vmatprep.subr.mxu0 0.0
    %2463 = vmatpush1.msra.mxu0 0.0
    %2464 = vmatprep.subr.mxu0 0.0
    %2465 = vmatpush1.msra.mxu0 0.0
    %2466 = vmatprep.subr.mxu0 0.0
    %2467 = vmatpush1.msra.mxu0 0.0
    %2468 = vmatprep.subr.mxu0 0.0
    %2469 = vmatpush1.msra.mxu0 0.0
    %2470 = vmatprep.subr.mxu0 0.0
    %2471 = vmatpush1.msra.mxu0 0.0
    %2472 = vmatprep.subr.mxu0 0.0
    %2473 = vmatpush1.msra.mxu0 %v2436
    %2474 = vmatprep.subr.mxu0 0.0
    %2475 = vmatpush1.msra.mxu0 %v2435
    %2476 = vmatprep.subr.mxu0 0.0
    %2477 = vmatpush1.msra.mxu0 %v2434
    %2478 = vmatprep.subr.mxu0 0.0
    %2479 = vmatpush1.msra.mxu0 %v2433
    %2480 = vmatprep.subr.mxu0 0.0
    %2481 = vmatpush2.msra.mxu0 0.0
    %2482 = vmatprep.subr.mxu0 0.0
    %2483 = vmatpush2.msra.mxu0 0.0
    %2484 = vmatprep.subr.mxu0 0.0
    %2485 = vmatpush2.msra.mxu0 0.0
    %2486 = vmatprep.subr.mxu0 0.0
    %2487 = vmatpush2.msra.mxu0 0.0
    %2488 = vmatprep.subr.mxu0 0.0
    %2489 = vmatpush2.msra.mxu0 0.0
    %2490 = vmatprep.subr.mxu0 0.0
    %2491 = vmatpush2.msra.mxu0 0.0
    %2492 = vmatprep.subr.mxu0 0.0
    %2493 = vmatpush2.msra.mxu0 0.0
    %2494 = vmatprep.subr.mxu0 0.0
    %2495 = vmatpush2.msra.mxu0 0.0
    %2496 = vmatprep.subr.mxu0 0.0
    %2497 = vmatpush2.msra.mxu0 0.0
    %2498 = vmatprep.subr.mxu0 0.0
    %2499 = vmatpush2.msra.mxu0 0.0
    %2500 = vmatprep.subr.mxu0 0.0
    %2501 = vmatpush2.msra.mxu0 0.0
    %2502 = vmatprep.subr.mxu0 0.0
    %2503 = vmatpush2.msra.mxu0 0.0
    %2504 = vmatprep.subr.mxu0 0.0
    %2505 = vmatpush2.msra.mxu0 0.0
    %2506 = vmatprep.subr.mxu0 0.0
    %2507 = vmatpush2.msra.mxu0 0.0
    %2508 = vmatprep.subr.mxu0 0.0
    %2509 = vmatpush2.msra.mxu0 0.0
    %2510 = vmatprep.subr.mxu0 0.0
    %2511 = vmatpush2.msra.mxu0 0.0
    %2512 = vmatprep.mubr.f32.mxu0 0.0
    %2513 = vmatmul.mubr.f32.gmra.mxu0 %v2446
    %v2514 = vpop.f32.mrf.mxu0
    %v2515 = vadd.f32 %v2443, %v2514
    %v2516 = vpop.f32.mrf.mxu0
    %2517 = vdwg.mxu0
    %v2518 = vmax.f32 %v2515, 0.0
    %s2519 = scalar_lea.vmem [#allocation2], 1088
    %v2520 = vld [vmem:[%s2519] sm:$0xff]
    %v2521 = vld [vmem:[%s2519 + $0x8] sm:$0xff]
    %v2522 = vld [vmem:[%s2519 + $0x10] sm:$0xff]
    %v2523 = vld [vmem:[%s2519 + $0x18] sm:$0xff]
    %s2524 = scalar_lea.vmem %s2, 34
    %v2525 = vld [vmem:[%s2524] sm:$0x1]
    %v2527 = vlaneseq
    %v2528 = vshrl.u32 %v2527, 7
    %v2529 = vsub.s32 0, %v2528
    %v2530 = vrot.slane %v2525, %v2529
    %v2533 = vsel %vm40, %v2518, 0
    %2535 = vmatprep.subr.mxu0 0.0
    %2536 = vmatpush1.msra.mxu0 0.0
    %2537 = vmatprep.subr.mxu0 0.0
    %2538 = vmatpush1.msra.mxu0 0.0
    %2539 = vmatprep.subr.mxu0 0.0
    %2540 = vmatpush1.msra.mxu0 0.0
    %2541 = vmatprep.subr.mxu0 0.0
    %2542 = vmatpush1.msra.mxu0 0.0
    %2543 = vmatprep.subr.mxu0 0.0
    %2544 = vmatpush1.msra.mxu0 0.0
    %2545 = vmatprep.subr.mxu0 0.0
    %2546 = vmatpush1.msra.mxu0 0.0
    %2547 = vmatprep.subr.mxu0 0.0
    %2548 = vmatpush1.msra.mxu0 0.0
    %2549 = vmatprep.subr.mxu0 0.0
    %2550 = vmatpush1.msra.mxu0 0.0
    %2551 = vmatprep.subr.mxu0 0.0
    %2552 = vmatpush1.msra.mxu0 0.0
    %2553 = vmatprep.subr.mxu0 0.0
    %2554 = vmatpush1.msra.mxu0 0.0
    %2555 = vmatprep.subr.mxu0 0.0
    %2556 = vmatpush1.msra.mxu0 0.0
    %2557 = vmatprep.subr.mxu0 0.0
    %2558 = vmatpush1.msra.mxu0 0.0
    %2559 = vmatprep.subr.mxu0 0.0
    %2560 = vmatpush1.msra.mxu0 %v2523
    %2561 = vmatprep.subr.mxu0 0.0
    %2562 = vmatpush1.msra.mxu0 %v2522
    %2563 = vmatprep.subr.mxu0 0.0
    %2564 = vmatpush1.msra.mxu0 %v2521
    %2565 = vmatprep.subr.mxu0 0.0
    %2566 = vmatpush1.msra.mxu0 %v2520
    %2567 = vmatprep.subr.mxu0 0.0
    %2568 = vmatpush2.msra.mxu0 0.0
    %2569 = vmatprep.subr.mxu0 0.0
    %2570 = vmatpush2.msra.mxu0 0.0
    %2571 = vmatprep.subr.mxu0 0.0
    %2572 = vmatpush2.msra.mxu0 0.0
    %2573 = vmatprep.subr.mxu0 0.0
    %2574 = vmatpush2.msra.mxu0 0.0
    %2575 = vmatprep.subr.mxu0 0.0
    %2576 = vmatpush2.msra.mxu0 0.0
    %2577 = vmatprep.subr.mxu0 0.0
    %2578 = vmatpush2.msra.mxu0 0.0
    %2579 = vmatprep.subr.mxu0 0.0
    %2580 = vmatpush2.msra.mxu0 0.0
    %2581 = vmatprep.subr.mxu0 0.0
    %2582 = vmatpush2.msra.mxu0 0.0
    %2583 = vmatprep.subr.mxu0 0.0
    %2584 = vmatpush2.msra.mxu0 0.0
    %2585 = vmatprep.subr.mxu0 0.0
    %2586 = vmatpush2.msra.mxu0 0.0
    %2587 = vmatprep.subr.mxu0 0.0
    %2588 = vmatpush2.msra.mxu0 0.0
    %2589 = vmatprep.subr.mxu0 0.0
    %2590 = vmatpush2.msra.mxu0 0.0
    %2591 = vmatprep.subr.mxu0 0.0
    %2592 = vmatpush2.msra.mxu0 0.0
    %2593 = vmatprep.subr.mxu0 0.0
    %2594 = vmatpush2.msra.mxu0 0.0
    %2595 = vmatprep.subr.mxu0 0.0
    %2596 = vmatpush2.msra.mxu0 0.0
    %2597 = vmatprep.subr.mxu0 0.0
    %2598 = vmatpush2.msra.mxu0 0.0
    %2599 = vmatprep.mubr.f32.mxu0 0.0
    %2600 = vmatmul.mubr.f32.gmra.mxu0 %v2533
    %v2601 = vpop.f32.mrf.mxu0
    %v2602 = vadd.f32 %v2530, %v2601
    %v2603 = vpop.f32.mrf.mxu0
    %2604 = vdwg.mxu0
    %s2605 = scalar_lea.vmem [#allocation2], 512
    %v2606 = vld [vmem:[%s2605] sm:$0xff]
    %v2607 = vld [vmem:[%s2605 + $0x8] sm:$0xff]
    %v2608 = vld [vmem:[%s2605 + $0x10] sm:$0xff]
    %v2609 = vld [vmem:[%s2605 + $0x18] sm:$0xff]
    %s2610 = scalar_lea.vmem %s2, 16
    %v2611 = vld [vmem:[%s2610] sm:$0x1]
    %v2613 = vlaneseq
    %v2614 = vshrl.u32 %v2613, 7
    %v2615 = vsub.s32 0, %v2614
    %v2616 = vrot.slane %v2611, %v2615
    %2618 = vmatprep.subr.mxu0 0.0
    %2619 = vmatpush1.msra.mxu0 0.0
    %2620 = vmatprep.subr.mxu0 0.0
    %2621 = vmatpush1.msra.mxu0 0.0
    %2622 = vmatprep.subr.mxu0 0.0
    %2623 = vmatpush1.msra.mxu0 0.0
    %2624 = vmatprep.subr.mxu0 0.0
    %2625 = vmatpush1.msra.mxu0 0.0
    %2626 = vmatprep.subr.mxu0 0.0
    %2627 = vmatpush1.msra.mxu0 0.0
    %2628 = vmatprep.subr.mxu0 0.0
    %2629 = vmatpush1.msra.mxu0 0.0
    %2630 = vmatprep.subr.mxu0 0.0
    %2631 = vmatpush1.msra.mxu0 0.0
    %2632 = vmatprep.subr.mxu0 0.0
    %2633 = vmatpush1.msra.mxu0 0.0
    %2634 = vmatprep.subr.mxu0 0.0
    %2635 = vmatpush1.msra.mxu0 0.0
    %2636 = vmatprep.subr.mxu0 0.0
    %2637 = vmatpush1.msra.mxu0 0.0
    %2638 = vmatprep.subr.mxu0 0.0
    %2639 = vmatpush1.msra.mxu0 0.0
    %2640 = vmatprep.subr.mxu0 0.0
    %2641 = vmatpush1.msra.mxu0 0.0
    %2642 = vmatprep.subr.mxu0 0.0
    %2643 = vmatpush1.msra.mxu0 %v2609
    %2644 = vmatprep.subr.mxu0 0.0
    %2645 = vmatpush1.msra.mxu0 %v2608
    %2646 = vmatprep.subr.mxu0 0.0
    %2647 = vmatpush1.msra.mxu0 %v2607
    %2648 = vmatprep.subr.mxu0 0.0
    %2649 = vmatpush1.msra.mxu0 %v2606
    %2650 = vmatprep.subr.mxu0 0.0
    %2651 = vmatpush2.msra.mxu0 0.0
    %2652 = vmatprep.subr.mxu0 0.0
    %2653 = vmatpush2.msra.mxu0 0.0
    %2654 = vmatprep.subr.mxu0 0.0
    %2655 = vmatpush2.msra.mxu0 0.0
    %2656 = vmatprep.subr.mxu0 0.0
    %2657 = vmatpush2.msra.mxu0 0.0
    %2658 = vmatprep.subr.mxu0 0.0
    %2659 = vmatpush2.msra.mxu0 0.0
    %2660 = vmatprep.subr.mxu0 0.0
    %2661 = vmatpush2.msra.mxu0 0.0
    %2662 = vmatprep.subr.mxu0 0.0
    %2663 = vmatpush2.msra.mxu0 0.0
    %2664 = vmatprep.subr.mxu0 0.0
    %2665 = vmatpush2.msra.mxu0 0.0
    %2666 = vmatprep.subr.mxu0 0.0
    %2667 = vmatpush2.msra.mxu0 0.0
    %2668 = vmatprep.subr.mxu0 0.0
    %2669 = vmatpush2.msra.mxu0 0.0
    %2670 = vmatprep.subr.mxu0 0.0
    %2671 = vmatpush2.msra.mxu0 0.0
    %2672 = vmatprep.subr.mxu0 0.0
    %2673 = vmatpush2.msra.mxu0 0.0
    %2674 = vmatprep.subr.mxu0 0.0
    %2675 = vmatpush2.msra.mxu0 0.0
    %2676 = vmatprep.subr.mxu0 0.0
    %2677 = vmatpush2.msra.mxu0 0.0
    %2678 = vmatprep.subr.mxu0 0.0
    %2679 = vmatpush2.msra.mxu0 0.0
    %2680 = vmatprep.subr.mxu0 0.0
    %2681 = vmatpush2.msra.mxu0 0.0
    %2682 = vmatprep.mubr.f32.mxu0 0.0
    %2683 = vmatmul.mubr.f32.gmra.mxu0 %v115
    %v2684 = vpop.f32.mrf.mxu0
    %v2685 = vadd.f32 %v2616, %v2684
    %v2686 = vpop.f32.mrf.mxu0
    %2687 = vdwg.mxu0
    %v2688 = vmax.f32 %v2685, 0.0
    %s2689 = scalar_lea.vmem [#allocation2], 544
    %v2690 = vld [vmem:[%s2689] sm:$0xff]
    %v2691 = vld [vmem:[%s2689 + $0x8] sm:$0xff]
    %v2692 = vld [vmem:[%s2689 + $0x10] sm:$0xff]
    %v2693 = vld [vmem:[%s2689 + $0x18] sm:$0xff]
    %s2694 = scalar_lea.vmem %s2, 17
    %v2695 = vld [vmem:[%s2694] sm:$0x1]
    %v2697 = vlaneseq
    %v2698 = vshrl.u32 %v2697, 7
    %v2699 = vsub.s32 0, %v2698
    %v2700 = vrot.slane %v2695, %v2699
    %v2703 = vsel %vm40, %v2688, 0
    %2705 = vmatprep.subr.mxu0 0.0
    %2706 = vmatpush1.msra.mxu0 0.0
    %2707 = vmatprep.subr.mxu0 0.0
    %2708 = vmatpush1.msra.mxu0 0.0
    %2709 = vmatprep.subr.mxu0 0.0
    %2710 = vmatpush1.msra.mxu0 0.0
    %2711 = vmatprep.subr.mxu0 0.0
    %2712 = vmatpush1.msra.mxu0 0.0
    %2713 = vmatprep.subr.mxu0 0.0
    %2714 = vmatpush1.msra.mxu0 0.0
    %2715 = vmatprep.subr.mxu0 0.0
    %2716 = vmatpush1.msra.mxu0 0.0
    %2717 = vmatprep.subr.mxu0 0.0
    %2718 = vmatpush1.msra.mxu0 0.0
    %2719 = vmatprep.subr.mxu0 0.0
    %2720 = vmatpush1.msra.mxu0 0.0
    %2721 = vmatprep.subr.mxu0 0.0
    %2722 = vmatpush1.msra.mxu0 0.0
    %2723 = vmatprep.subr.mxu0 0.0
    %2724 = vmatpush1.msra.mxu0 0.0
    %2725 = vmatprep.subr.mxu0 0.0
    %2726 = vmatpush1.msra.mxu0 0.0
    %2727 = vmatprep.subr.mxu0 0.0
    %2728 = vmatpush1.msra.mxu0 0.0
    %2729 = vmatprep.subr.mxu0 0.0
    %2730 = vmatpush1.msra.mxu0 %v2693
    %2731 = vmatprep.subr.mxu0 0.0
    %2732 = vmatpush1.msra.mxu0 %v2692
    %2733 = vmatprep.subr.mxu0 0.0
    %2734 = vmatpush1.msra.mxu0 %v2691
    %2735 = vmatprep.subr.mxu0 0.0
    %2736 = vmatpush1.msra.mxu0 %v2690
    %2737 = vmatprep.subr.mxu0 0.0
    %2738 = vmatpush2.msra.mxu0 0.0
    %2739 = vmatprep.subr.mxu0 0.0
    %2740 = vmatpush2.msra.mxu0 0.0
    %2741 = vmatprep.subr.mxu0 0.0
    %2742 = vmatpush2.msra.mxu0 0.0
    %2743 = vmatprep.subr.mxu0 0.0
    %2744 = vmatpush2.msra.mxu0 0.0
    %2745 = vmatprep.subr.mxu0 0.0
    %2746 = vmatpush2.msra.mxu0 0.0
    %2747 = vmatprep.subr.mxu0 0.0
    %2748 = vmatpush2.msra.mxu0 0.0
    %2749 = vmatprep.subr.mxu0 0.0
    %2750 = vmatpush2.msra.mxu0 0.0
    %2751 = vmatprep.subr.mxu0 0.0
    %2752 = vmatpush2.msra.mxu0 0.0
    %2753 = vmatprep.subr.mxu0 0.0
    %2754 = vmatpush2.msra.mxu0 0.0
    %2755 = vmatprep.subr.mxu0 0.0
    %2756 = vmatpush2.msra.mxu0 0.0
    %2757 = vmatprep.subr.mxu0 0.0
    %2758 = vmatpush2.msra.mxu0 0.0
    %2759 = vmatprep.subr.mxu0 0.0
    %2760 = vmatpush2.msra.mxu0 0.0
    %2761 = vmatprep.subr.mxu0 0.0
    %2762 = vmatpush2.msra.mxu0 0.0
    %2763 = vmatprep.subr.mxu0 0.0
    %2764 = vmatpush2.msra.mxu0 0.0
    %2765 = vmatprep.subr.mxu0 0.0
    %2766 = vmatpush2.msra.mxu0 0.0
    %2767 = vmatprep.subr.mxu0 0.0
    %2768 = vmatpush2.msra.mxu0 0.0
    %2769 = vmatprep.mubr.f32.mxu0 0.0
    %2770 = vmatmul.mubr.f32.gmra.mxu0 %v2703
    %v2771 = vpop.f32.mrf.mxu0
    %v2772 = vadd.f32 %v2700, %v2771
    %v2773 = vpop.f32.mrf.mxu0
    %2774 = vdwg.mxu0
    %v2775 = vmax.f32 %v2772, 0.0
    %s2776 = scalar_lea.vmem [#allocation2], 576
    %v2777 = vld [vmem:[%s2776] sm:$0xff]
    %v2778 = vld [vmem:[%s2776 + $0x8] sm:$0xff]
    %v2779 = vld [vmem:[%s2776 + $0x10] sm:$0xff]
    %v2780 = vld [vmem:[%s2776 + $0x18] sm:$0xff]
    %s2781 = scalar_lea.vmem %s2, 18
    %v2782 = vld [vmem:[%s2781] sm:$0x1]
    %v2784 = vlaneseq
    %v2785 = vshrl.u32 %v2784, 7
    %v2786 = vsub.s32 0, %v2785
    %v2787 = vrot.slane %v2782, %v2786
    %v2790 = vsel %vm40, %v2775, 0
    %2792 = vmatprep.subr.mxu0 0.0
    %2793 = vmatpush1.msra.mxu0 0.0
    %2794 = vmatprep.subr.mxu0 0.0
    %2795 = vmatpush1.msra.mxu0 0.0
    %2796 = vmatprep.subr.mxu0 0.0
    %2797 = vmatpush1.msra.mxu0 0.0
    %2798 = vmatprep.subr.mxu0 0.0
    %2799 = vmatpush1.msra.mxu0 0.0
    %2800 = vmatprep.subr.mxu0 0.0
    %2801 = vmatpush1.msra.mxu0 0.0
    %2802 = vmatprep.subr.mxu0 0.0
    %2803 = vmatpush1.msra.mxu0 0.0
    %2804 = vmatprep.subr.mxu0 0.0
    %2805 = vmatpush1.msra.mxu0 0.0
    %2806 = vmatprep.subr.mxu0 0.0
    %2807 = vmatpush1.msra.mxu0 0.0
    %2808 = vmatprep.subr.mxu0 0.0
    %2809 = vmatpush1.msra.mxu0 0.0
    %2810 = vmatprep.subr.mxu0 0.0
    %2811 = vmatpush1.msra.mxu0 0.0
    %2812 = vmatprep.subr.mxu0 0.0
    %2813 = vmatpush1.msra.mxu0 0.0
    %2814 = vmatprep.subr.mxu0 0.0
    %2815 = vmatpush1.msra.mxu0 0.0
    %2816 = vmatprep.subr.mxu0 0.0
    %2817 = vmatpush1.msra.mxu0 %v2780
    %2818 = vmatprep.subr.mxu0 0.0
    %2819 = vmatpush1.msra.mxu0 %v2779
    %2820 = vmatprep.subr.mxu0 0.0
    %2821 = vmatpush1.msra.mxu0 %v2778
    %2822 = vmatprep.subr.mxu0 0.0
    %2823 = vmatpush1.msra.mxu0 %v2777
    %2824 = vmatprep.subr.mxu0 0.0
    %2825 = vmatpush2.msra.mxu0 0.0
    %2826 = vmatprep.subr.mxu0 0.0
    %2827 = vmatpush2.msra.mxu0 0.0
    %2828 = vmatprep.subr.mxu0 0.0
    %2829 = vmatpush2.msra.mxu0 0.0
    %2830 = vmatprep.subr.mxu0 0.0
    %2831 = vmatpush2.msra.mxu0 0.0
    %2832 = vmatprep.subr.mxu0 0.0
    %2833 = vmatpush2.msra.mxu0 0.0
    %2834 = vmatprep.subr.mxu0 0.0
    %2835 = vmatpush2.msra.mxu0 0.0
    %2836 = vmatprep.subr.mxu0 0.0
    %2837 = vmatpush2.msra.mxu0 0.0
    %2838 = vmatprep.subr.mxu0 0.0
    %2839 = vmatpush2.msra.mxu0 0.0
    %2840 = vmatprep.subr.mxu0 0.0
    %2841 = vmatpush2.msra.mxu0 0.0
    %2842 = vmatprep.subr.mxu0 0.0
    %2843 = vmatpush2.msra.mxu0 0.0
    %2844 = vmatprep.subr.mxu0 0.0
    %2845 = vmatpush2.msra.mxu0 0.0
    %2846 = vmatprep.subr.mxu0 0.0
    %2847 = vmatpush2.msra.mxu0 0.0
    %2848 = vmatprep.subr.mxu0 0.0
    %2849 = vmatpush2.msra.mxu0 0.0
    %2850 = vmatprep.subr.mxu0 0.0
    %2851 = vmatpush2.msra.mxu0 0.0
    %2852 = vmatprep.subr.mxu0 0.0
    %2853 = vmatpush2.msra.mxu0 0.0
    %2854 = vmatprep.subr.mxu0 0.0
    %2855 = vmatpush2.msra.mxu0 0.0
    %2856 = vmatprep.mubr.f32.mxu0 0.0
    %2857 = vmatmul.mubr.f32.gmra.mxu0 %v2790
    %v2858 = vpop.f32.mrf.mxu0
    %v2859 = vadd.f32 %v2787, %v2858
    %v2860 = vpop.f32.mrf.mxu0
    %2861 = vdwg.mxu0
    %s2862 = scalar_lea.vmem [#allocation2], 608
    %v2863 = vld [vmem:[%s2862] sm:$0xff]
    %v2864 = vld [vmem:[%s2862 + $0x8] sm:$0xff]
    %v2865 = vld [vmem:[%s2862 + $0x10] sm:$0xff]
    %v2866 = vld [vmem:[%s2862 + $0x18] sm:$0xff]
    %s2867 = scalar_lea.vmem %s2, 19
    %v2868 = vld [vmem:[%s2867] sm:$0x1]
    %v2870 = vlaneseq
    %v2871 = vshrl.u32 %v2870, 7
    %v2872 = vsub.s32 0, %v2871
    %v2873 = vrot.slane %v2868, %v2872
    %v2876 = vsel %vm40, %v2859, 0
    %2878 = vmatprep.subr.mxu0 0.0
    %2879 = vmatpush1.msra.mxu0 0.0
    %2880 = vmatprep.subr.mxu0 0.0
    %2881 = vmatpush1.msra.mxu0 0.0
    %2882 = vmatprep.subr.mxu0 0.0
    %2883 = vmatpush1.msra.mxu0 0.0
    %2884 = vmatprep.subr.mxu0 0.0
    %2885 = vmatpush1.msra.mxu0 0.0
    %2886 = vmatprep.subr.mxu0 0.0
    %2887 = vmatpush1.msra.mxu0 0.0
    %2888 = vmatprep.subr.mxu0 0.0
    %2889 = vmatpush1.msra.mxu0 0.0
    %2890 = vmatprep.subr.mxu0 0.0
    %2891 = vmatpush1.msra.mxu0 0.0
    %2892 = vmatprep.subr.mxu0 0.0
    %2893 = vmatpush1.msra.mxu0 0.0
    %2894 = vmatprep.subr.mxu0 0.0
    %2895 = vmatpush1.msra.mxu0 0.0
    %2896 = vmatprep.subr.mxu0 0.0
    %2897 = vmatpush1.msra.mxu0 0.0
    %2898 = vmatprep.subr.mxu0 0.0
    %2899 = vmatpush1.msra.mxu0 0.0
    %2900 = vmatprep.subr.mxu0 0.0
    %2901 = vmatpush1.msra.mxu0 0.0
    %2902 = vmatprep.subr.mxu0 0.0
    %2903 = vmatpush1.msra.mxu0 %v2866
    %2904 = vmatprep.subr.mxu0 0.0
    %2905 = vmatpush1.msra.mxu0 %v2865
    %2906 = vmatprep.subr.mxu0 0.0
    %2907 = vmatpush1.msra.mxu0 %v2864
    %2908 = vmatprep.subr.mxu0 0.0
    %2909 = vmatpush1.msra.mxu0 %v2863
    %2910 = vmatprep.subr.mxu0 0.0
    %2911 = vmatpush2.msra.mxu0 0.0
    %2912 = vmatprep.subr.mxu0 0.0
    %2913 = vmatpush2.msra.mxu0 0.0
    %2914 = vmatprep.subr.mxu0 0.0
    %2915 = vmatpush2.msra.mxu0 0.0
    %2916 = vmatprep.subr.mxu0 0.0
    %2917 = vmatpush2.msra.mxu0 0.0
    %2918 = vmatprep.subr.mxu0 0.0
    %2919 = vmatpush2.msra.mxu0 0.0
    %2920 = vmatprep.subr.mxu0 0.0
    %2921 = vmatpush2.msra.mxu0 0.0
    %2922 = vmatprep.subr.mxu0 0.0
    %2923 = vmatpush2.msra.mxu0 0.0
    %2924 = vmatprep.subr.mxu0 0.0
    %2925 = vmatpush2.msra.mxu0 0.0
    %2926 = vmatprep.subr.mxu0 0.0
    %2927 = vmatpush2.msra.mxu0 0.0
    %2928 = vmatprep.subr.mxu0 0.0
    %2929 = vmatpush2.msra.mxu0 0.0
    %2930 = vmatprep.subr.mxu0 0.0
    %2931 = vmatpush2.msra.mxu0 0.0
    %2932 = vmatprep.subr.mxu0 0.0
    %2933 = vmatpush2.msra.mxu0 0.0
    %2934 = vmatprep.subr.mxu0 0.0
    %2935 = vmatpush2.msra.mxu0 0.0
    %2936 = vmatprep.subr.mxu0 0.0
    %2937 = vmatpush2.msra.mxu0 0.0
    %2938 = vmatprep.subr.mxu0 0.0
    %2939 = vmatpush2.msra.mxu0 0.0
    %2940 = vmatprep.subr.mxu0 0.0
    %2941 = vmatpush2.msra.mxu0 0.0
    %2942 = vmatprep.mubr.f32.mxu0 0.0
    %2943 = vmatmul.mubr.f32.gmra.mxu0 %v2876
    %v2944 = vpop.f32.mrf.mxu0
    %v2945 = vadd.f32 %v2873, %v2944
    %v2946 = vpop.f32.mrf.mxu0
    %2947 = vdwg.mxu0
    %s2948 = scalar_lea.vmem [#allocation2], 640
    %v2949 = vld [vmem:[%s2948] sm:$0xff]
    %v2950 = vld [vmem:[%s2948 + $0x8] sm:$0xff]
    %v2951 = vld [vmem:[%s2948 + $0x10] sm:$0xff]
    %v2952 = vld [vmem:[%s2948 + $0x18] sm:$0xff]
    %s2953 = scalar_lea.vmem %s2, 20
    %v2954 = vld [vmem:[%s2953] sm:$0x1]
    %v2956 = vlaneseq
    %v2957 = vshrl.u32 %v2956, 7
    %v2958 = vsub.s32 0, %v2957
    %v2959 = vrot.slane %v2954, %v2958
    %2961 = vmatprep.subr.mxu0 0.0
    %2962 = vmatpush1.msra.mxu0 0.0
    %2963 = vmatprep.subr.mxu0 0.0
    %2964 = vmatpush1.msra.mxu0 0.0
    %2965 = vmatprep.subr.mxu0 0.0
    %2966 = vmatpush1.msra.mxu0 0.0
    %2967 = vmatprep.subr.mxu0 0.0
    %2968 = vmatpush1.msra.mxu0 0.0
    %2969 = vmatprep.subr.mxu0 0.0
    %2970 = vmatpush1.msra.mxu0 0.0
    %2971 = vmatprep.subr.mxu0 0.0
    %2972 = vmatpush1.msra.mxu0 0.0
    %2973 = vmatprep.subr.mxu0 0.0
    %2974 = vmatpush1.msra.mxu0 0.0
    %2975 = vmatprep.subr.mxu0 0.0
    %2976 = vmatpush1.msra.mxu0 0.0
    %2977 = vmatprep.subr.mxu0 0.0
    %2978 = vmatpush1.msra.mxu0 0.0
    %2979 = vmatprep.subr.mxu0 0.0
    %2980 = vmatpush1.msra.mxu0 0.0
    %2981 = vmatprep.subr.mxu0 0.0
    %2982 = vmatpush1.msra.mxu0 0.0
    %2983 = vmatprep.subr.mxu0 0.0
    %2984 = vmatpush1.msra.mxu0 0.0
    %2985 = vmatprep.subr.mxu0 0.0
    %2986 = vmatpush1.msra.mxu0 %v2952
    %2987 = vmatprep.subr.mxu0 0.0
    %2988 = vmatpush1.msra.mxu0 %v2951
    %2989 = vmatprep.subr.mxu0 0.0
    %2990 = vmatpush1.msra.mxu0 %v2950
    %2991 = vmatprep.subr.mxu0 0.0
    %2992 = vmatpush1.msra.mxu0 %v2949
    %2993 = vmatprep.subr.mxu0 0.0
    %2994 = vmatpush2.msra.mxu0 0.0
    %2995 = vmatprep.subr.mxu0 0.0
    %2996 = vmatpush2.msra.mxu0 0.0
    %2997 = vmatprep.subr.mxu0 0.0
    %2998 = vmatpush2.msra.mxu0 0.0
    %2999 = vmatprep.subr.mxu0 0.0
    %3000 = vmatpush2.msra.mxu0 0.0
    %3001 = vmatprep.subr.mxu0 0.0
    %3002 = vmatpush2.msra.mxu0 0.0
    %3003 = vmatprep.subr.mxu0 0.0
    %3004 = vmatpush2.msra.mxu0 0.0
    %3005 = vmatprep.subr.mxu0 0.0
    %3006 = vmatpush2.msra.mxu0 0.0
    %3007 = vmatprep.subr.mxu0 0.0
    %3008 = vmatpush2.msra.mxu0 0.0
    %3009 = vmatprep.subr.mxu0 0.0
    %3010 = vmatpush2.msra.mxu0 0.0
    %3011 = vmatprep.subr.mxu0 0.0
    %3012 = vmatpush2.msra.mxu0 0.0
    %3013 = vmatprep.subr.mxu0 0.0
    %3014 = vmatpush2.msra.mxu0 0.0
    %3015 = vmatprep.subr.mxu0 0.0
    %3016 = vmatpush2.msra.mxu0 0.0
    %3017 = vmatprep.subr.mxu0 0.0
    %3018 = vmatpush2.msra.mxu0 0.0
    %3019 = vmatprep.subr.mxu0 0.0
    %3020 = vmatpush2.msra.mxu0 0.0
    %3021 = vmatprep.subr.mxu0 0.0
    %3022 = vmatpush2.msra.mxu0 0.0
    %3023 = vmatprep.subr.mxu0 0.0
    %3024 = vmatpush2.msra.mxu0 0.0
    %3025 = vmatprep.mubr.f32.mxu0 0.0
    %3026 = vmatmul.mubr.f32.gmra.mxu0 %v2876
    %v3027 = vpop.f32.mrf.mxu0
    %v3028 = vadd.f32 %v2959, %v3027
    %v3029 = vpop.f32.mrf.mxu0
    %3030 = vdwg.mxu0
    %v3031 = vmul.f32 %v3028, 0.5
    %v3032 = vmul.f32 %v3031, 1.442695
    %v3033 = vpow.pop %v3032
    %v3034 = vadd.f32 %v3033, 1e-07
    %s3035 = scalar_lea.vmem %s0, 40
    %v3036 = vld [vmem:[%s3035] sm:$0xff]
    %v3037 = vmul.f32 %v3036, %v3034
    %v3038 = vadd.f32 %v2945, %v3037
    %3039 = vst.msk [vmem:[%s3] sm:$0xff] %vm40, %v452
    %s3040 = scalar_lea.vmem %s3, 8
    %3041 = vst.msk [vmem:[%s3040] sm:$0xff] %vm40, %v535
    %s3042 = scalar_lea.vmem %s3, 16
    %3043 = vst.msk [vmem:[%s3042] sm:$0xff] %vm40, %v545
    %s3044 = scalar_lea.vmem %s3, 24
    %3045 = vst.msk [vmem:[%s3044] sm:$0xff] %vm40, %v1915
    %s3046 = scalar_lea.vmem %s3, 32
    %3047 = vst.msk [vmem:[%s3046] sm:$0xff] %vm40, %v1486
    %s3048 = scalar_lea.vmem %s3, 40
    %3049 = vst.msk [vmem:[%s3048] sm:$0xff] %vm40, %v1924
    %s3050 = scalar_lea.vmem %s3, 48
    %3051 = vst.msk [vmem:[%s3050] sm:$0xff] %vm40, %v1916
    %s3052 = scalar_lea.vmem %s3, 56
    %3053 = vst.msk [vmem:[%s3052] sm:$0xff] %vm40, %v1912
    %s3054 = scalar_lea.vmem %s3, 64
    %3055 = vst.msk [vmem:[%s3054] sm:$0xff] %vm40, %v1932
    %s3056 = scalar_lea.vmem %s3, 72
    %3057 = vst.msk [vmem:[%s3056] sm:$0xff] %vm40, %v2945
    %s3058 = scalar_lea.vmem %s3, 80
    %3059 = vst.msk [vmem:[%s3058] sm:$0xff] %vm40, %v3028
    %s3060 = scalar_lea.vmem %s3, 88
    %3061 = vst.msk [vmem:[%s3060] sm:$0xff] %vm40, %v3038
    %s3062 = scalar_lea.vmem %s3, 96
    %3063 = vst.msk [vmem:[%s3062] sm:$0xff] %vm40, %v2266
    %s3064 = scalar_lea.vmem %s3, 104
    %3065 = vst.msk [vmem:[%s3064] sm:$0xff] %vm40, %v2602
    // Predicated region
    $region18: #{_lambda_.1} parent=1 // pred_check
      _
    $region19: #{_lambda_.1} parent=1 // pred_check_branch
      %3067 = sbr.rel (0) target = $region21
    $region20: #{_lambda_.1} parent=1 // pred_region
      _
    $region21: #{_lambda_.1} parent=1 // pred_fallthru
      _
    // Predicated region
    $region22: #{_lambda_.1} parent=1 // pred_check
      _
    $region23: #{_lambda_.1} parent=1 // pred_check_branch
      %3069 = sbr.rel (0) target = $region25
    $region24: #{_lambda_.1} parent=1 // pred_region
      _
    $region25: #{_lambda_.1} parent=1 // pred_fallthru
      _
    %3070 = vsyncpa [#allocation3], 1

</llo_original>
